<compile_context>
chip_gen: v5e
topology: v5e:2x2
jax: 0.10.0
libtpu: 0.0.40
codegen_flags: <defaults>
</compile_context>

<pallas_src>
import jax
import jax.numpy as jnp
from jax import lax
from jax.experimental import pallas as pl
from jax.experimental.pallas import tpu as pltpu

EPS = 1e-5      # PyTorch BatchNorm1d default
PAD = 2         # every Conv1d in the module uses padding=2
LANE = 128      # TPU lane width; all channel dims are zero-padded to a multiple of this


def _round_up(c, m=LANE):
    return ((c + m - 1) // m) * m


def _pad_lanes(x, c_pad):
    c = x.shape[-1]
    if c == c_pad:
        return x
    return jnp.pad(x, [(0, 0)] * (x.ndim - 1) + [(0, c_pad - c)])


# ---------------------------------------------------------------------------
# in-kernel helper: im2col with the padding=2 halo built in VMEM (no HBM pad pass)
# ---------------------------------------------------------------------------
def _im2col(x, k):
    """x: [N, L, C] f32 value -> [N*L_out, K*C] with L_out = L + 2*PAD - (k-1)."""
    n, l, c = x.shape
    l_out = l + 2 * PAD - (k - 1)
    z = jnp.zeros((n, PAD, c), x.dtype)
    xp = jnp.concatenate([z, x, z], axis=1)               # [N, L + 2*PAD, C]
    cols = [xp[:, t:t + l_out, :] for t in range(k)]      # K tap-shifted views
    col = jnp.concatenate(cols, axis=-1)                  # [N, L_out, K*C]
    return col.reshape(n * l_out, k * c)


# ---------------------------------------------------------------------------
# Upsample(scale_factor=2, mode='linear', align_corners=True): shift-and-blend
# ---------------------------------------------------------------------------
def _upsample_kernel(x_ref, u_ref, even_ref, odd_ref):
    """even[i] = out[2i], odd[i] = out[2i+1]; interleaving is done by the caller."""
    x = x_ref[...].astype(jnp.float32)                               # [N, L, C]
    # 1-row shifted neighbours; the edge rows always get a zero blend weight so the
    # clamp value is irrelevant.
    xm1 = jnp.concatenate([x[:, :1, :], x[:, :-1, :]], axis=1)       # x[i-1]
    xp1 = jnp.concatenate([x[:, 1:, :], x[:, -1:, :]], axis=1)       # x[i+1]
    even = u_ref[0] * xm1 + u_ref[1] * x
    odd = u_ref[2] * x + u_ref[3] * xp1
    even_ref[...] = even.astype(even_ref.dtype)
    odd_ref[...] = odd.astype(odd_ref.dtype)


def _upsample_weights(l_in):
    # out[2i]   = (i/(2L-1)) * x[i-1] + (1 - i/(2L-1)) * x[i]
    # out[2i+1] = (1 - (L-1-i)/(2L-1)) * x[i] + ((L-1-i)/(2L-1)) * x[i+1]
    i = jnp.arange(l_in, dtype=jnp.float32)
    denom = 2.0 * l_in - 1.0
    we0 = i / denom
    we1 = 1.0 - we0
    wo1 = (l_in - 1.0 - i) / denom
    wo0 = 1.0 - wo1
    return jnp.stack([we0, we1, wo0, wo1], axis=0).reshape(4, l_in, 1)


def upsample_linear_x2(x_nlc):
    n, l_in, c = x_nlc.shape
    u = _upsample_weights(l_in)
    even, odd = pl.pallas_call(
        _upsample_kernel,
        out_shape=(jax.ShapeDtypeStruct((n, l_in, c), x_nlc.dtype),
                   jax.ShapeDtypeStruct((n, l_in, c), x_nlc.dtype)),
        grid=(1,),
        in_specs=[pl.BlockSpec((n, l_in, c), lambda i: (0, 0, 0)),
                  pl.BlockSpec((4, l_in, 1), lambda i: (0, 0, 0))],
        out_specs=(pl.BlockSpec((n, l_in, c), lambda i: (0, 0, 0)),
                   pl.BlockSpec((n, l_in, c), lambda i: (0, 0, 0))),
        compiler_params=pltpu.CompilerParams(dimension_semantics=("arbitrary",)),
    )(x_nlc, u)
    # interleave rows: out[:, 2i] = even[:, i], out[:, 2i+1] = odd[:, i]
    return jnp.stack([even, odd], axis=2).reshape(n, 2 * l_in, c)


# ---------------------------------------------------------------------------
# conbr block: cat([up, skip], C) -> Conv1d(k, pad=2, bias) -> BatchNorm1d -> ReLU
# ---------------------------------------------------------------------------
def _conbr_kernel(up_ref, skip_ref, w_ref, b_ref, g_ref, bt_ref, out_ref):
    c_up = up_ref.shape[2]
    c_sk = skip_ref.shape[2]
    cin = c_up + c_sk
    k = w_ref.shape[0] // cin

    act = jnp.concatenate([up_ref[...].astype(jnp.float32),
                           skip_ref[...].astype(jnp.float32)], axis=-1)   # fused skip concat
    col = _im2col(act, k)                                                  # [N*L, K*Cin]
    acc = jnp.dot(col.astype(jnp.bfloat16), w_ref[...],
                  preferred_element_type=jnp.float32)                      # bf16 MXU, f32 acc

    a = acc + b_ref[...]                                                   # conv bias
    # training-mode BatchNorm1d over the (N, L) batch; two-pass centered variance.
    mean = jnp.mean(a, axis=0, keepdims=True)                              # [1, Cout]
    var = jnp.mean(jnp.square(a - mean), axis=0, keepdims=True)
    scale = g_ref[...] * lax.rsqrt(var + EPS)
    shift = bt_ref[...] - mean * scale
    out_ref[...] = jnp.maximum(a * scale + shift, 0.0).astype(out_ref.dtype)


def conbr_block(up_nlc, skip_nlc, w2d, b2, g2, bt2):
    n, l, c_up = up_nlc.shape
    c_sk = skip_nlc.shape[2]
    cin = c_up + c_sk
    k = w2d.shape[0] // cin
    c_out = w2d.shape[1]
    l_out = l + 2 * PAD - (k - 1)

    cost = pl.CostEstimate(
        flops=2 * n * l_out * k * cin * c_out,
        transcendentals=c_out,
        bytes_accessed=2 * (up_nlc.size + skip_nlc.size + w2d.size + n * l_out * c_out)
        + 4 * 3 * c_out,
    )
    out = pl.pallas_call(
        _conbr_kernel,
        out_shape=jax.ShapeDtypeStruct((n * l_out, c_out), jnp.bfloat16),
        grid=(1,),
        in_specs=[pl.BlockSpec((n, l, c_up), lambda i: (0, 0, 0)),
                  pl.BlockSpec((n, l, c_sk), lambda i: (0, 0, 0)),
                  pl.BlockSpec((k * cin, c_out), lambda i: (0, 0)),
                  pl.BlockSpec((1, c_out), lambda i: (0, 0)),
                  pl.BlockSpec((1, c_out), lambda i: (0, 0)),
                  pl.BlockSpec((1, c_out), lambda i: (0, 0))],
        out_specs=pl.BlockSpec((n * l_out, c_out), lambda i: (0, 0)),
        compiler_params=pltpu.CompilerParams(dimension_semantics=("arbitrary",)),
        cost_estimate=cost,
    )(up_nlc, skip_nlc, w2d, b2, g2, bt2)
    return out.reshape(n, l_out, c_out)


# ---------------------------------------------------------------------------
# outcov: Conv1d(layer_n, out_channels, k, padding=2) + bias (no BN / ReLU)
# ---------------------------------------------------------------------------
def _outconv_kernel(x_ref, w_ref, b_ref, out_ref):
    c = x_ref.shape[2]
    k = w_ref.shape[0] // c
    col = _im2col(x_ref[...].astype(jnp.float32), k)
    acc = jnp.dot(col.astype(jnp.bfloat16), w_ref[...], preferred_element_type=jnp.float32)
    out_ref[...] = (acc + b_ref[...]).astype(out_ref.dtype)


def conv1d_block(x_nlc, w2d, b2):
    n, l, c = x_nlc.shape
    k = w2d.shape[0] // c
    c_out = w2d.shape[1]
    l_out = l + 2 * PAD - (k - 1)
    cost = pl.CostEstimate(
        flops=2 * n * l_out * k * c * c_out,
        transcendentals=0,
        bytes_accessed=2 * (x_nlc.size + w2d.size) + 4 * (c_out + n * l_out * c_out),
    )
    out = pl.pallas_call(
        _outconv_kernel,
        out_shape=jax.ShapeDtypeStruct((n * l_out, c_out), jnp.float32),
        grid=(1,),
        in_specs=[pl.BlockSpec((n, l, c), lambda i: (0, 0, 0)),
                  pl.BlockSpec((k * c, c_out), lambda i: (0, 0)),
                  pl.BlockSpec((1, c_out), lambda i: (0, 0))],
        out_specs=pl.BlockSpec((n * l_out, c_out), lambda i: (0, 0)),
        compiler_params=pltpu.CompilerParams(dimension_semantics=("arbitrary",)),
        cost_estimate=cost,
    )(x_nlc, w2d, b2)
    return out.reshape(n, l_out, c_out)


# ---------------------------------------------------------------------------
# parameter packing: lane-pad channels and fold the K taps into the contraction
# ---------------------------------------------------------------------------
def _pack_vec(v, c_out_pad):
    return jnp.pad(v, (0, c_out_pad - v.shape[0])).reshape(1, c_out_pad).astype(jnp.float32)


def _pack_conbr_params(w, b, g, beta, c_up_real, c_up_pad, c_sk_pad):
    """w: [K, Cin_real, Cout_real] with Cin_real = c_up_real + c_skip_real (torch.cat order)."""
    k, c_in_real, c_out_real = w.shape
    c_sk_real = c_in_real - c_up_real
    c_out_pad = _round_up(c_out_real)
    w_up = jnp.pad(w[:, :c_up_real, :],
                   ((0, 0), (0, c_up_pad - c_up_real), (0, c_out_pad - c_out_real)))
    w_sk = jnp.pad(w[:, c_up_real:, :],
                   ((0, 0), (0, c_sk_pad - c_sk_real), (0, c_out_pad - c_out_real)))
    w2d = jnp.concatenate([w_up, w_sk], axis=1).reshape(k * (c_up_pad + c_sk_pad), c_out_pad)
    # gamma / beta / bias padded with zeros => padded output channels are exactly 0.
    return (w2d.astype(jnp.bfloat16), _pack_vec(b, c_out_pad),
            _pack_vec(g, c_out_pad), _pack_vec(beta, c_out_pad))


def _pack_conv_params(w, b, c_in_pad):
    k, c_in_real, c_out_real = w.shape
    c_out_pad = _round_up(c_out_real)
    w_p = jnp.pad(w, ((0, 0), (0, c_in_pad - c_in_real), (0, c_out_pad - c_out_real)))
    return w_p.reshape(k * c_in_pad, c_out_pad).astype(jnp.bfloat16), _pack_vec(b, c_out_pad)


# ---------------------------------------------------------------------------
# Full UNET_reconstruct.forward (inputs in PyTorch NCL layout)
# ---------------------------------------------------------------------------
def unet_reconstruct_forward(out_0, out_1, out_2, x3, params, out_channels):
    def prep(a):  # NCL -> NLC, bf16 activations, channels zero-padded to a lane multiple
        a = jnp.transpose(a, (0, 2, 1)).astype(jnp.bfloat16)
        return _pad_lanes(a, _round_up(a.shape[-1]))

    o0, o1, o2, x3n = prep(out_0), prep(out_1), prep(out_2), prep(x3)

    # stage 1: up = upsample(x3); up = cat(up, out_2); up = cbr_up1(up)
    w1, b1, g1, bt1 = _pack_conbr_params(params["w1"], params["b1"], params["g1"],
                                         params["beta1"], c_up_real=x3.shape[1],
                                         c_up_pad=x3n.shape[-1], c_sk_pad=o2.shape[-1])
    up = upsample_linear_x2(x3n)
    up = conbr_block(up, o2, w1, b1, g1, bt1)

    # stage 2
    w2, b2, g2, bt2 = _pack_conbr_params(params["w2"], params["b2"], params["g2"],
                                         params["beta2"], c_up_real=params["w1"].shape[2],
                                         c_up_pad=up.shape[-1], c_sk_pad=o1.shape[-1])
    up = upsample_linear_x2(up)
    up = conbr_block(up, o1, w2, b2, g2, bt2)

    # stage 3
    w3, b3, g3, bt3 = _pack_conbr_params(params["w3"], params["b3"], params["g3"],
                                         params["beta3"], c_up_real=params["w2"].shape[2],
                                         c_up_pad=up.shape[-1], c_sk_pad=o0.shape[-1])
    up = upsample_linear_x2(up)
    up = conbr_block(up, o0, w3, b3, g3, bt3)

    # outcov + slice the real output channels back out of the 128-lane pad
    wo, bo = _pack_conv_params(params["wout"], params["bout"], c_in_pad=up.shape[-1])
    out = conv1d_block(up, wo, bo)[..., :out_channels]          # [N, L, out_channels] f32
    out_ncl = jnp.transpose(out, (0, 2, 1))                     # back to PyTorch NCL
    return jnp.squeeze(out_ncl)                                 # matches torch .squeeze()


# ---------------------------------------------------------------------------
# Pure-JAX reference (mirrors the kernel's bf16 operand / activation precision)
# ---------------------------------------------------------------------------
def _q(x):
    return x.astype(jnp.bfloat16).astype(jnp.float32)


def _ref_upsample(x):
    n, l, c = x.shape
    j = jnp.arange(2 * l, dtype=jnp.float32)
    src = j * (l - 1) / (2 * l - 1)                  # align_corners=True mapping
    lo = jnp.floor(src).astype(jnp.int32)
    hi = jnp.minimum(lo + 1, l - 1)
    frac = (src - lo.astype(jnp.float32))[None, :, None]
    return (1.0 - frac) * x[:, lo, :] + frac * x[:, hi, :]


def _ref_conv(x, w, b):
    k = w.shape[0]
    l_out = x.shape[1] + 2 * PAD - (k - 1)
    xp = jnp.pad(x, ((0, 0), (PAD, PAD), (0, 0)))
    acc = jnp.zeros((x.shape[0], l_out, w.shape[2]), jnp.float32) + b[None, None, :]
    for t in range(k):
        acc = acc + jnp.einsum("nlc,co->nlo", _q(xp[:, t:t + l_out, :]), _q(w[t]),
                               precision=lax.Precision.HIGHEST)
    return acc


def _ref_conbr(x, w, b, g, beta):
    z = _ref_conv(x, w, b)
    mean = jnp.mean(z, axis=(0, 1), keepdims=True)
    var = jnp.mean((z - mean) ** 2, axis=(0, 1), keepdims=True)
    return jnp.maximum(g * (z - mean) / jnp.sqrt(var + EPS) + beta, 0.0)


def _reference(out_0, out_1, out_2, x3, params):
    def to_nlc(a):
        return jnp.transpose(a, (0, 2, 1)).astype(jnp.float32)

    o0, o1, o2, x3n = to_nlc(out_0), to_nlc(out_1), to_nlc(out_2), to_nlc(x3)
    up = _q(_ref_upsample(_q(x3n)))
    up = _q(_ref_conbr(jnp.concatenate([up, _q(o2)], -1),
                       params["w1"], params["b1"], params["g1"], params["beta1"]))
    up = _q(_ref_upsample(up))
    up = _q(_ref_conbr(jnp.concatenate([up, _q(o1)], -1),
                       params["w2"], params["b2"], params["g2"], params["beta2"]))
    up = _q(_ref_upsample(up))
    up = _q(_ref_conbr(jnp.concatenate([up, _q(o0)], -1),
                       params["w3"], params["b3"], params["g3"], params["beta3"]))
    out = _ref_conv(up, params["wout"], params["bout"])
    return jnp.squeeze(jnp.transpose(out, (0, 2, 1)))


if __name__ == "__main__":
    # UNET_reconstruct(layer_n=16, kernel_size=5, out_channels=1, depth=3); kernel_size=5 with
    # the module's fixed padding=2 preserves sequence lengths, as the skip concats require.
    layer_n = 16
    kernel_size = 5
    out_channels = 1
    n_batch = 2
    l3 = 8  # length of the deepest feature map x3

    key = jax.random.PRNGKey(0)
    keys = jax.random.split(key, 18)

    # Encoder tensors in PyTorch NCL layout; channel counts implied by the forward's concats:
    #   cat(up(x3), out_2) = 7*ln  => x3: 4*ln, out_2: 3*ln ; out_1: 2*ln ; out_0: ln
    x3 = jax.random.normal(keys[0], (n_batch, 4 * layer_n, l3), jnp.float32)
    out_2 = jax.random.normal(keys[1], (n_batch, 3 * layer_n, 2 * l3), jnp.float32)
    out_1 = jax.random.normal(keys[2], (n_batch, 2 * layer_n, 4 * l3), jnp.float32)
    out_0 = jax.random.normal(keys[3], (n_batch, 1 * layer_n, 8 * l3), jnp.float32)

    def conv_w(k, c_in, c_out):
        return 0.05 * jax.random.normal(k, (kernel_size, c_in, c_out), jnp.float32)

    params = {
        "w1": conv_w(keys[4], 7 * layer_n, 3 * layer_n),
        "b1": 0.05 * jax.random.normal(keys[5], (3 * layer_n,), jnp.float32),
        "g1": 1.0 + 0.1 * jax.random.normal(keys[6], (3 * layer_n,), jnp.float32),
        "beta1": 0.1 * jax.random.normal(keys[7], (3 * layer_n,), jnp.float32),
        "w2": conv_w(keys[8], 5 * layer_n, 2 * layer_n),
        "b2": 0.05 * jax.random.normal(keys[9], (2 * layer_n,), jnp.float32),
        "g2": 1.0 + 0.1 * jax.random.normal(keys[10], (2 * layer_n,), jnp.float32),
        "beta2": 0.1 * jax.random.normal(keys[11], (2 * layer_n,), jnp.float32),
        "w3": conv_w(keys[12], 3 * layer_n, 1 * layer_n),
        "b3": 0.05 * jax.random.normal(keys[13], (1 * layer_n,), jnp.float32),
        "g3": 1.0 + 0.1 * jax.random.normal(keys[14], (1 * layer_n,), jnp.float32),
        "beta3": 0.1 * jax.random.normal(keys[15], (1 * layer_n,), jnp.float32),
        "wout": conv_w(keys[16], 1 * layer_n, out_channels),
        "bout": 0.05 * jax.random.normal(keys[17], (out_channels,), jnp.float32),
    }

    fwd = jax.jit(lambda a, b, c, d: unet_reconstruct_forward(a, b, c, d, params, out_channels))
    out = jax.block_until_ready(fwd(out_0, out_1, out_2, x3))
    ref = _reference(out_0, out_1, out_2, x3, params)

    assert out.shape == (n_batch, 8 * l3), out.shape
    # Reference mirrors the kernel's bf16 operand precision (f32 accumulation), so agreement is
    # tight; a pure-f32 run of the torch module differs only by the expected ~1% bf16 rounding.
    err = float(jnp.max(jnp.abs(out.astype(jnp.float32) - ref)))
    assert err < 5e-2, f"max abs error {err}"

    print("KERNEL_OK")
</pallas_src>

<mosaic_0001>
module attributes {stable_mosaic.version = 11 : i64} {
  func.func @_upsample_kernel(%arg0: i32, %arg1: memref<2x8x128xbf16, #tpu.memory_space<vmem>>, %arg2: memref<4x8x1xf32, #tpu.memory_space<vmem>>, %arg3: memref<2x8x128xbf16, #tpu.memory_space<vmem>>, %arg4: memref<2x8x128xbf16, #tpu.memory_space<vmem>>) attributes {dimension_semantics = [#tpu.dimension_semantics<arbitrary>], iteration_bounds = array<i64: 1>, scalar_prefetch = 0 : i64, scratch_operands = 0 : i64, tpu.core_type = #tpu.core_type<tc>, window_params = [{pipeline_mode = #tpu.pipeline_mode<synchronous>, transform_indices = @transform_0, window_bounds = array<i64: 2, 8, 128>}, {pipeline_mode = #tpu.pipeline_mode<synchronous>, transform_indices = @transform_1, window_bounds = array<i64: 4, 8, 1>}, {pipeline_mode = #tpu.pipeline_mode<synchronous>, transform_indices = @transform_2, window_bounds = array<i64: 2, 8, 128>}, {pipeline_mode = #tpu.pipeline_mode<synchronous>, transform_indices = @transform_3, window_bounds = array<i64: 2, 8, 128>}]} {
    %c0 = arith.constant 0 : index
    %c0_0 = arith.constant 0 : index
    %c0_1 = arith.constant 0 : index
    %0 = vector.load %arg1[%c0, %c0_0, %c0_1] : memref<2x8x128xbf16, #tpu.memory_space<vmem>>, vector<2x8x128xbf16>
    %1 = arith.extf %0 : vector<2x8x128xbf16> to vector<2x8x128xf32>
    %2 = vector.extract_strided_slice %1 {offsets = [0, 0, 0], sizes = [2, 1, 128], strides = [1, 1, 1]} : vector<2x8x128xf32> to vector<2x1x128xf32>
    %3 = vector.extract_strided_slice %1 {offsets = [0, 0, 0], sizes = [2, 7, 128], strides = [1, 1, 1]} : vector<2x8x128xf32> to vector<2x7x128xf32>
    %4 = tpu.concatenate %2, %3 in 1 : vector<2x1x128xf32>, vector<2x7x128xf32> -> vector<2x8x128xf32>
    %5 = vector.extract_strided_slice %1 {offsets = [0, 1, 0], sizes = [2, 7, 128], strides = [1, 1, 1]} : vector<2x8x128xf32> to vector<2x7x128xf32>
    %6 = vector.extract_strided_slice %1 {offsets = [0, 7, 0], sizes = [2, 1, 128], strides = [1, 1, 1]} : vector<2x8x128xf32> to vector<2x1x128xf32>
    %7 = tpu.concatenate %5, %6 in 1 : vector<2x7x128xf32>, vector<2x1x128xf32> -> vector<2x8x128xf32>
    %c0_2 = arith.constant 0 : index
    %c0_3 = arith.constant 0 : index
    %c0_4 = arith.constant 0 : index
    %8 = vector.load %arg2[%c0_2, %c0_3, %c0_4] : memref<4x8x1xf32, #tpu.memory_space<vmem>>, vector<1x8x1xf32>
    %9 = vector.shape_cast %8 : vector<1x8x1xf32> to vector<8x1xf32>
    %10 = vector.shape_cast %9 : vector<8x1xf32> to vector<1x8x1xf32>
    %11 = vector.broadcast %10 : vector<1x8x1xf32> to vector<2x8x128xf32>
    %12 = arith.mulf %11, %4 : vector<2x8x128xf32>
    %c1 = arith.constant 1 : index
    %c0_5 = arith.constant 0 : index
    %c0_6 = arith.constant 0 : index
    %13 = vector.load %arg2[%c1, %c0_5, %c0_6] : memref<4x8x1xf32, #tpu.memory_space<vmem>>, vector<1x8x1xf32>
    %14 = vector.shape_cast %13 : vector<1x8x1xf32> to vector<8x1xf32>
    %15 = vector.shape_cast %14 : vector<8x1xf32> to vector<1x8x1xf32>
    %16 = vector.broadcast %15 : vector<1x8x1xf32> to vector<2x8x128xf32>
    %17 = arith.mulf %16, %1 : vector<2x8x128xf32>
    %18 = arith.addf %12, %17 : vector<2x8x128xf32>
    %c2 = arith.constant 2 : index
    %c0_7 = arith.constant 0 : index
    %c0_8 = arith.constant 0 : index
    %19 = vector.load %arg2[%c2, %c0_7, %c0_8] : memref<4x8x1xf32, #tpu.memory_space<vmem>>, vector<1x8x1xf32>
    %20 = vector.shape_cast %19 : vector<1x8x1xf32> to vector<8x1xf32>
    %21 = vector.shape_cast %20 : vector<8x1xf32> to vector<1x8x1xf32>
    %22 = vector.broadcast %21 : vector<1x8x1xf32> to vector<2x8x128xf32>
    %23 = arith.mulf %22, %1 : vector<2x8x128xf32>
    %c3 = arith.constant 3 : index
    %c0_9 = arith.constant 0 : index
    %c0_10 = arith.constant 0 : index
    %24 = vector.load %arg2[%c3, %c0_9, %c0_10] : memref<4x8x1xf32, #tpu.memory_space<vmem>>, vector<1x8x1xf32>
    %25 = vector.shape_cast %24 : vector<1x8x1xf32> to vector<8x1xf32>
    %26 = vector.shape_cast %25 : vector<8x1xf32> to vector<1x8x1xf32>
    %27 = vector.broadcast %26 : vector<1x8x1xf32> to vector<2x8x128xf32>
    %28 = arith.mulf %27, %7 : vector<2x8x128xf32>
    %29 = arith.addf %23, %28 : vector<2x8x128xf32>
    %30 = arith.truncf %18 : vector<2x8x128xf32> to vector<2x8x128xbf16>
    %c0_11 = arith.constant 0 : index
    %c0_12 = arith.constant 0 : index
    %c0_13 = arith.constant 0 : index
    %31 = vector.load %arg3[%c0_11, %c0_12, %c0_13] : memref<2x8x128xbf16, #tpu.memory_space<vmem>>, vector<2x8x128xbf16>
    tpu.vector_store %arg3[%c0_11, %c0_12, %c0_13], %30 {strides = array<i32>} : memref<2x8x128xbf16, #tpu.memory_space<vmem>>, vector<2x8x128xbf16>,
    %32 = arith.truncf %29 : vector<2x8x128xf32> to vector<2x8x128xbf16>
    %c0_14 = arith.constant 0 : index
    %c0_15 = arith.constant 0 : index
    %c0_16 = arith.constant 0 : index
    %33 = vector.load %arg4[%c0_14, %c0_15, %c0_16] : memref<2x8x128xbf16, #tpu.memory_space<vmem>>, vector<2x8x128xbf16>
    tpu.vector_store %arg4[%c0_14, %c0_15, %c0_16], %32 {strides = array<i32>} : memref<2x8x128xbf16, #tpu.memory_space<vmem>>, vector<2x8x128xbf16>,
    return
  }
  func.func @transform_0(%arg0: i32) -> (i32, i32, i32) {
    %c0_i32 = arith.constant 0 : i32
    %c0_i32_0 = arith.constant 0 : i32
    %c0_i32_1 = arith.constant 0 : i32
    %c0_i32_2 = arith.constant 0 : i32
    return %c0_i32, %c0_i32_0, %c0_i32_1 : i32, i32, i32
  }
  func.func @transform_1(%arg0: i32) -> (i32, i32, i32) {
    %c0_i32 = arith.constant 0 : i32
    %c0_i32_0 = arith.constant 0 : i32
    %c0_i32_1 = arith.constant 0 : i32
    %c0_i32_2 = arith.constant 0 : i32
    return %c0_i32, %c0_i32_0, %c0_i32_1 : i32, i32, i32
  }
  func.func @transform_2(%arg0: i32) -> (i32, i32, i32) {
    %c0_i32 = arith.constant 0 : i32
    %c0_i32_0 = arith.constant 0 : i32
    %c0_i32_1 = arith.constant 0 : i32
    %c0_i32_2 = arith.constant 0 : i32
    return %c0_i32, %c0_i32_0, %c0_i32_1 : i32, i32, i32
  }
  func.func @transform_3(%arg0: i32) -> (i32, i32, i32) {
    %c0_i32 = arith.constant 0 : i32
    %c0_i32_0 = arith.constant 0 : i32
    %c0_i32_1 = arith.constant 0 : i32
    %c0_i32_2 = arith.constant 0 : i32
    return %c0_i32, %c0_i32_0, %c0_i32_1 : i32, i32, i32
  }
}

module attributes {stable_mosaic.version = 11 : i64} {
  func.func @_upsample_kernel(%arg0: i32, %arg1: memref<2x16x128xbf16, #tpu.memory_space<vmem>>, %arg2: memref<4x16x1xf32, #tpu.memory_space<vmem>>, %arg3: memref<2x16x128xbf16, #tpu.memory_space<vmem>>, %arg4: memref<2x16x128xbf16, #tpu.memory_space<vmem>>) attributes {dimension_semantics = [#tpu.dimension_semantics<arbitrary>], iteration_bounds = array<i64: 1>, scalar_prefetch = 0 : i64, scratch_operands = 0 : i64, tpu.core_type = #tpu.core_type<tc>, window_params = [{pipeline_mode = #tpu.pipeline_mode<synchronous>, transform_indices = @transform_0, window_bounds = array<i64: 2, 16, 128>}, {pipeline_mode = #tpu.pipeline_mode<synchronous>, transform_indices = @transform_1, window_bounds = array<i64: 4, 16, 1>}, {pipeline_mode = #tpu.pipeline_mode<synchronous>, transform_indices = @transform_2, window_bounds = array<i64: 2, 16, 128>}, {pipeline_mode = #tpu.pipeline_mode<synchronous>, transform_indices = @transform_3, window_bounds = array<i64: 2, 16, 128>}]} {
    %c0 = arith.constant 0 : index
    %c0_0 = arith.constant 0 : index
    %c0_1 = arith.constant 0 : index
    %0 = vector.load %arg1[%c0, %c0_0, %c0_1] : memref<2x16x128xbf16, #tpu.memory_space<vmem>>, vector<2x16x128xbf16>
    %1 = arith.extf %0 : vector<2x16x128xbf16> to vector<2x16x128xf32>
    %2 = vector.extract_strided_slice %1 {offsets = [0, 0, 0], sizes = [2, 1, 128], strides = [1, 1, 1]} : vector<2x16x128xf32> to vector<2x1x128xf32>
    %3 = vector.extract_strided_slice %1 {offsets = [0, 0, 0], sizes = [2, 15, 128], strides = [1, 1, 1]} : vector<2x16x128xf32> to vector<2x15x128xf32>
    %4 = tpu.concatenate %2, %3 in 1 : vector<2x1x128xf32>, vector<2x15x128xf32> -> vector<2x16x128xf32>
    %5 = vector.extract_strided_slice %1 {offsets = [0, 1, 0], sizes = [2, 15, 128], strides = [1, 1, 1]} : vector<2x16x128xf32> to vector<2x15x128xf32>
    %6 = vector.extract_strided_slice %1 {offsets = [0, 15, 0], sizes = [2, 1, 128], strides = [1, 1, 1]} : vector<2x16x128xf32> to vector<2x1x128xf32>
    %7 = tpu.concatenate %5, %6 in 1 : vector<2x15x128xf32>, vector<2x1x128xf32> -> vector<2x16x128xf32>
    %c0_2 = arith.constant 0 : index
    %c0_3 = arith.constant 0 : index
    %c0_4 = arith.constant 0 : index
    %8 = vector.load %arg2[%c0_2, %c0_3, %c0_4] : memref<4x16x1xf32, #tpu.memory_space<vmem>>, vector<1x16x1xf32>
    %9 = vector.shape_cast %8 : vector<1x16x1xf32> to vector<16x1xf32>
    %10 = vector.shape_cast %9 : vector<16x1xf32> to vector<1x16x1xf32>
    %11 = vector.broadcast %10 : vector<1x16x1xf32> to vector<2x16x128xf32>
    %12 = arith.mulf %11, %4 : vector<2x16x128xf32>
    %c1 = arith.constant 1 : index
    %c0_5 = arith.constant 0 : index
    %c0_6 = arith.constant 0 : index
    %13 = vector.load %arg2[%c1, %c0_5, %c0_6] : memref<4x16x1xf32, #tpu.memory_space<vmem>>, vector<1x16x1xf32>
    %14 = vector.shape_cast %13 : vector<1x16x1xf32> to vector<16x1xf32>
    %15 = vector.shape_cast %14 : vector<16x1xf32> to vector<1x16x1xf32>
    %16 = vector.broadcast %15 : vector<1x16x1xf32> to vector<2x16x128xf32>
    %17 = arith.mulf %16, %1 : vector<2x16x128xf32>
    %18 = arith.addf %12, %17 : vector<2x16x128xf32>
    %c2 = arith.constant 2 : index
    %c0_7 = arith.constant 0 : index
    %c0_8 = arith.constant 0 : index
    %19 = vector.load %arg2[%c2, %c0_7, %c0_8] : memref<4x16x1xf32, #tpu.memory_space<vmem>>, vector<1x16x1xf32>
    %20 = vector.shape_cast %19 : vector<1x16x1xf32> to vector<16x1xf32>
    %21 = vector.shape_cast %20 : vector<16x1xf32> to vector<1x16x1xf32>
    %22 = vector.broadcast %21 : vector<1x16x1xf32> to vector<2x16x128xf32>
    %23 = arith.mulf %22, %1 : vector<2x16x128xf32>
    %c3 = arith.constant 3 : index
    %c0_9 = arith.constant 0 : index
    %c0_10 = arith.constant 0 : index
    %24 = vector.load %arg2[%c3, %c0_9, %c0_10] : memref<4x16x1xf32, #tpu.memory_space<vmem>>, vector<1x16x1xf32>
    %25 = vector.shape_cast %24 : vector<1x16x1xf32> to vector<16x1xf32>
    %26 = vector.shape_cast %25 : vector<16x1xf32> to vector<1x16x1xf32>
    %27 = vector.broadcast %26 : vector<1x16x1xf32> to vector<2x16x128xf32>
    %28 = arith.mulf %27, %7 : vector<2x16x128xf32>
    %29 = arith.addf %23, %28 : vector<2x16x128xf32>
    %30 = arith.truncf %18 : vector<2x16x128xf32> to vector<2x16x128xbf16>
    %c0_11 = arith.constant 0 : index
    %c0_12 = arith.constant 0 : index
    %c0_13 = arith.constant 0 : index
    %31 = vector.load %arg3[%c0_11, %c0_12, %c0_13] : memref<2x16x128xbf16, #tpu.memory_space<vmem>>, vector<2x16x128xbf16>
    tpu.vector_store %arg3[%c0_11, %c0_12, %c0_13], %30 {strides = array<i32>} : memref<2x16x128xbf16, #tpu.memory_space<vmem>>, vector<2x16x128xbf16>,
    %32 = arith.truncf %29 : vector<2x16x128xf32> to vector<2x16x128xbf16>
    %c0_14 = arith.constant 0 : index
    %c0_15 = arith.constant 0 : index
    %c0_16 = arith.constant 0 : index
    %33 = vector.load %arg4[%c0_14, %c0_15, %c0_16] : memref<2x16x128xbf16, #tpu.memory_space<vmem>>, vector<2x16x128xbf16>
    tpu.vector_store %arg4[%c0_14, %c0_15, %c0_16], %32 {strides = array<i32>} : memref<2x16x128xbf16, #tpu.memory_space<vmem>>, vector<2x16x128xbf16>,
    return
  }
  func.func @transform_0(%arg0: i32) -> (i32, i32, i32) {
    %c0_i32 = arith.constant 0 : i32
    %c0_i32_0 = arith.constant 0 : i32
    %c0_i32_1 = arith.constant 0 : i32
    %c0_i32_2 = arith.constant 0 : i32
    return %c0_i32, %c0_i32_0, %c0_i32_1 : i32, i32, i32
  }
  func.func @transform_1(%arg0: i32) -> (i32, i32, i32) {
    %c0_i32 = arith.constant 0 : i32
    %c0_i32_0 = arith.constant 0 : i32
    %c0_i32_1 = arith.constant 0 : i32
    %c0_i32_2 = arith.constant 0 : i32
    return %c0_i32, %c0_i32_0, %c0_i32_1 : i32, i32, i32
  }
  func.func @transform_2(%arg0: i32) -> (i32, i32, i32) {
    %c0_i32 = arith.constant 0 : i32
    %c0_i32_0 = arith.constant 0 : i32
    %c0_i32_1 = arith.constant 0 : i32
    %c0_i32_2 = arith.constant 0 : i32
    return %c0_i32, %c0_i32_0, %c0_i32_1 : i32, i32, i32
  }
  func.func @transform_3(%arg0: i32) -> (i32, i32, i32) {
    %c0_i32 = arith.constant 0 : i32
    %c0_i32_0 = arith.constant 0 : i32
    %c0_i32_1 = arith.constant 0 : i32
    %c0_i32_2 = arith.constant 0 : i32
    return %c0_i32, %c0_i32_0, %c0_i32_1 : i32, i32, i32
  }
}

module attributes {stable_mosaic.version = 11 : i64} {
  func.func @_conbr_kernel(%arg0: i32, %arg1: memref<2x16x128xbf16, #tpu.memory_space<vmem>>, %arg2: memref<2x16x128xbf16, #tpu.memory_space<vmem>>, %arg3: memref<1280x128xbf16, #tpu.memory_space<vmem>>, %arg4: memref<1x128xf32, #tpu.memory_space<vmem>>, %arg5: memref<1x128xf32, #tpu.memory_space<vmem>>, %arg6: memref<1x128xf32, #tpu.memory_space<vmem>>, %arg7: memref<32x128xbf16, #tpu.memory_space<vmem>>) attributes {dimension_semantics = [#tpu.dimension_semantics<arbitrary>], iteration_bounds = array<i64: 1>, scalar_prefetch = 0 : i64, scratch_operands = 0 : i64, tpu.core_type = #tpu.core_type<tc>, window_params = [{pipeline_mode = #tpu.pipeline_mode<synchronous>, transform_indices = @transform_0, window_bounds = array<i64: 2, 16, 128>}, {pipeline_mode = #tpu.pipeline_mode<synchronous>, transform_indices = @transform_1, window_bounds = array<i64: 2, 16, 128>}, {pipeline_mode = #tpu.pipeline_mode<synchronous>, transform_indices = @transform_2, window_bounds = array<i64: 1280, 128>}, {pipeline_mode = #tpu.pipeline_mode<synchronous>, transform_indices = @transform_3, window_bounds = array<i64: 1, 128>}, {pipeline_mode = #tpu.pipeline_mode<synchronous>, transform_indices = @transform_4, window_bounds = array<i64: 1, 128>}, {pipeline_mode = #tpu.pipeline_mode<synchronous>, transform_indices = @transform_5, window_bounds = array<i64: 1, 128>}, {pipeline_mode = #tpu.pipeline_mode<synchronous>, transform_indices = @transform_6, window_bounds = array<i64: 32, 128>}]} {
    %c0 = arith.constant 0 : index
    %c0_0 = arith.constant 0 : index
    %c0_1 = arith.constant 0 : index
    %0 = vector.load %arg1[%c0, %c0_0, %c0_1] : memref<2x16x128xbf16, #tpu.memory_space<vmem>>, vector<2x16x128xbf16>
    %1 = arith.extf %0 : vector<2x16x128xbf16> to vector<2x16x128xf32>
    %c0_2 = arith.constant 0 : index
    %c0_3 = arith.constant 0 : index
    %c0_4 = arith.constant 0 : index
    %2 = vector.load %arg2[%c0_2, %c0_3, %c0_4] : memref<2x16x128xbf16, #tpu.memory_space<vmem>>, vector<2x16x128xbf16>
    %3 = arith.extf %2 : vector<2x16x128xbf16> to vector<2x16x128xf32>
    %4 = tpu.concatenate %1, %3 in 2 : vector<2x16x128xf32>, vector<2x16x128xf32> -> vector<2x16x256xf32>
    %cst = arith.constant 0.000000e+00 : f32
    %5 = vector.broadcast %cst : f32 to vector<2x2x256xf32>
    %6 = tpu.concatenate %5, %4, %5 in 1 : vector<2x2x256xf32>, vector<2x16x256xf32>, vector<2x2x256xf32> -> vector<2x20x256xf32>
    %7 = vector.extract_strided_slice %6 {offsets = [0, 0, 0], sizes = [2, 16, 256], strides = [1, 1, 1]} : vector<2x20x256xf32> to vector<2x16x256xf32>
    %8 = vector.extract_strided_slice %6 {offsets = [0, 1, 0], sizes = [2, 16, 256], strides = [1, 1, 1]} : vector<2x20x256xf32> to vector<2x16x256xf32>
    %9 = vector.extract_strided_slice %6 {offsets = [0, 2, 0], sizes = [2, 16, 256], strides = [1, 1, 1]} : vector<2x20x256xf32> to vector<2x16x256xf32>
    %10 = vector.extract_strided_slice %6 {offsets = [0, 3, 0], sizes = [2, 16, 256], strides = [1, 1, 1]} : vector<2x20x256xf32> to vector<2x16x256xf32>
    %11 = vector.extract_strided_slice %6 {offsets = [0, 4, 0], sizes = [2, 16, 256], strides = [1, 1, 1]} : vector<2x20x256xf32> to vector<2x16x256xf32>
    %12 = tpu.concatenate %7, %8, %9, %10, %11 in 2 : vector<2x16x256xf32>, vector<2x16x256xf32>, vector<2x16x256xf32>, vector<2x16x256xf32>, vector<2x16x256xf32> -> vector<2x16x1280xf32>
    %13 = vector.shape_cast %12 : vector<2x16x1280xf32> to vector<32x1280xf32>
    %14 = arith.truncf %13 : vector<32x1280xf32> to vector<32x1280xbf16>
    %c0_5 = arith.constant 0 : index
    %c0_6 = arith.constant 0 : index
    %15 = vector.load %arg3[%c0_5, %c0_6] : memref<1280x128xbf16, #tpu.memory_space<vmem>>, vector<1280x128xbf16>
    %cst_7 = arith.constant dense<0.000000e+00> : vector<32x128xf32>
    %16 = tpu.matmul %14, %15, %cst_7 {dimension_numbers = #tpu.dot_dimension_numbers<[1], [0], [0], [1], [0, 0, 1, 1], [], []>} : vector<32x1280xbf16>, vector<1280x128xbf16>, vector<32x128xf32> -> vector<32x128xf32>
    %c0_8 = arith.constant 0 : index
    %c0_9 = arith.constant 0 : index
    %17 = vector.load %arg4[%c0_8, %c0_9] : memref<1x128xf32, #tpu.memory_space<vmem>>, vector<1x128xf32>
    %18 = vector.broadcast %17 : vector<1x128xf32> to vector<32x128xf32>
    %19 = arith.addf %16, %18 : vector<32x128xf32>
    %cst_10 = arith.constant dense<0.000000e+00> : vector<128xf32>
    %20 = vector.multi_reduction <add>, %19, %cst_10 [0] : vector<32x128xf32> to vector<128xf32>
    %21 = vector.shape_cast %20 : vector<128xf32> to vector<1x128xf32>
    %cst_11 = arith.constant 3.200000e+01 : f32
    %22 = vector.broadcast %cst_11 : f32 to vector<1x128xf32>
    %23 = arith.divf %21, %22 : vector<1x128xf32>
    %24 = vector.broadcast %23 : vector<1x128xf32> to vector<32x128xf32>
    %25 = arith.subf %19, %24 : vector<32x128xf32>
    %26 = arith.mulf %25, %25 : vector<32x128xf32>
    %cst_12 = arith.constant dense<0.000000e+00> : vector<128xf32>
    %27 = vector.multi_reduction <add>, %26, %cst_12 [0] : vector<32x128xf32> to vector<128xf32>
    %28 = vector.shape_cast %27 : vector<128xf32> to vector<1x128xf32>
    %cst_13 = arith.constant 3.200000e+01 : f32
    %29 = vector.broadcast %cst_13 : f32 to vector<1x128xf32>
    %30 = arith.divf %28, %29 : vector<1x128xf32>
    %c0_14 = arith.constant 0 : index
    %c0_15 = arith.constant 0 : index
    %31 = vector.load %arg5[%c0_14, %c0_15] : memref<1x128xf32, #tpu.memory_space<vmem>>, vector<1x128xf32>
    %cst_16 = arith.constant 9.99999974E-6 : f32
    %32 = vector.broadcast %cst_16 : f32 to vector<1x128xf32>
    %33 = arith.addf %30, %32 : vector<1x128xf32>
    %34 = math.rsqrt %33 : vector<1x128xf32>
    %35 = arith.mulf %31, %34 : vector<1x128xf32>
    %c0_17 = arith.constant 0 : index
    %c0_18 = arith.constant 0 : index
    %36 = vector.load %arg6[%c0_17, %c0_18] : memref<1x128xf32, #tpu.memory_space<vmem>>, vector<1x128xf32>
    %37 = arith.mulf %23, %35 : vector<1x128xf32>
    %38 = arith.subf %36, %37 : vector<1x128xf32>
    %39 = vector.broadcast %35 : vector<1x128xf32> to vector<32x128xf32>
    %40 = arith.mulf %19, %39 : vector<32x128xf32>
    %41 = vector.broadcast %38 : vector<1x128xf32> to vector<32x128xf32>
    %42 = arith.addf %40, %41 : vector<32x128xf32>
    %cst_19 = arith.constant 0.000000e+00 : f32
    %43 = vector.broadcast %cst_19 : f32 to vector<32x128xf32>
    %44 = arith.maximumf %42, %43 : vector<32x128xf32>
    %45 = arith.truncf %44 : vector<32x128xf32> to vector<32x128xbf16>
    %c0_20 = arith.constant 0 : index
    %c0_21 = arith.constant 0 : index
    %46 = vector.load %arg7[%c0_20, %c0_21] : memref<32x128xbf16, #tpu.memory_space<vmem>>, vector<32x128xbf16>
    tpu.vector_store %arg7[%c0_20, %c0_21], %45 {strides = array<i32>} : memref<32x128xbf16, #tpu.memory_space<vmem>>, vector<32x128xbf16>,
    return
  }
  func.func @transform_0(%arg0: i32) -> (i32, i32, i32) {
    %c0_i32 = arith.constant 0 : i32
    %c0_i32_0 = arith.constant 0 : i32
    %c0_i32_1 = arith.constant 0 : i32
    %c0_i32_2 = arith.constant 0 : i32
    return %c0_i32, %c0_i32_0, %c0_i32_1 : i32, i32, i32
  }
  func.func @transform_1(%arg0: i32) -> (i32, i32, i32) {
    %c0_i32 = arith.constant 0 : i32
    %c0_i32_0 = arith.constant 0 : i32
    %c0_i32_1 = arith.constant 0 : i32
    %c0_i32_2 = arith.constant 0 : i32
    return %c0_i32, %c0_i32_0, %c0_i32_1 : i32, i32, i32
  }
  func.func @transform_2(%arg0: i32) -> (i32, i32) {
    %c0_i32 = arith.constant 0 : i32
    %c0_i32_0 = arith.constant 0 : i32
    %c0_i32_1 = arith.constant 0 : i32
    return %c0_i32, %c0_i32_0 : i32, i32
  }
  func.func @transform_3(%arg0: i32) -> (i32, i32) {
    %c0_i32 = arith.constant 0 : i32
    %c0_i32_0 = arith.constant 0 : i32
    %c0_i32_1 = arith.constant 0 : i32
    return %c0_i32, %c0_i32_0 : i32, i32
  }
  func.func @transform_4(%arg0: i32) -> (i32, i32) {
    %c0_i32 = arith.constant 0 : i32
    %c0_i32_0 = arith.constant 0 : i32
    %c0_i32_1 = arith.constant 0 : i32
    return %c0_i32, %c0_i32_0 : i32, i32
  }
  func.func @transform_5(%arg0: i32) -> (i32, i32) {
    %c0_i32 = arith.constant 0 : i32
    %c0_i32_0 = arith.constant 0 : i32
    %c0_i32_1 = arith.constant 0 : i32
    return %c0_i32, %c0_i32_0 : i32, i32
  }
  func.func @transform_6(%arg0: i32) -> (i32, i32) {
    %c0_i32 = arith.constant 0 : i32
    %c0_i32_0 = arith.constant 0 : i32
    %c0_i32_1 = arith.constant 0 : i32
    return %c0_i32, %c0_i32_0 : i32, i32
  }
}

module attributes {stable_mosaic.version = 11 : i64} {
  func.func @_conbr_kernel(%arg0: i32, %arg1: memref<2x32x128xbf16, #tpu.memory_space<vmem>>, %arg2: memref<2x32x128xbf16, #tpu.memory_space<vmem>>, %arg3: memref<1280x128xbf16, #tpu.memory_space<vmem>>, %arg4: memref<1x128xf32, #tpu.memory_space<vmem>>, %arg5: memref<1x128xf32, #tpu.memory_space<vmem>>, %arg6: memref<1x128xf32, #tpu.memory_space<vmem>>, %arg7: memref<64x128xbf16, #tpu.memory_space<vmem>>) attributes {dimension_semantics = [#tpu.dimension_semantics<arbitrary>], iteration_bounds = array<i64: 1>, scalar_prefetch = 0 : i64, scratch_operands = 0 : i64, tpu.core_type = #tpu.core_type<tc>, window_params = [{pipeline_mode = #tpu.pipeline_mode<synchronous>, transform_indices = @transform_0, window_bounds = array<i64: 2, 32, 128>}, {pipeline_mode = #tpu.pipeline_mode<synchronous>, transform_indices = @transform_1, window_bounds = array<i64: 2, 32, 128>}, {pipeline_mode = #tpu.pipeline_mode<synchronous>, transform_indices = @transform_2, window_bounds = array<i64: 1280, 128>}, {pipeline_mode = #tpu.pipeline_mode<synchronous>, transform_indices = @transform_3, window_bounds = array<i64: 1, 128>}, {pipeline_mode = #tpu.pipeline_mode<synchronous>, transform_indices = @transform_4, window_bounds = array<i64: 1, 128>}, {pipeline_mode = #tpu.pipeline_mode<synchronous>, transform_indices = @transform_5, window_bounds = array<i64: 1, 128>}, {pipeline_mode = #tpu.pipeline_mode<synchronous>, transform_indices = @transform_6, window_bounds = array<i64: 64, 128>}]} {
    %c0 = arith.constant 0 : index
    %c0_0 = arith.constant 0 : index
    %c0_1 = arith.constant 0 : index
    %0 = vector.load %arg1[%c0, %c0_0, %c0_1] : memref<2x32x128xbf16, #tpu.memory_space<vmem>>, vector<2x32x128xbf16>
    %1 = arith.extf %0 : vector<2x32x128xbf16> to vector<2x32x128xf32>
    %c0_2 = arith.constant 0 : index
    %c0_3 = arith.constant 0 : index
    %c0_4 = arith.constant 0 : index
    %2 = vector.load %arg2[%c0_2, %c0_3, %c0_4] : memref<2x32x128xbf16, #tpu.memory_space<vmem>>, vector<2x32x128xbf16>
    %3 = arith.extf %2 : vector<2x32x128xbf16> to vector<2x32x128xf32>
    %4 = tpu.concatenate %1, %3 in 2 : vector<2x32x128xf32>, vector<2x32x128xf32> -> vector<2x32x256xf32>
    %cst = arith.constant 0.000000e+00 : f32
    %5 = vector.broadcast %cst : f32 to vector<2x2x256xf32>
    %6 = tpu.concatenate %5, %4, %5 in 1 : vector<2x2x256xf32>, vector<2x32x256xf32>, vector<2x2x256xf32> -> vector<2x36x256xf32>
    %7 = vector.extract_strided_slice %6 {offsets = [0, 0, 0], sizes = [2, 32, 256], strides = [1, 1, 1]} : vector<2x36x256xf32> to vector<2x32x256xf32>
    %8 = vector.extract_strided_slice %6 {offsets = [0, 1, 0], sizes = [2, 32, 256], strides = [1, 1, 1]} : vector<2x36x256xf32> to vector<2x32x256xf32>
    %9 = vector.extract_strided_slice %6 {offsets = [0, 2, 0], sizes = [2, 32, 256], strides = [1, 1, 1]} : vector<2x36x256xf32> to vector<2x32x256xf32>
    %10 = vector.extract_strided_slice %6 {offsets = [0, 3, 0], sizes = [2, 32, 256], strides = [1, 1, 1]} : vector<2x36x256xf32> to vector<2x32x256xf32>
    %11 = vector.extract_strided_slice %6 {offsets = [0, 4, 0], sizes = [2, 32, 256], strides = [1, 1, 1]} : vector<2x36x256xf32> to vector<2x32x256xf32>
    %12 = tpu.concatenate %7, %8, %9, %10, %11 in 2 : vector<2x32x256xf32>, vector<2x32x256xf32>, vector<2x32x256xf32>, vector<2x32x256xf32>, vector<2x32x256xf32> -> vector<2x32x1280xf32>
    %13 = vector.shape_cast %12 : vector<2x32x1280xf32> to vector<64x1280xf32>
    %14 = arith.truncf %13 : vector<64x1280xf32> to vector<64x1280xbf16>
    %c0_5 = arith.constant 0 : index
    %c0_6 = arith.constant 0 : index
    %15 = vector.load %arg3[%c0_5, %c0_6] : memref<1280x128xbf16, #tpu.memory_space<vmem>>, vector<1280x128xbf16>
    %cst_7 = arith.constant dense<0.000000e+00> : vector<64x128xf32>
    %16 = tpu.matmul %14, %15, %cst_7 {dimension_numbers = #tpu.dot_dimension_numbers<[1], [0], [0], [1], [0, 0, 1, 1], [], []>} : vector<64x1280xbf16>, vector<1280x128xbf16>, vector<64x128xf32> -> vector<64x128xf32>
    %c0_8 = arith.constant 0 : index
    %c0_9 = arith.constant 0 : index
    %17 = vector.load %arg4[%c0_8, %c0_9] : memref<1x128xf32, #tpu.memory_space<vmem>>, vector<1x128xf32>
    %18 = vector.broadcast %17 : vector<1x128xf32> to vector<64x128xf32>
    %19 = arith.addf %16, %18 : vector<64x128xf32>
    %cst_10 = arith.constant dense<0.000000e+00> : vector<128xf32>
    %20 = vector.multi_reduction <add>, %19, %cst_10 [0] : vector<64x128xf32> to vector<128xf32>
    %21 = vector.shape_cast %20 : vector<128xf32> to vector<1x128xf32>
    %cst_11 = arith.constant 6.400000e+01 : f32
    %22 = vector.broadcast %cst_11 : f32 to vector<1x128xf32>
    %23 = arith.divf %21, %22 : vector<1x128xf32>
    %24 = vector.broadcast %23 : vector<1x128xf32> to vector<64x128xf32>
    %25 = arith.subf %19, %24 : vector<64x128xf32>
    %26 = arith.mulf %25, %25 : vector<64x128xf32>
    %cst_12 = arith.constant dense<0.000000e+00> : vector<128xf32>
    %27 = vector.multi_reduction <add>, %26, %cst_12 [0] : vector<64x128xf32> to vector<128xf32>
    %28 = vector.shape_cast %27 : vector<128xf32> to vector<1x128xf32>
    %cst_13 = arith.constant 6.400000e+01 : f32
    %29 = vector.broadcast %cst_13 : f32 to vector<1x128xf32>
    %30 = arith.divf %28, %29 : vector<1x128xf32>
    %c0_14 = arith.constant 0 : index
    %c0_15 = arith.constant 0 : index
    %31 = vector.load %arg5[%c0_14, %c0_15] : memref<1x128xf32, #tpu.memory_space<vmem>>, vector<1x128xf32>
    %cst_16 = arith.constant 9.99999974E-6 : f32
    %32 = vector.broadcast %cst_16 : f32 to vector<1x128xf32>
    %33 = arith.addf %30, %32 : vector<1x128xf32>
    %34 = math.rsqrt %33 : vector<1x128xf32>
    %35 = arith.mulf %31, %34 : vector<1x128xf32>
    %c0_17 = arith.constant 0 : index
    %c0_18 = arith.constant 0 : index
    %36 = vector.load %arg6[%c0_17, %c0_18] : memref<1x128xf32, #tpu.memory_space<vmem>>, vector<1x128xf32>
    %37 = arith.mulf %23, %35 : vector<1x128xf32>
    %38 = arith.subf %36, %37 : vector<1x128xf32>
    %39 = vector.broadcast %35 : vector<1x128xf32> to vector<64x128xf32>
    %40 = arith.mulf %19, %39 : vector<64x128xf32>
    %41 = vector.broadcast %38 : vector<1x128xf32> to vector<64x128xf32>
    %42 = arith.addf %40, %41 : vector<64x128xf32>
    %cst_19 = arith.constant 0.000000e+00 : f32
    %43 = vector.broadcast %cst_19 : f32 to vector<64x128xf32>
    %44 = arith.maximumf %42, %43 : vector<64x128xf32>
    %45 = arith.truncf %44 : vector<64x128xf32> to vector<64x128xbf16>
    %c0_20 = arith.constant 0 : index
    %c0_21 = arith.constant 0 : index
    %46 = vector.load %arg7[%c0_20, %c0_21] : memref<64x128xbf16, #tpu.memory_space<vmem>>, vector<64x128xbf16>
    tpu.vector_store %arg7[%c0_20, %c0_21], %45 {strides = array<i32>} : memref<64x128xbf16, #tpu.memory_space<vmem>>, vector<64x128xbf16>,
    return
  }
  func.func @transform_0(%arg0: i32) -> (i32, i32, i32) {
    %c0_i32 = arith.constant 0 : i32
    %c0_i32_0 = arith.constant 0 : i32
    %c0_i32_1 = arith.constant 0 : i32
    %c0_i32_2 = arith.constant 0 : i32
    return %c0_i32, %c0_i32_0, %c0_i32_1 : i32, i32, i32
  }
  func.func @transform_1(%arg0: i32) -> (i32, i32, i32) {
    %c0_i32 = arith.constant 0 : i32
    %c0_i32_0 = arith.constant 0 : i32
    %c0_i32_1 = arith.constant 0 : i32
    %c0_i32_2 = arith.constant 0 : i32
    return %c0_i32, %c0_i32_0, %c0_i32_1 : i32, i32, i32
  }
  func.func @transform_2(%arg0: i32) -> (i32, i32) {
    %c0_i32 = arith.constant 0 : i32
    %c0_i32_0 = arith.constant 0 : i32
    %c0_i32_1 = arith.constant 0 : i32
    return %c0_i32, %c0_i32_0 : i32, i32
  }
  func.func @transform_3(%arg0: i32) -> (i32, i32) {
    %c0_i32 = arith.constant 0 : i32
    %c0_i32_0 = arith.constant 0 : i32
    %c0_i32_1 = arith.constant 0 : i32
    return %c0_i32, %c0_i32_0 : i32, i32
  }
  func.func @transform_4(%arg0: i32) -> (i32, i32) {
    %c0_i32 = arith.constant 0 : i32
    %c0_i32_0 = arith.constant 0 : i32
    %c0_i32_1 = arith.constant 0 : i32
    return %c0_i32, %c0_i32_0 : i32, i32
  }
  func.func @transform_5(%arg0: i32) -> (i32, i32) {
    %c0_i32 = arith.constant 0 : i32
    %c0_i32_0 = arith.constant 0 : i32
    %c0_i32_1 = arith.constant 0 : i32
    return %c0_i32, %c0_i32_0 : i32, i32
  }
  func.func @transform_6(%arg0: i32) -> (i32, i32) {
    %c0_i32 = arith.constant 0 : i32
    %c0_i32_0 = arith.constant 0 : i32
    %c0_i32_1 = arith.constant 0 : i32
    return %c0_i32, %c0_i32_0 : i32, i32
  }
}

module attributes {stable_mosaic.version = 11 : i64} {
  func.func @_upsample_kernel(%arg0: i32, %arg1: memref<2x32x128xbf16, #tpu.memory_space<vmem>>, %arg2: memref<4x32x1xf32, #tpu.memory_space<vmem>>, %arg3: memref<2x32x128xbf16, #tpu.memory_space<vmem>>, %arg4: memref<2x32x128xbf16, #tpu.memory_space<vmem>>) attributes {dimension_semantics = [#tpu.dimension_semantics<arbitrary>], iteration_bounds = array<i64: 1>, scalar_prefetch = 0 : i64, scratch_operands = 0 : i64, tpu.core_type = #tpu.core_type<tc>, window_params = [{pipeline_mode = #tpu.pipeline_mode<synchronous>, transform_indices = @transform_0, window_bounds = array<i64: 2, 32, 128>}, {pipeline_mode = #tpu.pipeline_mode<synchronous>, transform_indices = @transform_1, window_bounds = array<i64: 4, 32, 1>}, {pipeline_mode = #tpu.pipeline_mode<synchronous>, transform_indices = @transform_2, window_bounds = array<i64: 2, 32, 128>}, {pipeline_mode = #tpu.pipeline_mode<synchronous>, transform_indices = @transform_3, window_bounds = array<i64: 2, 32, 128>}]} {
    %c0 = arith.constant 0 : index
    %c0_0 = arith.constant 0 : index
    %c0_1 = arith.constant 0 : index
    %0 = vector.load %arg1[%c0, %c0_0, %c0_1] : memref<2x32x128xbf16, #tpu.memory_space<vmem>>, vector<2x32x128xbf16>
    %1 = arith.extf %0 : vector<2x32x128xbf16> to vector<2x32x128xf32>
    %2 = vector.extract_strided_slice %1 {offsets = [0, 0, 0], sizes = [2, 1, 128], strides = [1, 1, 1]} : vector<2x32x128xf32> to vector<2x1x128xf32>
    %3 = vector.extract_strided_slice %1 {offsets = [0, 0, 0], sizes = [2, 31, 128], strides = [1, 1, 1]} : vector<2x32x128xf32> to vector<2x31x128xf32>
    %4 = tpu.concatenate %2, %3 in 1 : vector<2x1x128xf32>, vector<2x31x128xf32> -> vector<2x32x128xf32>
    %5 = vector.extract_strided_slice %1 {offsets = [0, 1, 0], sizes = [2, 31, 128], strides = [1, 1, 1]} : vector<2x32x128xf32> to vector<2x31x128xf32>
    %6 = vector.extract_strided_slice %1 {offsets = [0, 31, 0], sizes = [2, 1, 128], strides = [1, 1, 1]} : vector<2x32x128xf32> to vector<2x1x128xf32>
    %7 = tpu.concatenate %5, %6 in 1 : vector<2x31x128xf32>, vector<2x1x128xf32> -> vector<2x32x128xf32>
    %c0_2 = arith.constant 0 : index
    %c0_3 = arith.constant 0 : index
    %c0_4 = arith.constant 0 : index
    %8 = vector.load %arg2[%c0_2, %c0_3, %c0_4] : memref<4x32x1xf32, #tpu.memory_space<vmem>>, vector<1x32x1xf32>
    %9 = vector.shape_cast %8 : vector<1x32x1xf32> to vector<32x1xf32>
    %10 = vector.shape_cast %9 : vector<32x1xf32> to vector<1x32x1xf32>
    %11 = vector.broadcast %10 : vector<1x32x1xf32> to vector<2x32x128xf32>
    %12 = arith.mulf %11, %4 : vector<2x32x128xf32>
    %c1 = arith.constant 1 : index
    %c0_5 = arith.constant 0 : index
    %c0_6 = arith.constant 0 : index
    %13 = vector.load %arg2[%c1, %c0_5, %c0_6] : memref<4x32x1xf32, #tpu.memory_space<vmem>>, vector<1x32x1xf32>
    %14 = vector.shape_cast %13 : vector<1x32x1xf32> to vector<32x1xf32>
    %15 = vector.shape_cast %14 : vector<32x1xf32> to vector<1x32x1xf32>
    %16 = vector.broadcast %15 : vector<1x32x1xf32> to vector<2x32x128xf32>
    %17 = arith.mulf %16, %1 : vector<2x32x128xf32>
    %18 = arith.addf %12, %17 : vector<2x32x128xf32>
    %c2 = arith.constant 2 : index
    %c0_7 = arith.constant 0 : index
    %c0_8 = arith.constant 0 : index
    %19 = vector.load %arg2[%c2, %c0_7, %c0_8] : memref<4x32x1xf32, #tpu.memory_space<vmem>>, vector<1x32x1xf32>
    %20 = vector.shape_cast %19 : vector<1x32x1xf32> to vector<32x1xf32>
    %21 = vector.shape_cast %20 : vector<32x1xf32> to vector<1x32x1xf32>
    %22 = vector.broadcast %21 : vector<1x32x1xf32> to vector<2x32x128xf32>
    %23 = arith.mulf %22, %1 : vector<2x32x128xf32>
    %c3 = arith.constant 3 : index
    %c0_9 = arith.constant 0 : index
    %c0_10 = arith.constant 0 : index
    %24 = vector.load %arg2[%c3, %c0_9, %c0_10] : memref<4x32x1xf32, #tpu.memory_space<vmem>>, vector<1x32x1xf32>
    %25 = vector.shape_cast %24 : vector<1x32x1xf32> to vector<32x1xf32>
    %26 = vector.shape_cast %25 : vector<32x1xf32> to vector<1x32x1xf32>
    %27 = vector.broadcast %26 : vector<1x32x1xf32> to vector<2x32x128xf32>
    %28 = arith.mulf %27, %7 : vector<2x32x128xf32>
    %29 = arith.addf %23, %28 : vector<2x32x128xf32>
    %30 = arith.truncf %18 : vector<2x32x128xf32> to vector<2x32x128xbf16>
    %c0_11 = arith.constant 0 : index
    %c0_12 = arith.constant 0 : index
    %c0_13 = arith.constant 0 : index
    %31 = vector.load %arg3[%c0_11, %c0_12, %c0_13] : memref<2x32x128xbf16, #tpu.memory_space<vmem>>, vector<2x32x128xbf16>
    tpu.vector_store %arg3[%c0_11, %c0_12, %c0_13], %30 {strides = array<i32>} : memref<2x32x128xbf16, #tpu.memory_space<vmem>>, vector<2x32x128xbf16>,
    %32 = arith.truncf %29 : vector<2x32x128xf32> to vector<2x32x128xbf16>
    %c0_14 = arith.constant 0 : index
    %c0_15 = arith.constant 0 : index
    %c0_16 = arith.constant 0 : index
    %33 = vector.load %arg4[%c0_14, %c0_15, %c0_16] : memref<2x32x128xbf16, #tpu.memory_space<vmem>>, vector<2x32x128xbf16>
    tpu.vector_store %arg4[%c0_14, %c0_15, %c0_16], %32 {strides = array<i32>} : memref<2x32x128xbf16, #tpu.memory_space<vmem>>, vector<2x32x128xbf16>,
    return
  }
  func.func @transform_0(%arg0: i32) -> (i32, i32, i32) {
    %c0_i32 = arith.constant 0 : i32
    %c0_i32_0 = arith.constant 0 : i32
    %c0_i32_1 = arith.constant 0 : i32
    %c0_i32_2 = arith.constant 0 : i32
    return %c0_i32, %c0_i32_0, %c0_i32_1 : i32, i32, i32
  }
  func.func @transform_1(%arg0: i32) -> (i32, i32, i32) {
    %c0_i32 = arith.constant 0 : i32
    %c0_i32_0 = arith.constant 0 : i32
    %c0_i32_1 = arith.constant 0 : i32
    %c0_i32_2 = arith.constant 0 : i32
    return %c0_i32, %c0_i32_0, %c0_i32_1 : i32, i32, i32
  }
  func.func @transform_2(%arg0: i32) -> (i32, i32, i32) {
    %c0_i32 = arith.constant 0 : i32
    %c0_i32_0 = arith.constant 0 : i32
    %c0_i32_1 = arith.constant 0 : i32
    %c0_i32_2 = arith.constant 0 : i32
    return %c0_i32, %c0_i32_0, %c0_i32_1 : i32, i32, i32
  }
  func.func @transform_3(%arg0: i32) -> (i32, i32, i32) {
    %c0_i32 = arith.constant 0 : i32
    %c0_i32_0 = arith.constant 0 : i32
    %c0_i32_1 = arith.constant 0 : i32
    %c0_i32_2 = arith.constant 0 : i32
    return %c0_i32, %c0_i32_0, %c0_i32_1 : i32, i32, i32
  }
}

module attributes {stable_mosaic.version = 11 : i64} {
  func.func @_conbr_kernel(%arg0: i32, %arg1: memref<2x64x128xbf16, #tpu.memory_space<vmem>>, %arg2: memref<2x64x128xbf16, #tpu.memory_space<vmem>>, %arg3: memref<1280x128xbf16, #tpu.memory_space<vmem>>, %arg4: memref<1x128xf32, #tpu.memory_space<vmem>>, %arg5: memref<1x128xf32, #tpu.memory_space<vmem>>, %arg6: memref<1x128xf32, #tpu.memory_space<vmem>>, %arg7: memref<128x128xbf16, #tpu.memory_space<vmem>>) attributes {dimension_semantics = [#tpu.dimension_semantics<arbitrary>], iteration_bounds = array<i64: 1>, scalar_prefetch = 0 : i64, scratch_operands = 0 : i64, tpu.core_type = #tpu.core_type<tc>, window_params = [{pipeline_mode = #tpu.pipeline_mode<synchronous>, transform_indices = @transform_0, window_bounds = array<i64: 2, 64, 128>}, {pipeline_mode = #tpu.pipeline_mode<synchronous>, transform_indices = @transform_1, window_bounds = array<i64: 2, 64, 128>}, {pipeline_mode = #tpu.pipeline_mode<synchronous>, transform_indices = @transform_2, window_bounds = array<i64: 1280, 128>}, {pipeline_mode = #tpu.pipeline_mode<synchronous>, transform_indices = @transform_3, window_bounds = array<i64: 1, 128>}, {pipeline_mode = #tpu.pipeline_mode<synchronous>, transform_indices = @transform_4, window_bounds = array<i64: 1, 128>}, {pipeline_mode = #tpu.pipeline_mode<synchronous>, transform_indices = @transform_5, window_bounds = array<i64: 1, 128>}, {pipeline_mode = #tpu.pipeline_mode<synchronous>, transform_indices = @transform_6, window_bounds = array<i64: 128, 128>}]} {
    %c0 = arith.constant 0 : index
    %c0_0 = arith.constant 0 : index
    %c0_1 = arith.constant 0 : index
    %0 = vector.load %arg1[%c0, %c0_0, %c0_1] : memref<2x64x128xbf16, #tpu.memory_space<vmem>>, vector<2x64x128xbf16>
    %1 = arith.extf %0 : vector<2x64x128xbf16> to vector<2x64x128xf32>
    %c0_2 = arith.constant 0 : index
    %c0_3 = arith.constant 0 : index
    %c0_4 = arith.constant 0 : index
    %2 = vector.load %arg2[%c0_2, %c0_3, %c0_4] : memref<2x64x128xbf16, #tpu.memory_space<vmem>>, vector<2x64x128xbf16>
    %3 = arith.extf %2 : vector<2x64x128xbf16> to vector<2x64x128xf32>
    %4 = tpu.concatenate %1, %3 in 2 : vector<2x64x128xf32>, vector<2x64x128xf32> -> vector<2x64x256xf32>
    %cst = arith.constant 0.000000e+00 : f32
    %5 = vector.broadcast %cst : f32 to vector<2x2x256xf32>
    %6 = tpu.concatenate %5, %4, %5 in 1 : vector<2x2x256xf32>, vector<2x64x256xf32>, vector<2x2x256xf32> -> vector<2x68x256xf32>
    %7 = vector.extract_strided_slice %6 {offsets = [0, 0, 0], sizes = [2, 64, 256], strides = [1, 1, 1]} : vector<2x68x256xf32> to vector<2x64x256xf32>
    %8 = vector.extract_strided_slice %6 {offsets = [0, 1, 0], sizes = [2, 64, 256], strides = [1, 1, 1]} : vector<2x68x256xf32> to vector<2x64x256xf32>
    %9 = vector.extract_strided_slice %6 {offsets = [0, 2, 0], sizes = [2, 64, 256], strides = [1, 1, 1]} : vector<2x68x256xf32> to vector<2x64x256xf32>
    %10 = vector.extract_strided_slice %6 {offsets = [0, 3, 0], sizes = [2, 64, 256], strides = [1, 1, 1]} : vector<2x68x256xf32> to vector<2x64x256xf32>
    %11 = vector.extract_strided_slice %6 {offsets = [0, 4, 0], sizes = [2, 64, 256], strides = [1, 1, 1]} : vector<2x68x256xf32> to vector<2x64x256xf32>
    %12 = tpu.concatenate %7, %8, %9, %10, %11 in 2 : vector<2x64x256xf32>, vector<2x64x256xf32>, vector<2x64x256xf32>, vector<2x64x256xf32>, vector<2x64x256xf32> -> vector<2x64x1280xf32>
    %13 = vector.shape_cast %12 : vector<2x64x1280xf32> to vector<128x1280xf32>
    %14 = arith.truncf %13 : vector<128x1280xf32> to vector<128x1280xbf16>
    %c0_5 = arith.constant 0 : index
    %c0_6 = arith.constant 0 : index
    %15 = vector.load %arg3[%c0_5, %c0_6] : memref<1280x128xbf16, #tpu.memory_space<vmem>>, vector<1280x128xbf16>
    %cst_7 = arith.constant dense<0.000000e+00> : vector<128x128xf32>
    %16 = tpu.matmul %14, %15, %cst_7 {dimension_numbers = #tpu.dot_dimension_numbers<[1], [0], [0], [1], [0, 0, 1, 1], [], []>} : vector<128x1280xbf16>, vector<1280x128xbf16>, vector<128x128xf32> -> vector<128x128xf32>
    %c0_8 = arith.constant 0 : index
    %c0_9 = arith.constant 0 : index
    %17 = vector.load %arg4[%c0_8, %c0_9] : memref<1x128xf32, #tpu.memory_space<vmem>>, vector<1x128xf32>
    %18 = vector.broadcast %17 : vector<1x128xf32> to vector<128x128xf32>
    %19 = arith.addf %16, %18 : vector<128x128xf32>
    %cst_10 = arith.constant dense<0.000000e+00> : vector<128xf32>
    %20 = vector.multi_reduction <add>, %19, %cst_10 [0] : vector<128x128xf32> to vector<128xf32>
    %21 = vector.shape_cast %20 : vector<128xf32> to vector<1x128xf32>
    %cst_11 = arith.constant 1.280000e+02 : f32
    %22 = vector.broadcast %cst_11 : f32 to vector<1x128xf32>
    %23 = arith.divf %21, %22 : vector<1x128xf32>
    %24 = vector.broadcast %23 : vector<1x128xf32> to vector<128x128xf32>
    %25 = arith.subf %19, %24 : vector<128x128xf32>
    %26 = arith.mulf %25, %25 : vector<128x128xf32>
    %cst_12 = arith.constant dense<0.000000e+00> : vector<128xf32>
    %27 = vector.multi_reduction <add>, %26, %cst_12 [0] : vector<128x128xf32> to vector<128xf32>
    %28 = vector.shape_cast %27 : vector<128xf32> to vector<1x128xf32>
    %cst_13 = arith.constant 1.280000e+02 : f32
    %29 = vector.broadcast %cst_13 : f32 to vector<1x128xf32>
    %30 = arith.divf %28, %29 : vector<1x128xf32>
    %c0_14 = arith.constant 0 : index
    %c0_15 = arith.constant 0 : index
    %31 = vector.load %arg5[%c0_14, %c0_15] : memref<1x128xf32, #tpu.memory_space<vmem>>, vector<1x128xf32>
    %cst_16 = arith.constant 9.99999974E-6 : f32
    %32 = vector.broadcast %cst_16 : f32 to vector<1x128xf32>
    %33 = arith.addf %30, %32 : vector<1x128xf32>
    %34 = math.rsqrt %33 : vector<1x128xf32>
    %35 = arith.mulf %31, %34 : vector<1x128xf32>
    %c0_17 = arith.constant 0 : index
    %c0_18 = arith.constant 0 : index
    %36 = vector.load %arg6[%c0_17, %c0_18] : memref<1x128xf32, #tpu.memory_space<vmem>>, vector<1x128xf32>
    %37 = arith.mulf %23, %35 : vector<1x128xf32>
    %38 = arith.subf %36, %37 : vector<1x128xf32>
    %39 = vector.broadcast %35 : vector<1x128xf32> to vector<128x128xf32>
    %40 = arith.mulf %19, %39 : vector<128x128xf32>
    %41 = vector.broadcast %38 : vector<1x128xf32> to vector<128x128xf32>
    %42 = arith.addf %40, %41 : vector<128x128xf32>
    %cst_19 = arith.constant 0.000000e+00 : f32
    %43 = vector.broadcast %cst_19 : f32 to vector<128x128xf32>
    %44 = arith.maximumf %42, %43 : vector<128x128xf32>
    %45 = arith.truncf %44 : vector<128x128xf32> to vector<128x128xbf16>
    %c0_20 = arith.constant 0 : index
    %c0_21 = arith.constant 0 : index
    %46 = vector.load %arg7[%c0_20, %c0_21] : memref<128x128xbf16, #tpu.memory_space<vmem>>, vector<128x128xbf16>
    tpu.vector_store %arg7[%c0_20, %c0_21], %45 {strides = array<i32>} : memref<128x128xbf16, #tpu.memory_space<vmem>>, vector<128x128xbf16>,
    return
  }
  func.func @transform_0(%arg0: i32) -> (i32, i32, i32) {
    %c0_i32 = arith.constant 0 : i32
    %c0_i32_0 = arith.constant 0 : i32
    %c0_i32_1 = arith.constant 0 : i32
    %c0_i32_2 = arith.constant 0 : i32
    return %c0_i32, %c0_i32_0, %c0_i32_1 : i32, i32, i32
  }
  func.func @transform_1(%arg0: i32) -> (i32, i32, i32) {
    %c0_i32 = arith.constant 0 : i32
    %c0_i32_0 = arith.constant 0 : i32
    %c0_i32_1 = arith.constant 0 : i32
    %c0_i32_2 = arith.constant 0 : i32
    return %c0_i32, %c0_i32_0, %c0_i32_1 : i32, i32, i32
  }
  func.func @transform_2(%arg0: i32) -> (i32, i32) {
    %c0_i32 = arith.constant 0 : i32
    %c0_i32_0 = arith.constant 0 : i32
    %c0_i32_1 = arith.constant 0 : i32
    return %c0_i32, %c0_i32_0 : i32, i32
  }
  func.func @transform_3(%arg0: i32) -> (i32, i32) {
    %c0_i32 = arith.constant 0 : i32
    %c0_i32_0 = arith.constant 0 : i32
    %c0_i32_1 = arith.constant 0 : i32
    return %c0_i32, %c0_i32_0 : i32, i32
  }
  func.func @transform_4(%arg0: i32) -> (i32, i32) {
    %c0_i32 = arith.constant 0 : i32
    %c0_i32_0 = arith.constant 0 : i32
    %c0_i32_1 = arith.constant 0 : i32
    return %c0_i32, %c0_i32_0 : i32, i32
  }
  func.func @transform_5(%arg0: i32) -> (i32, i32) {
    %c0_i32 = arith.constant 0 : i32
    %c0_i32_0 = arith.constant 0 : i32
    %c0_i32_1 = arith.constant 0 : i32
    return %c0_i32, %c0_i32_0 : i32, i32
  }
  func.func @transform_6(%arg0: i32) -> (i32, i32) {
    %c0_i32 = arith.constant 0 : i32
    %c0_i32_0 = arith.constant 0 : i32
    %c0_i32_1 = arith.constant 0 : i32
    return %c0_i32, %c0_i32_0 : i32, i32
  }
}

module attributes {stable_mosaic.version = 11 : i64} {
  func.func @_outconv_kernel(%arg0: i32, %arg1: memref<2x64x128xbf16, #tpu.memory_space<vmem>>, %arg2: memref<640x128xbf16, #tpu.memory_space<vmem>>, %arg3: memref<1x128xf32, #tpu.memory_space<vmem>>, %arg4: memref<128x128xf32, #tpu.memory_space<vmem>>) attributes {dimension_semantics = [#tpu.dimension_semantics<arbitrary>], iteration_bounds = array<i64: 1>, scalar_prefetch = 0 : i64, scratch_operands = 0 : i64, tpu.core_type = #tpu.core_type<tc>, window_params = [{pipeline_mode = #tpu.pipeline_mode<synchronous>, transform_indices = @transform_0, window_bounds = array<i64: 2, 64, 128>}, {pipeline_mode = #tpu.pipeline_mode<synchronous>, transform_indices = @transform_1, window_bounds = array<i64: 640, 128>}, {pipeline_mode = #tpu.pipeline_mode<synchronous>, transform_indices = @transform_2, window_bounds = array<i64: 1, 128>}, {pipeline_mode = #tpu.pipeline_mode<synchronous>, transform_indices = @transform_3, window_bounds = array<i64: 128, 128>}]} {
    %c0 = arith.constant 0 : index
    %c0_0 = arith.constant 0 : index
    %c0_1 = arith.constant 0 : index
    %0 = vector.load %arg1[%c0, %c0_0, %c0_1] : memref<2x64x128xbf16, #tpu.memory_space<vmem>>, vector<2x64x128xbf16>
    %1 = arith.extf %0 : vector<2x64x128xbf16> to vector<2x64x128xf32>
    %cst = arith.constant 0.000000e+00 : f32
    %2 = vector.broadcast %cst : f32 to vector<2x2x128xf32>
    %3 = tpu.concatenate %2, %1, %2 in 1 : vector<2x2x128xf32>, vector<2x64x128xf32>, vector<2x2x128xf32> -> vector<2x68x128xf32>
    %4 = vector.extract_strided_slice %3 {offsets = [0, 0, 0], sizes = [2, 64, 128], strides = [1, 1, 1]} : vector<2x68x128xf32> to vector<2x64x128xf32>
    %5 = vector.extract_strided_slice %3 {offsets = [0, 1, 0], sizes = [2, 64, 128], strides = [1, 1, 1]} : vector<2x68x128xf32> to vector<2x64x128xf32>
    %6 = vector.extract_strided_slice %3 {offsets = [0, 2, 0], sizes = [2, 64, 128], strides = [1, 1, 1]} : vector<2x68x128xf32> to vector<2x64x128xf32>
    %7 = vector.extract_strided_slice %3 {offsets = [0, 3, 0], sizes = [2, 64, 128], strides = [1, 1, 1]} : vector<2x68x128xf32> to vector<2x64x128xf32>
    %8 = vector.extract_strided_slice %3 {offsets = [0, 4, 0], sizes = [2, 64, 128], strides = [1, 1, 1]} : vector<2x68x128xf32> to vector<2x64x128xf32>
    %9 = tpu.concatenate %4, %5, %6, %7, %8 in 2 : vector<2x64x128xf32>, vector<2x64x128xf32>, vector<2x64x128xf32>, vector<2x64x128xf32>, vector<2x64x128xf32> -> vector<2x64x640xf32>
    %10 = vector.shape_cast %9 : vector<2x64x640xf32> to vector<128x640xf32>
    %11 = arith.truncf %10 : vector<128x640xf32> to vector<128x640xbf16>
    %c0_2 = arith.constant 0 : index
    %c0_3 = arith.constant 0 : index
    %12 = vector.load %arg2[%c0_2, %c0_3] : memref<640x128xbf16, #tpu.memory_space<vmem>>, vector<640x128xbf16>
    %cst_4 = arith.constant dense<0.000000e+00> : vector<128x128xf32>
    %13 = tpu.matmul %11, %12, %cst_4 {dimension_numbers = #tpu.dot_dimension_numbers<[1], [0], [0], [1], [0, 0, 1, 1], [], []>} : vector<128x640xbf16>, vector<640x128xbf16>, vector<128x128xf32> -> vector<128x128xf32>
    %c0_5 = arith.constant 0 : index
    %c0_6 = arith.constant 0 : index
    %14 = vector.load %arg3[%c0_5, %c0_6] : memref<1x128xf32, #tpu.memory_space<vmem>>, vector<1x128xf32>
    %15 = vector.broadcast %14 : vector<1x128xf32> to vector<128x128xf32>
    %16 = arith.addf %13, %15 : vector<128x128xf32>
    %c0_7 = arith.constant 0 : index
    %c0_8 = arith.constant 0 : index
    %17 = vector.load %arg4[%c0_7, %c0_8] : memref<128x128xf32, #tpu.memory_space<vmem>>, vector<128x128xf32>
    tpu.vector_store %arg4[%c0_7, %c0_8], %16 {strides = array<i32>} : memref<128x128xf32, #tpu.memory_space<vmem>>, vector<128x128xf32>,
    return
  }
  func.func @transform_0(%arg0: i32) -> (i32, i32, i32) {
    %c0_i32 = arith.constant 0 : i32
    %c0_i32_0 = arith.constant 0 : i32
    %c0_i32_1 = arith.constant 0 : i32
    %c0_i32_2 = arith.constant 0 : i32
    return %c0_i32, %c0_i32_0, %c0_i32_1 : i32, i32, i32
  }
  func.func @transform_1(%arg0: i32) -> (i32, i32) {
    %c0_i32 = arith.constant 0 : i32
    %c0_i32_0 = arith.constant 0 : i32
    %c0_i32_1 = arith.constant 0 : i32
    return %c0_i32, %c0_i32_0 : i32, i32
  }
  func.func @transform_2(%arg0: i32) -> (i32, i32) {
    %c0_i32 = arith.constant 0 : i32
    %c0_i32_0 = arith.constant 0 : i32
    %c0_i32_1 = arith.constant 0 : i32
    return %c0_i32, %c0_i32_0 : i32, i32
  }
  func.func @transform_3(%arg0: i32) -> (i32, i32) {
    %c0_i32 = arith.constant 0 : i32
    %c0_i32_0 = arith.constant 0 : i32
    %c0_i32_1 = arith.constant 0 : i32
    return %c0_i32, %c0_i32_0 : i32, i32
  }
}

</mosaic_0001>

<llo_original>
// kernel: _lambda_.7
$region0: #{_lambda_.7}
  #allocation0 [shape = 'u32[]', space=smem, size = 0x4, offset = 0x4, fixed_abs, tag = 'smem constant byte address 0x4 - core index']
  #allocation1 [shape = 'u32[72,128]{1,0:T(1,128)}', space=vmem, size = 0x9000, scoped, tag = 'internal scratch']
  %s0 = inlined_call_operand.vmem [shape: bf16[2,8,128], index: 0, kind: input, shape index: {}]
  %s1 = inlined_call_operand.vmem [shape: f32[4,8,1], index: 1, kind: input, shape index: {}]
  %s2 = inlined_call_operand.vmem [shape: bf16[2,8,128], index: 2, kind: output, shape index: {0}]
  %s3 = inlined_call_operand.vmem [shape: bf16[2,8,128], index: 3, kind: output, shape index: {1}]
  %4 = xla_tuple %s2, %s3
  %s5 = sld [smem:[#allocation0]]
  $region26: #{_lambda_.7} parent=0
    _
  %s7 = ssub.s32 1, %s5
  %s8 = scalar_select 0, %s7, %s5
  // Predicated region
  $region2: #{_lambda_.7} parent=0 // pred_check
    _
  $region3: #{_lambda_.7} parent=0 // pred_check_branch
    %10 = sbr.rel (0) target = $region5
  $region4: #{_lambda_.7} parent=0 // pred_region
    _
  $region5: #{_lambda_.7} parent=0 // pred_fallthru
    _
  // Predicated region
  $region6: #{_lambda_.7} parent=0 // pred_check
    _
  $region7: #{_lambda_.7} parent=0 // pred_check_branch
    %12 = sbr.rel (0) target = $region9
  $region8: #{_lambda_.7} parent=0 // pred_region
    _
  $region9: #{_lambda_.7} parent=0 // pred_fallthru
    _
  %v13 = vld [vmem:[%s0] sm:$0xf]
  %v14 = vld [vmem:[%s0 + $0x4] sm:$0xf]
  %v15 = vunpack.c.l.bf16 %v13
  %v16 = vunpack.c.l.bf16 %v14
  %v19 = vrot.slane %v15, 7
  %v20 = vrot.slane %v16, 7
  %vm23 = vcmask 1040384
  %v24 = vsel %vm23, %v15, %v19
  %v25 = vsel %vm23, %v16, %v20
  %v26 = vrot.slane %v15, 1
  %v27 = vrot.slane %v16, 1
  %vm30 = vcmask 1046528
  %v31 = vsel %vm30, %v26, %v15
  %v32 = vsel %vm30, %v27, %v16
  %v33 = vld [vmem:[%s1] sm:$0xff]
  %35 = vset.pattern.permute.xlu0 0
  %36 = vperm.xlu0 %35, %v33
  %v37 = vpop.permute.xlu0 %36
  %v39 = vmul.f32 %v37, %v24
  %v40 = vmul.f32 %v37, %v25
  %s41 = scalar_lea.vmem %s1, 8
  %v42 = vld [vmem:[%s41] sm:$0xff]
  %44 = vset.pattern.permute.xlu0 0
  %45 = vperm.xlu0 %44, %v42
  %v46 = vpop.permute.xlu0 %45
  %v48 = vmul.f32 %v46, %v15
  %v49 = vmul.f32 %v46, %v16
  %v50 = vadd.f32 %v39, %v48
  %v51 = vadd.f32 %v40, %v49
  %s52 = scalar_lea.vmem %s1, 16
  %v53 = vld [vmem:[%s52] sm:$0xff]
  %55 = vset.pattern.permute.xlu0 0
  %56 = vperm.xlu0 %55, %v53
  %v57 = vpop.permute.xlu0 %56
  %v59 = vmul.f32 %v57, %v15
  %v60 = vmul.f32 %v57, %v16
  %s61 = scalar_lea.vmem %s1, 24
  %v62 = vld [vmem:[%s61] sm:$0xff]
  %64 = vset.pattern.permute.xlu0 0
  %65 = vperm.xlu0 %64, %v62
  %v66 = vpop.permute.xlu0 %65
  %v68 = vmul.f32 %v66, %v31
  %v69 = vmul.f32 %v66, %v32
  %v70 = vadd.f32 %v59, %v68
  %v71 = vadd.f32 %v60, %v69
  %v72 = vpack.c.bf16 %v50, %v50
  %v73 = vpack.c.bf16 %v51, %v51
  %74 = vst [vmem:[%s2] sm:$0xf] %v72
  %75 = vst [vmem:[%s2 + $0x4] sm:$0xf] %v73
  %v76 = vpack.c.bf16 %v70, %v70
  %v77 = vpack.c.bf16 %v71, %v71
  %78 = vst [vmem:[%s3] sm:$0xf] %v76
  %79 = vst [vmem:[%s3 + $0x4] sm:$0xf] %v77
  // Predicated region
  $region10: #{_lambda_.7} parent=0 // pred_check
    _
  $region11: #{_lambda_.7} parent=0 // pred_check_branch
    %81 = sbr.rel (0) target = $region13
  $region12: #{_lambda_.7} parent=0 // pred_region
    _
  $region13: #{_lambda_.7} parent=0 // pred_fallthru
    _
  // Predicated region
  $region14: #{_lambda_.7} parent=0 // pred_check
    _
  $region15: #{_lambda_.7} parent=0 // pred_check_branch
    %83 = sbr.rel (0) target = $region17
  $region16: #{_lambda_.7} parent=0 // pred_region
    _
  $region17: #{_lambda_.7} parent=0 // pred_fallthru
    _
  // Predicated region
  $region18: #{_lambda_.7} parent=0 // pred_check
    _
  $region19: #{_lambda_.7} parent=0 // pred_check_branch
    %85 = sbr.rel (0) target = $region21
  $region20: #{_lambda_.7} parent=0 // pred_region
    _
  $region21: #{_lambda_.7} parent=0 // pred_fallthru
    _
  // Predicated region
  $region22: #{_lambda_.7} parent=0 // pred_check
    _
  $region23: #{_lambda_.7} parent=0 // pred_check_branch
    %87 = sbr.rel (0) target = $region25
  $region24: #{_lambda_.7} parent=0 // pred_region
    _
  $region25: #{_lambda_.7} parent=0 // pred_fallthru
    _

// kernel: _lambda_.9
$region0: #{_lambda_.9}
  #allocation0 [shape = 'u32[]', space=smem, size = 0x4, offset = 0x4, fixed_abs, tag = 'smem constant byte address 0x4 - core index']
  #allocation1 [shape = 'u32[72,128]{1,0:T(1,128)}', space=vmem, size = 0x9000, scoped, tag = 'internal scratch']
  %s0 = inlined_call_operand.vmem [shape: bf16[2,16,128], index: 0, kind: input, shape index: {}]
  %s1 = inlined_call_operand.vmem [shape: f32[4,16,1], index: 1, kind: input, shape index: {}]
  %s2 = inlined_call_operand.vmem [shape: bf16[2,16,128], index: 2, kind: output, shape index: {0}]
  %s3 = inlined_call_operand.vmem [shape: bf16[2,16,128], index: 3, kind: output, shape index: {1}]
  %4 = xla_tuple %s2, %s3
  %s5 = sld [smem:[#allocation0]]
  $region26: #{_lambda_.9} parent=0
    _
  %s7 = ssub.s32 1, %s5
  %s8 = scalar_select 0, %s7, %s5
  // Predicated region
  $region2: #{_lambda_.9} parent=0 // pred_check
    _
  $region3: #{_lambda_.9} parent=0 // pred_check_branch
    %10 = sbr.rel (0) target = $region5
  $region4: #{_lambda_.9} parent=0 // pred_region
    _
  $region5: #{_lambda_.9} parent=0 // pred_fallthru
    _
  // Predicated region
  $region6: #{_lambda_.9} parent=0 // pred_check
    _
  $region7: #{_lambda_.9} parent=0 // pred_check_branch
    %12 = sbr.rel (0) target = $region9
  $region8: #{_lambda_.9} parent=0 // pred_region
    _
  $region9: #{_lambda_.9} parent=0 // pred_fallthru
    _
  %v13 = vld [vmem:[%s0] sm:$0xf]
  %v14 = vld [vmem:[%s0 + $0x4] sm:$0xf]
  %v15 = vld [vmem:[%s0 + $0x8] sm:$0xf]
  %v16 = vld [vmem:[%s0 + $0xc] sm:$0xf]
  %v17 = vunpack.c.l.bf16 %v13
  %v18 = vunpack.c.l.bf16 %v14
  %v19 = vunpack.c.l.bf16 %v15
  %v20 = vunpack.c.l.bf16 %v16
  %vm25 = vcmask 1040384
  %v26 = vrot.slane %v17, 7
  %v27 = vrot.slane %v18, 7
  %v28 = vsel %vm25, %v26, %v27
  %v29 = vrot.slane %v19, 7
  %v30 = vrot.slane %v20, 7
  %v31 = vsel %vm25, %v29, %v30
  %v36 = vsel %vm25, %v17, %v26
  %v37 = vsel %vm25, %v19, %v29
  %vm38 = vcmask 1046528
  %v39 = vrot.slane %v17, 1
  %v40 = vrot.slane %v18, 1
  %v41 = vsel %vm38, %v39, %v40
  %v42 = vrot.slane %v19, 1
  %v43 = vrot.slane %v20, 1
  %v44 = vsel %vm38, %v42, %v43
  %v49 = vsel %vm38, %v40, %v18
  %v50 = vsel %vm38, %v43, %v20
  %v51 = vld [vmem:[%s1] sm:$0xff]
  %v52 = vld [vmem:[%s1 + $0x8] sm:$0xff]
  %54 = vset.pattern.permute.xlu0 0
  %55 = vperm.xlu0 %54, %v51
  %v56 = vpop.permute.xlu0 %55
  %59 = vset.pattern.permute.xlu0 0
  %60 = vperm.xlu0 %59, %v52
  %v61 = vpop.permute.xlu0 %60
  %v63 = vmul.f32 %v56, %v36
  %v64 = vmul.f32 %v61, %v28
  %v65 = vmul.f32 %v56, %v37
  %v66 = vmul.f32 %v61, %v31
  %s67 = scalar_lea.vmem %s1, 16
  %v68 = vld [vmem:[%s67] sm:$0xff]
  %v69 = vld [vmem:[%s67 + $0x8] sm:$0xff]
  %71 = vset.pattern.permute.xlu0 0
  %72 = vperm.xlu0 %71, %v68
  %v73 = vpop.permute.xlu0 %72
  %76 = vset.pattern.permute.xlu0 0
  %77 = vperm.xlu0 %76, %v69
  %v78 = vpop.permute.xlu0 %77
  %v80 = vmul.f32 %v73, %v17
  %v81 = vmul.f32 %v78, %v18
  %v82 = vmul.f32 %v73, %v19
  %v83 = vmul.f32 %v78, %v20
  %v84 = vadd.f32 %v63, %v80
  %v85 = vadd.f32 %v64, %v81
  %v86 = vadd.f32 %v65, %v82
  %v87 = vadd.f32 %v66, %v83
  %s88 = scalar_lea.vmem %s1, 32
  %v89 = vld [vmem:[%s88] sm:$0xff]
  %v90 = vld [vmem:[%s88 + $0x8] sm:$0xff]
  %92 = vset.pattern.permute.xlu0 0
  %93 = vperm.xlu0 %92, %v89
  %v94 = vpop.permute.xlu0 %93
  %97 = vset.pattern.permute.xlu0 0
  %98 = vperm.xlu0 %97, %v90
  %v99 = vpop.permute.xlu0 %98
  %v101 = vmul.f32 %v94, %v17
  %v102 = vmul.f32 %v99, %v18
  %v103 = vmul.f32 %v94, %v19
  %v104 = vmul.f32 %v99, %v20
  %s105 = scalar_lea.vmem %s1, 48
  %v106 = vld [vmem:[%s105] sm:$0xff]
  %v107 = vld [vmem:[%s105 + $0x8] sm:$0xff]
  %109 = vset.pattern.permute.xlu0 0
  %110 = vperm.xlu0 %109, %v106
  %v111 = vpop.permute.xlu0 %110
  %114 = vset.pattern.permute.xlu0 0
  %115 = vperm.xlu0 %114, %v107
  %v116 = vpop.permute.xlu0 %115
  %v118 = vmul.f32 %v111, %v41
  %v119 = vmul.f32 %v116, %v49
  %v120 = vmul.f32 %v111, %v44
  %v121 = vmul.f32 %v116, %v50
  %v122 = vadd.f32 %v101, %v118
  %v123 = vadd.f32 %v102, %v119
  %v124 = vadd.f32 %v103, %v120
  %v125 = vadd.f32 %v104, %v121
  %v126 = vpack.c.bf16 %v84, %v84
  %v127 = vpack.c.bf16 %v85, %v85
  %v128 = vpack.c.bf16 %v86, %v86
  %v129 = vpack.c.bf16 %v87, %v87
  %130 = vst [vmem:[%s2] sm:$0xf] %v126
  %131 = vst [vmem:[%s2 + $0x4] sm:$0xf] %v127
  %132 = vst [vmem:[%s2 + $0x8] sm:$0xf] %v128
  %133 = vst [vmem:[%s2 + $0xc] sm:$0xf] %v129
  %v134 = vpack.c.bf16 %v122, %v122
  %v135 = vpack.c.bf16 %v123, %v123
  %v136 = vpack.c.bf16 %v124, %v124
  %v137 = vpack.c.bf16 %v125, %v125
  %138 = vst [vmem:[%s3] sm:$0xf] %v134
  %139 = vst [vmem:[%s3 + $0x4] sm:$0xf] %v135
  %140 = vst [vmem:[%s3 + $0x8] sm:$0xf] %v136
  %141 = vst [vmem:[%s3 + $0xc] sm:$0xf] %v137
  // Predicated region
  $region10: #{_lambda_.9} parent=0 // pred_check
    _
  $region11: #{_lambda_.9} parent=0 // pred_check_branch
    %143 = sbr.rel (0) target = $region13
  $region12: #{_lambda_.9} parent=0 // pred_region
    _
  $region13: #{_lambda_.9} parent=0 // pred_fallthru
    _
  // Predicated region
  $region14: #{_lambda_.9} parent=0 // pred_check
    _
  $region15: #{_lambda_.9} parent=0 // pred_check_branch
    %145 = sbr.rel (0) target = $region17
  $region16: #{_lambda_.9} parent=0 // pred_region
    _
  $region17: #{_lambda_.9} parent=0 // pred_fallthru
    _
  // Predicated region
  $region18: #{_lambda_.9} parent=0 // pred_check
    _
  $region19: #{_lambda_.9} parent=0 // pred_check_branch
    %147 = sbr.rel (0) target = $region21
  $region20: #{_lambda_.9} parent=0 // pred_region
    _
  $region21: #{_lambda_.9} parent=0 // pred_fallthru
    _
  // Predicated region
  $region22: #{_lambda_.9} parent=0 // pred_check
    _
  $region23: #{_lambda_.9} parent=0 // pred_check_branch
    %149 = sbr.rel (0) target = $region25
  $region24: #{_lambda_.9} parent=0 // pred_region
    _
  $region25: #{_lambda_.9} parent=0 // pred_fallthru
    _

// kernel: _lambda_.8
$region0: #{_lambda_.8}
  #allocation0 [shape = 'u32[]', space=smem, size = 0x4, offset = 0x4, fixed_abs, tag = 'smem constant byte address 0x4 - core index']
  #allocation1 [shape = 'u32[72,128]{1,0:T(1,128)}', space=vmem, size = 0x9000, scoped, tag = 'internal scratch']
  %s0 = inlined_call_operand.vmem [shape: bf16[2,16,128], index: 0, kind: input, shape index: {}]
  %s1 = inlined_call_operand.vmem [shape: bf16[2,16,128], index: 1, kind: input, shape index: {}]
  %s2 = inlined_call_operand.hbm [shape: bf16[1280,128], index: 2, kind: input, shape index: {}]
  %s3 = inlined_call_operand.vmem [shape: f32[1,128], index: 3, kind: input, shape index: {}]
  %s4 = inlined_call_operand.vmem [shape: f32[1,128], index: 4, kind: input, shape index: {}]
  %s5 = inlined_call_operand.vmem [shape: f32[1,128], index: 5, kind: input, shape index: {}]
  %s6 = inlined_call_operand.vmem [shape: bf16[32,128], index: 6, kind: output, shape index: {}]
  %s7 = sld [smem:[#allocation0]]
  $region38: #{_lambda_.8} parent=0
    _
  %s9 = ssub.s32 1, %s7
  %s10 = scalar_select 0, %s9, %s7
  $region1: #{_lambda_.8} parent=0
    #allocation2 [shape = 'u8[327680]{0}', space=vmem, size = 0x50000, scoped, tag = 'input window, operand 2, single buffered']
    #allocation3 [shape = 's32[1]{0}', space=sflag, size = 0x4, scoped, tag = 'scoped memory for _lambda_.8']
    %11 = vsyncpa [#allocation3], 0
    // Predicated region
    $region2: #{_lambda_.8} parent=1 // pred_check
      _
    $region3: #{_lambda_.8} parent=1 // pred_check_branch
      %13 = sbr.rel (0) target = $region5
    $region4: #{_lambda_.8} parent=1 // pred_region
      _
    $region5: #{_lambda_.8} parent=1 // pred_fallthru
      _
    // Predicated region
    $region6: #{_lambda_.8} parent=1 // pred_check
      _
    $region7: #{_lambda_.8} parent=1 // pred_check_branch
      %15 = sbr.rel (0) target = $region9
    $region8: #{_lambda_.8} parent=1 // pred_region
      _
    $region9: #{_lambda_.8} parent=1 // pred_fallthru
      _
    // Predicated region
    $region10: #{_lambda_.8} parent=1 // pred_check
      _
    $region11: #{_lambda_.8} parent=1 // pred_check_branch
      %17 = sbr.rel (0) target = $region13
    $region12: #{_lambda_.8} parent=1 // pred_region
      %19 = vsyncadd [#allocation3], 0
      %s20 = sshll.u32 %s2, 4
      %s21 = int_to_ptr.hbm [resolvable:$true] %s20
      %s22 = sshll.u32 [#allocation2], 4
      %s23 = int_to_ptr.vmem [resolvable:$true] %s22
      %28 = dma.hbm_to_vmem [thread:$0]  %s21, 10240, %s23, [#allocation3], 64, 64, 4
    $region13: #{_lambda_.8} parent=1 // pred_fallthru
      _
    // Predicated region
    $region14: #{_lambda_.8} parent=1 // pred_check
      _
    $region15: #{_lambda_.8} parent=1 // pred_check_branch
      %30 = sbr.rel (0) target = $region17
    $region16: #{_lambda_.8} parent=1 // pred_region
      _
    $region17: #{_lambda_.8} parent=1 // pred_fallthru
      _
    // Predicated region
    $region18: #{_lambda_.8} parent=1 // pred_check
      _
    $region19: #{_lambda_.8} parent=1 // pred_check_branch
      %32 = sbr.rel (0) target = $region21
    $region20: #{_lambda_.8} parent=1 // pred_region
      _
    $region21: #{_lambda_.8} parent=1 // pred_fallthru
      _
    // Predicated region
    $region22: #{_lambda_.8} parent=1 // pred_check
      _
    $region23: #{_lambda_.8} parent=1 // pred_check_branch
      %34 = sbr.rel (0) target = $region25
    $region24: #{_lambda_.8} parent=1 // pred_region
      _
    $region25: #{_lambda_.8} parent=1 // pred_fallthru
      _
    // Predicated region
    $region26: #{_lambda_.8} parent=1 // pred_check
      _
    $region27: #{_lambda_.8} parent=1 // pred_check_branch
      %36 = sbr.rel (0) target = $region29
    $region28: #{_lambda_.8} parent=1 // pred_region
      %38 = dma.done [#allocation3], 10240
    $region29: #{_lambda_.8} parent=1 // pred_fallthru
      _
    %v39 = vld [vmem:[%s0] sm:$0xf]
    %v40 = vld [vmem:[%s0 + $0x4] sm:$0xf]
    %v41 = vld [vmem:[%s0 + $0x8] sm:$0xf]
    %v42 = vld [vmem:[%s0 + $0xc] sm:$0xf]
    %v43 = vunpack.c.l.bf16 %v39
    %v44 = vunpack.c.l.bf16 %v40
    %v45 = vunpack.c.l.bf16 %v41
    %v46 = vunpack.c.l.bf16 %v42
    %v47 = vld [vmem:[%s1] sm:$0xf]
    %v48 = vld [vmem:[%s1 + $0x4] sm:$0xf]
    %v49 = vld [vmem:[%s1 + $0x8] sm:$0xf]
    %v50 = vld [vmem:[%s1 + $0xc] sm:$0xf]
    %v51 = vunpack.c.l.bf16 %v47
    %v52 = vunpack.c.l.bf16 %v48
    %v53 = vunpack.c.l.bf16 %v49
    %v54 = vunpack.c.l.bf16 %v50
    %vm63 = vcmask 1041408
    %v64 = vrot.slane %v43, 6
    %v65 = vrot.slane %v51, 6
    %v66 = vrot.slane %v44, 6
    %v67 = vsel %vm63, %v64, %v66
    %v68 = vrot.slane %v52, 6
    %v69 = vsel %vm63, %v65, %v68
    %v70 = vrot.slane %v45, 6
    %v71 = vrot.slane %v53, 6
    %v72 = vrot.slane %v46, 6
    %v73 = vsel %vm63, %v70, %v72
    %v74 = vrot.slane %v54, 6
    %v75 = vsel %vm63, %v71, %v74
    %v88 = vsel %vm63, 0.0, %v64
    %v89 = vsel %vm63, 0.0, %v65
    %v90 = vsel %vm63, 0.0, %v70
    %v91 = vsel %vm63, 0.0, %v71
    %v92 = vsel %vm63, %v66, 0.0
    %v93 = vsel %vm63, %v68, 0.0
    %v94 = vsel %vm63, %v72, 0.0
    %v95 = vsel %vm63, %v74, 0.0
    %vm104 = vcmask 1046528
    %v105 = vrot.slane %v88, 1
    %v106 = vrot.slane %v67, 1
    %v107 = vsel %vm104, %v105, %v106
    %v108 = vrot.slane %v89, 1
    %v109 = vrot.slane %v69, 1
    %v110 = vsel %vm104, %v108, %v109
    %v111 = vrot.slane %v92, 1
    %v112 = vsel %vm104, %v106, %v111
    %v113 = vrot.slane %v93, 1
    %v114 = vsel %vm104, %v109, %v113
    %v115 = vrot.slane %v90, 1
    %v116 = vrot.slane %v73, 1
    %v117 = vsel %vm104, %v115, %v116
    %v118 = vrot.slane %v91, 1
    %v119 = vrot.slane %v75, 1
    %v120 = vsel %vm104, %v118, %v119
    %v121 = vrot.slane %v94, 1
    %v122 = vsel %vm104, %v116, %v121
    %v123 = vrot.slane %v95, 1
    %v124 = vsel %vm104, %v119, %v123
    %vm133 = vcmask 1045504
    %v134 = vrot.slane %v88, 2
    %v135 = vrot.slane %v67, 2
    %v136 = vsel %vm133, %v134, %v135
    %v137 = vrot.slane %v89, 2
    %v138 = vrot.slane %v69, 2
    %v139 = vsel %vm133, %v137, %v138
    %v140 = vrot.slane %v92, 2
    %v141 = vsel %vm133, %v135, %v140
    %v142 = vrot.slane %v93, 2
    %v143 = vsel %vm133, %v138, %v142
    %v144 = vrot.slane %v90, 2
    %v145 = vrot.slane %v73, 2
    %v146 = vsel %vm133, %v144, %v145
    %v147 = vrot.slane %v91, 2
    %v148 = vrot.slane %v75, 2
    %v149 = vsel %vm133, %v147, %v148
    %v150 = vrot.slane %v94, 2
    %v151 = vsel %vm133, %v145, %v150
    %v152 = vrot.slane %v95, 2
    %v153 = vsel %vm133, %v148, %v152
    %vm162 = vcmask 1044480
    %v163 = vrot.slane %v88, 3
    %v164 = vrot.slane %v67, 3
    %v165 = vsel %vm162, %v163, %v164
    %v166 = vrot.slane %v89, 3
    %v167 = vrot.slane %v69, 3
    %v168 = vsel %vm162, %v166, %v167
    %v169 = vrot.slane %v92, 3
    %v170 = vsel %vm162, %v164, %v169
    %v171 = vrot.slane %v93, 3
    %v172 = vsel %vm162, %v167, %v171
    %v173 = vrot.slane %v90, 3
    %v174 = vrot.slane %v73, 3
    %v175 = vsel %vm162, %v173, %v174
    %v176 = vrot.slane %v91, 3
    %v177 = vrot.slane %v75, 3
    %v178 = vsel %vm162, %v176, %v177
    %v179 = vrot.slane %v94, 3
    %v180 = vsel %vm162, %v174, %v179
    %v181 = vrot.slane %v95, 3
    %v182 = vsel %vm162, %v177, %v181
    %vm191 = vcmask 1043456
    %v192 = vrot.slane %v88, 4
    %v193 = vrot.slane %v67, 4
    %v194 = vsel %vm191, %v192, %v193
    %v195 = vrot.slane %v89, 4
    %v196 = vrot.slane %v69, 4
    %v197 = vsel %vm191, %v195, %v196
    %v198 = vrot.slane %v92, 4
    %v199 = vsel %vm191, %v193, %v198
    %v200 = vrot.slane %v93, 4
    %v201 = vsel %vm191, %v196, %v200
    %v202 = vrot.slane %v90, 4
    %v203 = vrot.slane %v73, 4
    %v204 = vsel %vm191, %v202, %v203
    %v205 = vrot.slane %v91, 4
    %v206 = vrot.slane %v75, 4
    %v207 = vsel %vm191, %v205, %v206
    %v208 = vrot.slane %v94, 4
    %v209 = vsel %vm191, %v203, %v208
    %v210 = vrot.slane %v95, 4
    %v211 = vsel %vm191, %v206, %v210
    %v220 = vpack.c.bf16 %v67, %v88
    %v221 = vpack.c.bf16 %v69, %v89
    %v222 = vpack.c.bf16 %v112, %v107
    %v223 = vpack.c.bf16 %v114, %v110
    %v224 = vpack.c.bf16 %v141, %v136
    %v225 = vpack.c.bf16 %v143, %v139
    %v226 = vpack.c.bf16 %v170, %v165
    %v227 = vpack.c.bf16 %v172, %v168
    %v228 = vpack.c.bf16 %v199, %v194
    %v229 = vpack.c.bf16 %v201, %v197
    %v230 = vpack.c.bf16 %v73, %v90
    %v231 = vpack.c.bf16 %v75, %v91
    %v232 = vpack.c.bf16 %v122, %v117
    %v233 = vpack.c.bf16 %v124, %v120
    %v234 = vpack.c.bf16 %v151, %v146
    %v235 = vpack.c.bf16 %v153, %v149
    %v236 = vpack.c.bf16 %v180, %v175
    %v237 = vpack.c.bf16 %v182, %v178
    %v238 = vpack.c.bf16 %v209, %v204
    %v239 = vpack.c.bf16 %v211, %v207
    %v240 = vld [vmem:[#allocation2] sm:$0xf]
    %v241 = vld [vmem:[#allocation2 + $0x4] sm:$0xf]
    %v242 = vld [vmem:[#allocation2 + $0x8] sm:$0xf]
    %v243 = vld [vmem:[#allocation2 + $0xc] sm:$0xf]
    %v244 = vld [vmem:[#allocation2 + $0x10] sm:$0xf]
    %v245 = vld [vmem:[#allocation2 + $0x14] sm:$0xf]
    %v246 = vld [vmem:[#allocation2 + $0x18] sm:$0xf]
    %v247 = vld [vmem:[#allocation2 + $0x1c] sm:$0xf]
    %v248 = vld [vmem:[#allocation2 + $0x20] sm:$0xf]
    %v249 = vld [vmem:[#allocation2 + $0x24] sm:$0xf]
    %v250 = vld [vmem:[#allocation2 + $0x28] sm:$0xf]
    %v251 = vld [vmem:[#allocation2 + $0x2c] sm:$0xf]
    %v252 = vld [vmem:[#allocation2 + $0x30] sm:$0xf]
    %v253 = vld [vmem:[#allocation2 + $0x34] sm:$0xf]
    %v254 = vld [vmem:[#allocation2 + $0x38] sm:$0xf]
    %v255 = vld [vmem:[#allocation2 + $0x3c] sm:$0xf]
    %v256 = vld [vmem:[#allocation2 + $0x40] sm:$0xf]
    %v257 = vld [vmem:[#allocation2 + $0x44] sm:$0xf]
    %v258 = vld [vmem:[#allocation2 + $0x48] sm:$0xf]
    %v259 = vld [vmem:[#allocation2 + $0x4c] sm:$0xf]
    %v260 = vld [vmem:[#allocation2 + $0x50] sm:$0xf]
    %v261 = vld [vmem:[#allocation2 + $0x54] sm:$0xf]
    %v262 = vld [vmem:[#allocation2 + $0x58] sm:$0xf]
    %v263 = vld [vmem:[#allocation2 + $0x5c] sm:$0xf]
    %v264 = vld [vmem:[#allocation2 + $0x60] sm:$0xf]
    %v265 = vld [vmem:[#allocation2 + $0x64] sm:$0xf]
    %v266 = vld [vmem:[#allocation2 + $0x68] sm:$0xf]
    %v267 = vld [vmem:[#allocation2 + $0x6c] sm:$0xf]
    %v268 = vld [vmem:[#allocation2 + $0x70] sm:$0xf]
    %v269 = vld [vmem:[#allocation2 + $0x74] sm:$0xf]
    %v270 = vld [vmem:[#allocation2 + $0x78] sm:$0xf]
    %v271 = vld [vmem:[#allocation2 + $0x7c] sm:$0xf]
    %v272 = vld [vmem:[#allocation2 + $0x80] sm:$0xf]
    %v273 = vld [vmem:[#allocation2 + $0x84] sm:$0xf]
    %v274 = vld [vmem:[#allocation2 + $0x88] sm:$0xf]
    %v275 = vld [vmem:[#allocation2 + $0x8c] sm:$0xf]
    %v276 = vld [vmem:[#allocation2 + $0x90] sm:$0xf]
    %v277 = vld [vmem:[#allocation2 + $0x94] sm:$0xf]
    %v278 = vld [vmem:[#allocation2 + $0x98] sm:$0xf]
    %v279 = vld [vmem:[#allocation2 + $0x9c] sm:$0xf]
    %v280 = vld [vmem:[#allocation2 + $0xa0] sm:$0xf]
    %v281 = vld [vmem:[#allocation2 + $0xa4] sm:$0xf]
    %v282 = vld [vmem:[#allocation2 + $0xa8] sm:$0xf]
    %v283 = vld [vmem:[#allocation2 + $0xac] sm:$0xf]
    %v284 = vld [vmem:[#allocation2 + $0xb0] sm:$0xf]
    %v285 = vld [vmem:[#allocation2 + $0xb4] sm:$0xf]
    %v286 = vld [vmem:[#allocation2 + $0xb8] sm:$0xf]
    %v287 = vld [vmem:[#allocation2 + $0xbc] sm:$0xf]
    %v288 = vld [vmem:[#allocation2 + $0xc0] sm:$0xf]
    %v289 = vld [vmem:[#allocation2 + $0xc4] sm:$0xf]
    %v290 = vld [vmem:[#allocation2 + $0xc8] sm:$0xf]
    %v291 = vld [vmem:[#allocation2 + $0xcc] sm:$0xf]
    %v292 = vld [vmem:[#allocation2 + $0xd0] sm:$0xf]
    %v293 = vld [vmem:[#allocation2 + $0xd4] sm:$0xf]
    %v294 = vld [vmem:[#allocation2 + $0xd8] sm:$0xf]
    %v295 = vld [vmem:[#allocation2 + $0xdc] sm:$0xf]
    %v296 = vld [vmem:[#allocation2 + $0xe0] sm:$0xf]
    %v297 = vld [vmem:[#allocation2 + $0xe4] sm:$0xf]
    %v298 = vld [vmem:[#allocation2 + $0xe8] sm:$0xf]
    %v299 = vld [vmem:[#allocation2 + $0xec] sm:$0xf]
    %v300 = vld [vmem:[#allocation2 + $0xf0] sm:$0xf]
    %v301 = vld [vmem:[#allocation2 + $0xf4] sm:$0xf]
    %v302 = vld [vmem:[#allocation2 + $0xf8] sm:$0xf]
    %v303 = vld [vmem:[#allocation2 + $0xfc] sm:$0xf]
    %v304 = vld [vmem:[#allocation2 + $0x100] sm:$0xf]
    %v305 = vld [vmem:[#allocation2 + $0x104] sm:$0xf]
    %v306 = vld [vmem:[#allocation2 + $0x108] sm:$0xf]
    %v307 = vld [vmem:[#allocation2 + $0x10c] sm:$0xf]
    %v308 = vld [vmem:[#allocation2 + $0x110] sm:$0xf]
    %v309 = vld [vmem:[#allocation2 + $0x114] sm:$0xf]
    %v310 = vld [vmem:[#allocation2 + $0x118] sm:$0xf]
    %v311 = vld [vmem:[#allocation2 + $0x11c] sm:$0xf]
    %v312 = vld [vmem:[#allocation2 + $0x120] sm:$0xf]
    %v313 = vld [vmem:[#allocation2 + $0x124] sm:$0xf]
    %v314 = vld [vmem:[#allocation2 + $0x128] sm:$0xf]
    %v315 = vld [vmem:[#allocation2 + $0x12c] sm:$0xf]
    %v316 = vld [vmem:[#allocation2 + $0x130] sm:$0xf]
    %v317 = vld [vmem:[#allocation2 + $0x134] sm:$0xf]
    %v318 = vld [vmem:[#allocation2 + $0x138] sm:$0xf]
    %v319 = vld [vmem:[#allocation2 + $0x13c] sm:$0xf]
    %v320 = vld [vmem:[#allocation2 + $0x140] sm:$0xf]
    %v321 = vld [vmem:[#allocation2 + $0x144] sm:$0xf]
    %v322 = vld [vmem:[#allocation2 + $0x148] sm:$0xf]
    %v323 = vld [vmem:[#allocation2 + $0x14c] sm:$0xf]
    %v324 = vld [vmem:[#allocation2 + $0x150] sm:$0xf]
    %v325 = vld [vmem:[#allocation2 + $0x154] sm:$0xf]
    %v326 = vld [vmem:[#allocation2 + $0x158] sm:$0xf]
    %v327 = vld [vmem:[#allocation2 + $0x15c] sm:$0xf]
    %v328 = vld [vmem:[#allocation2 + $0x160] sm:$0xf]
    %v329 = vld [vmem:[#allocation2 + $0x164] sm:$0xf]
    %v330 = vld [vmem:[#allocation2 + $0x168] sm:$0xf]
    %v331 = vld [vmem:[#allocation2 + $0x16c] sm:$0xf]
    %v332 = vld [vmem:[#allocation2 + $0x170] sm:$0xf]
    %v333 = vld [vmem:[#allocation2 + $0x174] sm:$0xf]
    %v334 = vld [vmem:[#allocation2 + $0x178] sm:$0xf]
    %v335 = vld [vmem:[#allocation2 + $0x17c] sm:$0xf]
    %v336 = vld [vmem:[#allocation2 + $0x180] sm:$0xf]
    %v337 = vld [vmem:[#allocation2 + $0x184] sm:$0xf]
    %v338 = vld [vmem:[#allocation2 + $0x188] sm:$0xf]
    %v339 = vld [vmem:[#allocation2 + $0x18c] sm:$0xf]
    %v340 = vld [vmem:[#allocation2 + $0x190] sm:$0xf]
    %v341 = vld [vmem:[#allocation2 + $0x194] sm:$0xf]
    %v342 = vld [vmem:[#allocation2 + $0x198] sm:$0xf]
    %v343 = vld [vmem:[#allocation2 + $0x19c] sm:$0xf]
    %v344 = vld [vmem:[#allocation2 + $0x1a0] sm:$0xf]
    %v345 = vld [vmem:[#allocation2 + $0x1a4] sm:$0xf]
    %v346 = vld [vmem:[#allocation2 + $0x1a8] sm:$0xf]
    %v347 = vld [vmem:[#allocation2 + $0x1ac] sm:$0xf]
    %v348 = vld [vmem:[#allocation2 + $0x1b0] sm:$0xf]
    %v349 = vld [vmem:[#allocation2 + $0x1b4] sm:$0xf]
    %v350 = vld [vmem:[#allocation2 + $0x1b8] sm:$0xf]
    %v351 = vld [vmem:[#allocation2 + $0x1bc] sm:$0xf]
    %v352 = vld [vmem:[#allocation2 + $0x1c0] sm:$0xf]
    %v353 = vld [vmem:[#allocation2 + $0x1c4] sm:$0xf]
    %v354 = vld [vmem:[#allocation2 + $0x1c8] sm:$0xf]
    %v355 = vld [vmem:[#allocation2 + $0x1cc] sm:$0xf]
    %v356 = vld [vmem:[#allocation2 + $0x1d0] sm:$0xf]
    %v357 = vld [vmem:[#allocation2 + $0x1d4] sm:$0xf]
    %v358 = vld [vmem:[#allocation2 + $0x1d8] sm:$0xf]
    %v359 = vld [vmem:[#allocation2 + $0x1dc] sm:$0xf]
    %v360 = vld [vmem:[#allocation2 + $0x1e0] sm:$0xf]
    %v361 = vld [vmem:[#allocation2 + $0x1e4] sm:$0xf]
    %v362 = vld [vmem:[#allocation2 + $0x1e8] sm:$0xf]
    %v363 = vld [vmem:[#allocation2 + $0x1ec] sm:$0xf]
    %v364 = vld [vmem:[#allocation2 + $0x1f0] sm:$0xf]
    %v365 = vld [vmem:[#allocation2 + $0x1f4] sm:$0xf]
    %v366 = vld [vmem:[#allocation2 + $0x1f8] sm:$0xf]
    %v367 = vld [vmem:[#allocation2 + $0x1fc] sm:$0xf]
    %v368 = vld [vmem:[#allocation2 + $0x200] sm:$0xf]
    %v369 = vld [vmem:[#allocation2 + $0x204] sm:$0xf]
    %v370 = vld [vmem:[#allocation2 + $0x208] sm:$0xf]
    %v371 = vld [vmem:[#allocation2 + $0x20c] sm:$0xf]
    %v372 = vld [vmem:[#allocation2 + $0x210] sm:$0xf]
    %v373 = vld [vmem:[#allocation2 + $0x214] sm:$0xf]
    %v374 = vld [vmem:[#allocation2 + $0x218] sm:$0xf]
    %v375 = vld [vmem:[#allocation2 + $0x21c] sm:$0xf]
    %v376 = vld [vmem:[#allocation2 + $0x220] sm:$0xf]
    %v377 = vld [vmem:[#allocation2 + $0x224] sm:$0xf]
    %v378 = vld [vmem:[#allocation2 + $0x228] sm:$0xf]
    %v379 = vld [vmem:[#allocation2 + $0x22c] sm:$0xf]
    %v380 = vld [vmem:[#allocation2 + $0x230] sm:$0xf]
    %v381 = vld [vmem:[#allocation2 + $0x234] sm:$0xf]
    %v382 = vld [vmem:[#allocation2 + $0x238] sm:$0xf]
    %v383 = vld [vmem:[#allocation2 + $0x23c] sm:$0xf]
    %v384 = vld [vmem:[#allocation2 + $0x240] sm:$0xf]
    %v385 = vld [vmem:[#allocation2 + $0x244] sm:$0xf]
    %v386 = vld [vmem:[#allocation2 + $0x248] sm:$0xf]
    %v387 = vld [vmem:[#allocation2 + $0x24c] sm:$0xf]
    %v388 = vld [vmem:[#allocation2 + $0x250] sm:$0xf]
    %v389 = vld [vmem:[#allocation2 + $0x254] sm:$0xf]
    %v390 = vld [vmem:[#allocation2 + $0x258] sm:$0xf]
    %v391 = vld [vmem:[#allocation2 + $0x25c] sm:$0xf]
    %v392 = vld [vmem:[#allocation2 + $0x260] sm:$0xf]
    %v393 = vld [vmem:[#allocation2 + $0x264] sm:$0xf]
    %v394 = vld [vmem:[#allocation2 + $0x268] sm:$0xf]
    %v395 = vld [vmem:[#allocation2 + $0x26c] sm:$0xf]
    %v396 = vld [vmem:[#allocation2 + $0x270] sm:$0xf]
    %v397 = vld [vmem:[#allocation2 + $0x274] sm:$0xf]
    %v398 = vld [vmem:[#allocation2 + $0x278] sm:$0xf]
    %v399 = vld [vmem:[#allocation2 + $0x27c] sm:$0xf]
    %v400 = vld [vmem:[%s3] sm:$0x1]
    %v402 = vperm.slane %v400, 0
    %v564 = vunpack.c.l.b16 %v240
    %v565 = vunpack.c.l.b16 %v241
    %v566 = vunpack.c.l.b16 %v242
    %v567 = vunpack.c.l.b16 %v243
    %v568 = vunpack.c.l.b16 %v244
    %v569 = vunpack.c.l.b16 %v245
    %v570 = vunpack.c.l.b16 %v246
    %v571 = vunpack.c.l.b16 %v247
    %v572 = vunpack.c.l.b16 %v248
    %v573 = vunpack.c.l.b16 %v249
    %v574 = vunpack.c.l.b16 %v250
    %v575 = vunpack.c.l.b16 %v251
    %v576 = vunpack.c.l.b16 %v252
    %v577 = vunpack.c.l.b16 %v253
    %v578 = vunpack.c.l.b16 %v254
    %v579 = vunpack.c.l.b16 %v255
    %v580 = vunpack.c.l.b16 %v256
    %v581 = vunpack.c.l.b16 %v257
    %v582 = vunpack.c.l.b16 %v258
    %v583 = vunpack.c.l.b16 %v259
    %v584 = vunpack.c.l.b16 %v260
    %v585 = vunpack.c.l.b16 %v261
    %v586 = vunpack.c.l.b16 %v262
    %v587 = vunpack.c.l.b16 %v263
    %v588 = vunpack.c.l.b16 %v264
    %v589 = vunpack.c.l.b16 %v265
    %v590 = vunpack.c.l.b16 %v266
    %v591 = vunpack.c.l.b16 %v267
    %v592 = vunpack.c.l.b16 %v268
    %v593 = vunpack.c.l.b16 %v269
    %v594 = vunpack.c.l.b16 %v270
    %v595 = vunpack.c.l.b16 %v271
    %v596 = vunpack.c.l.b16 %v272
    %v597 = vunpack.c.l.b16 %v273
    %v598 = vunpack.c.l.b16 %v274
    %v599 = vunpack.c.l.b16 %v275
    %v600 = vunpack.c.l.b16 %v276
    %v601 = vunpack.c.l.b16 %v277
    %v602 = vunpack.c.l.b16 %v278
    %v603 = vunpack.c.l.b16 %v279
    %v604 = vunpack.c.l.b16 %v280
    %v605 = vunpack.c.l.b16 %v281
    %v606 = vunpack.c.l.b16 %v282
    %v607 = vunpack.c.l.b16 %v283
    %v608 = vunpack.c.l.b16 %v284
    %v609 = vunpack.c.l.b16 %v285
    %v610 = vunpack.c.l.b16 %v286
    %v611 = vunpack.c.l.b16 %v287
    %v612 = vunpack.c.l.b16 %v288
    %v613 = vunpack.c.l.b16 %v289
    %v614 = vunpack.c.l.b16 %v290
    %v615 = vunpack.c.l.b16 %v291
    %v616 = vunpack.c.l.b16 %v292
    %v617 = vunpack.c.l.b16 %v293
    %v618 = vunpack.c.l.b16 %v294
    %v619 = vunpack.c.l.b16 %v295
    %v620 = vunpack.c.l.b16 %v296
    %v621 = vunpack.c.l.b16 %v297
    %v622 = vunpack.c.l.b16 %v298
    %v623 = vunpack.c.l.b16 %v299
    %v624 = vunpack.c.l.b16 %v300
    %v625 = vunpack.c.l.b16 %v301
    %v626 = vunpack.c.l.b16 %v302
    %v627 = vunpack.c.l.b16 %v303
    %v628 = vunpack.c.l.b16 %v304
    %v629 = vunpack.c.l.b16 %v305
    %v630 = vunpack.c.l.b16 %v306
    %v631 = vunpack.c.l.b16 %v307
    %v632 = vunpack.c.l.b16 %v308
    %v633 = vunpack.c.l.b16 %v309
    %v634 = vunpack.c.l.b16 %v310
    %v635 = vunpack.c.l.b16 %v311
    %v636 = vunpack.c.l.b16 %v312
    %v637 = vunpack.c.l.b16 %v313
    %v638 = vunpack.c.l.b16 %v314
    %v639 = vunpack.c.l.b16 %v315
    %v640 = vunpack.c.l.b16 %v316
    %v641 = vunpack.c.l.b16 %v317
    %v642 = vunpack.c.l.b16 %v318
    %v643 = vunpack.c.l.b16 %v319
    %v644 = vunpack.c.l.b16 %v320
    %v645 = vunpack.c.l.b16 %v321
    %v646 = vunpack.c.l.b16 %v322
    %v647 = vunpack.c.l.b16 %v323
    %v648 = vunpack.c.l.b16 %v324
    %v649 = vunpack.c.l.b16 %v325
    %v650 = vunpack.c.l.b16 %v326
    %v651 = vunpack.c.l.b16 %v327
    %v652 = vunpack.c.l.b16 %v328
    %v653 = vunpack.c.l.b16 %v329
    %v654 = vunpack.c.l.b16 %v330
    %v655 = vunpack.c.l.b16 %v331
    %v656 = vunpack.c.l.b16 %v332
    %v657 = vunpack.c.l.b16 %v333
    %v658 = vunpack.c.l.b16 %v334
    %v659 = vunpack.c.l.b16 %v335
    %v660 = vunpack.c.l.b16 %v336
    %v661 = vunpack.c.l.b16 %v337
    %v662 = vunpack.c.l.b16 %v338
    %v663 = vunpack.c.l.b16 %v339
    %v664 = vunpack.c.l.b16 %v340
    %v665 = vunpack.c.l.b16 %v341
    %v666 = vunpack.c.l.b16 %v342
    %v667 = vunpack.c.l.b16 %v343
    %v668 = vunpack.c.l.b16 %v344
    %v669 = vunpack.c.l.b16 %v345
    %v670 = vunpack.c.l.b16 %v346
    %v671 = vunpack.c.l.b16 %v347
    %v672 = vunpack.c.l.b16 %v348
    %v673 = vunpack.c.l.b16 %v349
    %v674 = vunpack.c.l.b16 %v350
    %v675 = vunpack.c.l.b16 %v351
    %v676 = vunpack.c.l.b16 %v352
    %v677 = vunpack.c.l.b16 %v353
    %v678 = vunpack.c.l.b16 %v354
    %v679 = vunpack.c.l.b16 %v355
    %v680 = vunpack.c.l.b16 %v356
    %v681 = vunpack.c.l.b16 %v357
    %v682 = vunpack.c.l.b16 %v358
    %v683 = vunpack.c.l.b16 %v359
    %v684 = vunpack.c.l.b16 %v360
    %v685 = vunpack.c.l.b16 %v361
    %v686 = vunpack.c.l.b16 %v362
    %v687 = vunpack.c.l.b16 %v363
    %v688 = vunpack.c.l.b16 %v364
    %v689 = vunpack.c.l.b16 %v365
    %v690 = vunpack.c.l.b16 %v366
    %v691 = vunpack.c.l.b16 %v367
    %v692 = vunpack.c.l.b16 %v368
    %v693 = vunpack.c.l.b16 %v369
    %v694 = vunpack.c.l.b16 %v370
    %v695 = vunpack.c.l.b16 %v371
    %v696 = vunpack.c.l.b16 %v372
    %v697 = vunpack.c.l.b16 %v373
    %v698 = vunpack.c.l.b16 %v374
    %v699 = vunpack.c.l.b16 %v375
    %v700 = vunpack.c.l.b16 %v376
    %v701 = vunpack.c.l.b16 %v377
    %v702 = vunpack.c.l.b16 %v378
    %v703 = vunpack.c.l.b16 %v379
    %v704 = vunpack.c.l.b16 %v380
    %v705 = vunpack.c.l.b16 %v381
    %v706 = vunpack.c.l.b16 %v382
    %v707 = vunpack.c.l.b16 %v383
    %v708 = vunpack.c.l.b16 %v384
    %v709 = vunpack.c.l.b16 %v385
    %v710 = vunpack.c.l.b16 %v386
    %v711 = vunpack.c.l.b16 %v387
    %v712 = vunpack.c.l.b16 %v388
    %v713 = vunpack.c.l.b16 %v389
    %v714 = vunpack.c.l.b16 %v390
    %v715 = vunpack.c.l.b16 %v391
    %v716 = vunpack.c.l.b16 %v392
    %v717 = vunpack.c.l.b16 %v393
    %v718 = vunpack.c.l.b16 %v394
    %v719 = vunpack.c.l.b16 %v395
    %v720 = vunpack.c.l.b16 %v396
    %v721 = vunpack.c.l.b16 %v397
    %v722 = vunpack.c.l.b16 %v398
    %v723 = vunpack.c.l.b16 %v399
    %v724 = vpack.c.b16 %v565, %v564
    %v725 = vpack.c.b16 %v567, %v566
    %v726 = vpack.c.b16 %v569, %v568
    %v727 = vpack.c.b16 %v571, %v570
    %v728 = vpack.c.b16 %v573, %v572
    %v729 = vpack.c.b16 %v575, %v574
    %v730 = vpack.c.b16 %v577, %v576
    %v731 = vpack.c.b16 %v579, %v578
    %v732 = vpack.c.b16 %v581, %v580
    %v733 = vpack.c.b16 %v583, %v582
    %v734 = vpack.c.b16 %v585, %v584
    %v735 = vpack.c.b16 %v587, %v586
    %v736 = vpack.c.b16 %v589, %v588
    %v737 = vpack.c.b16 %v591, %v590
    %v738 = vpack.c.b16 %v593, %v592
    %v739 = vpack.c.b16 %v595, %v594
    %v740 = vpack.c.b16 %v597, %v596
    %v741 = vpack.c.b16 %v599, %v598
    %v742 = vpack.c.b16 %v601, %v600
    %v743 = vpack.c.b16 %v603, %v602
    %v744 = vpack.c.b16 %v605, %v604
    %v745 = vpack.c.b16 %v607, %v606
    %v746 = vpack.c.b16 %v609, %v608
    %v747 = vpack.c.b16 %v611, %v610
    %v748 = vpack.c.b16 %v613, %v612
    %v749 = vpack.c.b16 %v615, %v614
    %v750 = vpack.c.b16 %v617, %v616
    %v751 = vpack.c.b16 %v619, %v618
    %v752 = vpack.c.b16 %v621, %v620
    %v753 = vpack.c.b16 %v623, %v622
    %v754 = vpack.c.b16 %v625, %v624
    %v755 = vpack.c.b16 %v627, %v626
    %v756 = vpack.c.b16 %v629, %v628
    %v757 = vpack.c.b16 %v631, %v630
    %v758 = vpack.c.b16 %v633, %v632
    %v759 = vpack.c.b16 %v635, %v634
    %v760 = vpack.c.b16 %v637, %v636
    %v761 = vpack.c.b16 %v639, %v638
    %v762 = vpack.c.b16 %v641, %v640
    %v763 = vpack.c.b16 %v643, %v642
    %v764 = vpack.c.b16 %v645, %v644
    %v765 = vpack.c.b16 %v647, %v646
    %v766 = vpack.c.b16 %v649, %v648
    %v767 = vpack.c.b16 %v651, %v650
    %v768 = vpack.c.b16 %v653, %v652
    %v769 = vpack.c.b16 %v655, %v654
    %v770 = vpack.c.b16 %v657, %v656
    %v771 = vpack.c.b16 %v659, %v658
    %v772 = vpack.c.b16 %v661, %v660
    %v773 = vpack.c.b16 %v663, %v662
    %v774 = vpack.c.b16 %v665, %v664
    %v775 = vpack.c.b16 %v667, %v666
    %v776 = vpack.c.b16 %v669, %v668
    %v777 = vpack.c.b16 %v671, %v670
    %v778 = vpack.c.b16 %v673, %v672
    %v779 = vpack.c.b16 %v675, %v674
    %v780 = vpack.c.b16 %v677, %v676
    %v781 = vpack.c.b16 %v679, %v678
    %v782 = vpack.c.b16 %v681, %v680
    %v783 = vpack.c.b16 %v683, %v682
    %v784 = vpack.c.b16 %v685, %v684
    %v785 = vpack.c.b16 %v687, %v686
    %v786 = vpack.c.b16 %v689, %v688
    %v787 = vpack.c.b16 %v691, %v690
    %v788 = vpack.c.b16 %v693, %v692
    %v789 = vpack.c.b16 %v695, %v694
    %v790 = vpack.c.b16 %v697, %v696
    %v791 = vpack.c.b16 %v699, %v698
    %v792 = vpack.c.b16 %v701, %v700
    %v793 = vpack.c.b16 %v703, %v702
    %v794 = vpack.c.b16 %v705, %v704
    %v795 = vpack.c.b16 %v707, %v706
    %v796 = vpack.c.b16 %v709, %v708
    %v797 = vpack.c.b16 %v711, %v710
    %v798 = vpack.c.b16 %v713, %v712
    %v799 = vpack.c.b16 %v715, %v714
    %v800 = vpack.c.b16 %v717, %v716
    %v801 = vpack.c.b16 %v719, %v718
    %v802 = vpack.c.b16 %v721, %v720
    %v803 = vpack.c.b16 %v723, %v722
    %884 = vmatpush.bf16.msra.mxu0 %v731
    %885 = vmatpush.bf16.msra.mxu0 %v730
    %886 = vmatpush.bf16.msra.mxu0 %v729
    %887 = vmatpush.bf16.msra.mxu0 %v728
    %888 = vmatpush.bf16.msra.mxu0 %v727
    %889 = vmatpush.bf16.msra.mxu0 %v726
    %890 = vmatpush.bf16.msra.mxu0 %v725
    %891 = vmatpush.bf16.msra.mxu0 %v724
    %892 = vmatmul.bf16.gmra.mxu0 %v220
    %v893 = vpop.f32.mrf.mxu0
    %v894 = vadd.f32 %v402, %v893
    %v895 = vpop.f32.mrf.mxu0
    %v896 = vadd.f32 %v402, %v895
    %897 = vmatmul.bf16.gmra.mxu0 %v230
    %v898 = vpop.f32.mrf.mxu0
    %v899 = vadd.f32 %v402, %v898
    %v900 = vpop.f32.mrf.mxu0
    %v901 = vadd.f32 %v402, %v900
    %902 = vdwg.mxu0
    %903 = vmatpush.bf16.msra.mxu0 %v739
    %904 = vmatpush.bf16.msra.mxu0 %v738
    %905 = vmatpush.bf16.msra.mxu0 %v737
    %906 = vmatpush.bf16.msra.mxu0 %v736
    %907 = vmatpush.bf16.msra.mxu0 %v735
    %908 = vmatpush.bf16.msra.mxu0 %v734
    %909 = vmatpush.bf16.msra.mxu0 %v733
    %910 = vmatpush.bf16.msra.mxu0 %v732
    %911 = vmatmul.bf16.gmra.mxu0 %v221
    %v912 = vpop.f32.mrf.mxu0
    %v913 = vadd.f32 %v894, %v912
    %v914 = vpop.f32.mrf.mxu0
    %v915 = vadd.f32 %v896, %v914
    %916 = vmatmul.bf16.gmra.mxu0 %v231
    %v917 = vpop.f32.mrf.mxu0
    %v918 = vadd.f32 %v899, %v917
    %v919 = vpop.f32.mrf.mxu0
    %v920 = vadd.f32 %v901, %v919
    %921 = vdwg.mxu0
    %922 = vmatpush.bf16.msra.mxu0 %v747
    %923 = vmatpush.bf16.msra.mxu0 %v746
    %924 = vmatpush.bf16.msra.mxu0 %v745
    %925 = vmatpush.bf16.msra.mxu0 %v744
    %926 = vmatpush.bf16.msra.mxu0 %v743
    %927 = vmatpush.bf16.msra.mxu0 %v742
    %928 = vmatpush.bf16.msra.mxu0 %v741
    %929 = vmatpush.bf16.msra.mxu0 %v740
    %930 = vmatmul.bf16.gmra.mxu0 %v222
    %v931 = vpop.f32.mrf.mxu0
    %v932 = vadd.f32 %v913, %v931
    %v933 = vpop.f32.mrf.mxu0
    %v934 = vadd.f32 %v915, %v933
    %935 = vmatmul.bf16.gmra.mxu0 %v232
    %v936 = vpop.f32.mrf.mxu0
    %v937 = vadd.f32 %v918, %v936
    %v938 = vpop.f32.mrf.mxu0
    %v939 = vadd.f32 %v920, %v938
    %940 = vdwg.mxu0
    %941 = vmatpush.bf16.msra.mxu0 %v755
    %942 = vmatpush.bf16.msra.mxu0 %v754
    %943 = vmatpush.bf16.msra.mxu0 %v753
    %944 = vmatpush.bf16.msra.mxu0 %v752
    %945 = vmatpush.bf16.msra.mxu0 %v751
    %946 = vmatpush.bf16.msra.mxu0 %v750
    %947 = vmatpush.bf16.msra.mxu0 %v749
    %948 = vmatpush.bf16.msra.mxu0 %v748
    %949 = vmatmul.bf16.gmra.mxu0 %v223
    %v950 = vpop.f32.mrf.mxu0
    %v951 = vadd.f32 %v932, %v950
    %v952 = vpop.f32.mrf.mxu0
    %v953 = vadd.f32 %v934, %v952
    %954 = vmatmul.bf16.gmra.mxu0 %v233
    %v955 = vpop.f32.mrf.mxu0
    %v956 = vadd.f32 %v937, %v955
    %v957 = vpop.f32.mrf.mxu0
    %v958 = vadd.f32 %v939, %v957
    %959 = vdwg.mxu0
    %960 = vmatpush.bf16.msra.mxu0 %v763
    %961 = vmatpush.bf16.msra.mxu0 %v762
    %962 = vmatpush.bf16.msra.mxu0 %v761
    %963 = vmatpush.bf16.msra.mxu0 %v760
    %964 = vmatpush.bf16.msra.mxu0 %v759
    %965 = vmatpush.bf16.msra.mxu0 %v758
    %966 = vmatpush.bf16.msra.mxu0 %v757
    %967 = vmatpush.bf16.msra.mxu0 %v756
    %968 = vmatmul.bf16.gmra.mxu0 %v224
    %v969 = vpop.f32.mrf.mxu0
    %v970 = vadd.f32 %v951, %v969
    %v971 = vpop.f32.mrf.mxu0
    %v972 = vadd.f32 %v953, %v971
    %973 = vmatmul.bf16.gmra.mxu0 %v234
    %v974 = vpop.f32.mrf.mxu0
    %v975 = vadd.f32 %v956, %v974
    %v976 = vpop.f32.mrf.mxu0
    %v977 = vadd.f32 %v958, %v976
    %978 = vdwg.mxu0
    %979 = vmatpush.bf16.msra.mxu0 %v771
    %980 = vmatpush.bf16.msra.mxu0 %v770
    %981 = vmatpush.bf16.msra.mxu0 %v769
    %982 = vmatpush.bf16.msra.mxu0 %v768
    %983 = vmatpush.bf16.msra.mxu0 %v767
    %984 = vmatpush.bf16.msra.mxu0 %v766
    %985 = vmatpush.bf16.msra.mxu0 %v765
    %986 = vmatpush.bf16.msra.mxu0 %v764
    %987 = vmatmul.bf16.gmra.mxu0 %v225
    %v988 = vpop.f32.mrf.mxu0
    %v989 = vadd.f32 %v970, %v988
    %v990 = vpop.f32.mrf.mxu0
    %v991 = vadd.f32 %v972, %v990
    %992 = vmatmul.bf16.gmra.mxu0 %v235
    %v993 = vpop.f32.mrf.mxu0
    %v994 = vadd.f32 %v975, %v993
    %v995 = vpop.f32.mrf.mxu0
    %v996 = vadd.f32 %v977, %v995
    %997 = vdwg.mxu0
    %998 = vmatpush.bf16.msra.mxu0 %v779
    %999 = vmatpush.bf16.msra.mxu0 %v778
    %1000 = vmatpush.bf16.msra.mxu0 %v777
    %1001 = vmatpush.bf16.msra.mxu0 %v776
    %1002 = vmatpush.bf16.msra.mxu0 %v775
    %1003 = vmatpush.bf16.msra.mxu0 %v774
    %1004 = vmatpush.bf16.msra.mxu0 %v773
    %1005 = vmatpush.bf16.msra.mxu0 %v772
    %1006 = vmatmul.bf16.gmra.mxu0 %v226
    %v1007 = vpop.f32.mrf.mxu0
    %v1008 = vadd.f32 %v989, %v1007
    %v1009 = vpop.f32.mrf.mxu0
    %v1010 = vadd.f32 %v991, %v1009
    %1011 = vmatmul.bf16.gmra.mxu0 %v236
    %v1012 = vpop.f32.mrf.mxu0
    %v1013 = vadd.f32 %v994, %v1012
    %v1014 = vpop.f32.mrf.mxu0
    %v1015 = vadd.f32 %v996, %v1014
    %1016 = vdwg.mxu0
    %1017 = vmatpush.bf16.msra.mxu0 %v787
    %1018 = vmatpush.bf16.msra.mxu0 %v786
    %1019 = vmatpush.bf16.msra.mxu0 %v785
    %1020 = vmatpush.bf16.msra.mxu0 %v784
    %1021 = vmatpush.bf16.msra.mxu0 %v783
    %1022 = vmatpush.bf16.msra.mxu0 %v782
    %1023 = vmatpush.bf16.msra.mxu0 %v781
    %1024 = vmatpush.bf16.msra.mxu0 %v780
    %1025 = vmatmul.bf16.gmra.mxu0 %v227
    %v1026 = vpop.f32.mrf.mxu0
    %v1027 = vadd.f32 %v1008, %v1026
    %v1028 = vpop.f32.mrf.mxu0
    %v1029 = vadd.f32 %v1010, %v1028
    %1030 = vmatmul.bf16.gmra.mxu0 %v237
    %v1031 = vpop.f32.mrf.mxu0
    %v1032 = vadd.f32 %v1013, %v1031
    %v1033 = vpop.f32.mrf.mxu0
    %v1034 = vadd.f32 %v1015, %v1033
    %1035 = vdwg.mxu0
    %1036 = vmatpush.bf16.msra.mxu0 %v795
    %1037 = vmatpush.bf16.msra.mxu0 %v794
    %1038 = vmatpush.bf16.msra.mxu0 %v793
    %1039 = vmatpush.bf16.msra.mxu0 %v792
    %1040 = vmatpush.bf16.msra.mxu0 %v791
    %1041 = vmatpush.bf16.msra.mxu0 %v790
    %1042 = vmatpush.bf16.msra.mxu0 %v789
    %1043 = vmatpush.bf16.msra.mxu0 %v788
    %1044 = vmatmul.bf16.gmra.mxu0 %v228
    %v1045 = vpop.f32.mrf.mxu0
    %v1046 = vadd.f32 %v1027, %v1045
    %v1047 = vpop.f32.mrf.mxu0
    %v1048 = vadd.f32 %v1029, %v1047
    %1049 = vmatmul.bf16.gmra.mxu0 %v238
    %v1050 = vpop.f32.mrf.mxu0
    %v1051 = vadd.f32 %v1032, %v1050
    %v1052 = vpop.f32.mrf.mxu0
    %v1053 = vadd.f32 %v1034, %v1052
    %1054 = vdwg.mxu0
    %1055 = vmatpush.bf16.msra.mxu0 %v803
    %1056 = vmatpush.bf16.msra.mxu0 %v802
    %1057 = vmatpush.bf16.msra.mxu0 %v801
    %1058 = vmatpush.bf16.msra.mxu0 %v800
    %1059 = vmatpush.bf16.msra.mxu0 %v799
    %1060 = vmatpush.bf16.msra.mxu0 %v798
    %1061 = vmatpush.bf16.msra.mxu0 %v797
    %1062 = vmatpush.bf16.msra.mxu0 %v796
    %1063 = vmatmul.bf16.gmra.mxu0 %v229
    %v1064 = vpop.f32.mrf.mxu0
    %v1065 = vadd.f32 %v1046, %v1064
    %v1066 = vpop.f32.mrf.mxu0
    %v1067 = vadd.f32 %v1048, %v1066
    %1068 = vmatmul.bf16.gmra.mxu0 %v239
    %v1069 = vpop.f32.mrf.mxu0
    %v1070 = vadd.f32 %v1051, %v1069
    %v1071 = vpop.f32.mrf.mxu0
    %v1072 = vadd.f32 %v1053, %v1071
    %1073 = vdwg.mxu0
    %v1074 = vadd.f32 %v1065, %v1067
    %v1075 = vadd.f32 %v1074, %v1070
    %v1076 = vadd.f32 %v1075, %v1072
    %v1077 = vrot.slane %v1076, 4
    %v1078 = vadd.f32 %v1076, %v1077
    %v1079 = vrot.slane %v1078, 2
    %v1080 = vadd.f32 %v1078, %v1079
    %v1081 = vrot.slane %v1080, 1
    %v1082 = vadd.f32 %v1080, %v1081
    %v1083 = vrcp.pop 32.0
    %v1084 = vmul.f32 32.0, %v1083
    %v1085 = vsub.f32 1.0, %v1084
    %v1086 = vmul.f32 %v1083, %v1085
    %v1087 = vadd.f32 %v1083, %v1086
    %vm1088 = vweird.f32 %v1083
    %v1089 = vsel %vm1088, %v1083, %v1087
    %v1090 = vmul.f32 %v1082, %v1089
    %v1091 = vsub.f32 %v1065, %v1090
    %v1092 = vsub.f32 %v1067, %v1090
    %v1093 = vsub.f32 %v1070, %v1090
    %v1094 = vsub.f32 %v1072, %v1090
    %v1095 = vmul.f32 %v1091, %v1091
    %v1096 = vmul.f32 %v1092, %v1092
    %v1097 = vmul.f32 %v1093, %v1093
    %v1098 = vmul.f32 %v1094, %v1094
    %v1099 = vadd.f32 %v1095, %v1096
    %v1100 = vadd.f32 %v1099, %v1097
    %v1101 = vadd.f32 %v1100, %v1098
    %v1102 = vrot.slane %v1101, 4
    %v1103 = vadd.f32 %v1101, %v1102
    %v1104 = vrot.slane %v1103, 2
    %v1105 = vadd.f32 %v1103, %v1104
    %v1106 = vrot.slane %v1105, 1
    %v1107 = vadd.f32 %v1105, %v1106
    %v1108 = vmul.f32 %v1107, %v1089
    %v1109 = vld [vmem:[%s4] sm:$0x1]
    %v1110 = vadd.f32 %v1108, 1e-05
    %v1111 = vrsqrt.pop %v1110
    %v1112 = vmul.f32 %v1111, %v1110
    %v1113 = vmul.f32 %v1112, %v1111
    %v1114 = vmul.f32 0.5, %v1113
    %v1115 = vsub.f32 1.5, %v1114
    %v1116 = vmul.f32 %v1111, %v1115
    %vm1117 = vweird.f32 %v1110
    %vm1118 = vweird.f32 %v1111
    %vm1119 = vmor %vm1117, %vm1118
    %v1120 = vsel %vm1119, %v1111, %v1116
    %v1121 = vmul.f32 %v1109, %v1120
    %v1122 = vld [vmem:[%s5] sm:$0x1]
    %v1123 = vmul.f32 %v1090, %v1121
    %v1124 = vsub.f32 %v1122, %v1123
    %v1126 = vperm.slane %v1121, 0
    %v1128 = vmul.f32 %v1065, %v1126
    %v1129 = vmul.f32 %v1067, %v1126
    %v1130 = vmul.f32 %v1070, %v1126
    %v1131 = vmul.f32 %v1072, %v1126
    %v1133 = vperm.slane %v1124, 0
    %v1135 = vadd.f32 %v1128, %v1133
    %v1136 = vadd.f32 %v1129, %v1133
    %v1137 = vadd.f32 %v1130, %v1133
    %v1138 = vadd.f32 %v1131, %v1133
    %v1139 = vmax.f32 %v1135, 0.0
    %v1140 = vmax.f32 %v1136, 0.0
    %v1141 = vmax.f32 %v1137, 0.0
    %v1142 = vmax.f32 %v1138, 0.0
    %v1143 = vpack.c.bf16 %v1139, %v1139
    %v1144 = vpack.c.bf16 %v1140, %v1140
    %v1145 = vpack.c.bf16 %v1141, %v1141
    %v1146 = vpack.c.bf16 %v1142, %v1142
    %1147 = vst [vmem:[%s6] sm:$0xf] %v1143
    %1148 = vst [vmem:[%s6 + $0x4] sm:$0xf] %v1144
    %1149 = vst [vmem:[%s6 + $0x8] sm:$0xf] %v1145
    %1150 = vst [vmem:[%s6 + $0xc] sm:$0xf] %v1146
    // Predicated region
    $region30: #{_lambda_.8} parent=1 // pred_check
      _
    $region31: #{_lambda_.8} parent=1 // pred_check_branch
      %1152 = sbr.rel (0) target = $region33
    $region32: #{_lambda_.8} parent=1 // pred_region
      _
    $region33: #{_lambda_.8} parent=1 // pred_fallthru
      _
    // Predicated region
    $region34: #{_lambda_.8} parent=1 // pred_check
      _
    $region35: #{_lambda_.8} parent=1 // pred_check_branch
      %1154 = sbr.rel (0) target = $region37
    $region36: #{_lambda_.8} parent=1 // pred_region
      _
    $region37: #{_lambda_.8} parent=1 // pred_fallthru
      _
    %1155 = vsyncpa [#allocation3], 1

// kernel: _lambda_.11
$region0: #{_lambda_.11}
  #allocation0 [shape = 'u32[]', space=smem, size = 0x4, offset = 0x4, fixed_abs, tag = 'smem constant byte address 0x4 - core index']
  #allocation1 [shape = 'u32[72,128]{1,0:T(1,128)}', space=vmem, size = 0x9000, scoped, tag = 'internal scratch']
  %s0 = inlined_call_operand.vmem [shape: bf16[2,32,128], index: 0, kind: input, shape index: {}]
  %s1 = inlined_call_operand.vmem [shape: f32[4,32,1], index: 1, kind: input, shape index: {}]
  %s2 = inlined_call_operand.vmem [shape: bf16[2,32,128], index: 2, kind: output, shape index: {0}]
  %s3 = inlined_call_operand.vmem [shape: bf16[2,32,128], index: 3, kind: output, shape index: {1}]
  %4 = xla_tuple %s2, %s3
  %s5 = sld [smem:[#allocation0]]
  $region26: #{_lambda_.11} parent=0
    _
  %s7 = ssub.s32 1, %s5
  %s8 = scalar_select 0, %s7, %s5
  // Predicated region
  $region2: #{_lambda_.11} parent=0 // pred_check
    _
  $region3: #{_lambda_.11} parent=0 // pred_check_branch
    %10 = sbr.rel (0) target = $region5
  $region4: #{_lambda_.11} parent=0 // pred_region
    _
  $region5: #{_lambda_.11} parent=0 // pred_fallthru
    _
  // Predicated region
  $region6: #{_lambda_.11} parent=0 // pred_check
    _
  $region7: #{_lambda_.11} parent=0 // pred_check_branch
    %12 = sbr.rel (0) target = $region9
  $region8: #{_lambda_.11} parent=0 // pred_region
    _
  $region9: #{_lambda_.11} parent=0 // pred_fallthru
    _
  %v13 = vld [vmem:[%s0] sm:$0xf]
  %v14 = vld [vmem:[%s0 + $0x4] sm:$0xf]
  %v15 = vld [vmem:[%s0 + $0x8] sm:$0xf]
  %v16 = vld [vmem:[%s0 + $0xc] sm:$0xf]
  %v17 = vld [vmem:[%s0 + $0x10] sm:$0xf]
  %v18 = vld [vmem:[%s0 + $0x14] sm:$0xf]
  %v19 = vld [vmem:[%s0 + $0x18] sm:$0xf]
  %v20 = vld [vmem:[%s0 + $0x1c] sm:$0xf]
  %v21 = vunpack.c.l.bf16 %v13
  %v22 = vunpack.c.l.bf16 %v14
  %v23 = vunpack.c.l.bf16 %v15
  %v24 = vunpack.c.l.bf16 %v16
  %v25 = vunpack.c.l.bf16 %v17
  %v26 = vunpack.c.l.bf16 %v18
  %v27 = vunpack.c.l.bf16 %v19
  %v28 = vunpack.c.l.bf16 %v20
  %vm37 = vcmask 1040384
  %v38 = vrot.slane %v21, 7
  %v39 = vrot.slane %v22, 7
  %v40 = vsel %vm37, %v38, %v39
  %v41 = vrot.slane %v23, 7
  %v42 = vsel %vm37, %v39, %v41
  %v43 = vrot.slane %v24, 7
  %v44 = vsel %vm37, %v41, %v43
  %v45 = vrot.slane %v25, 7
  %v46 = vrot.slane %v26, 7
  %v47 = vsel %vm37, %v45, %v46
  %v48 = vrot.slane %v27, 7
  %v49 = vsel %vm37, %v46, %v48
  %v50 = vrot.slane %v28, 7
  %v51 = vsel %vm37, %v48, %v50
  %v60 = vsel %vm37, %v21, %v38
  %v61 = vsel %vm37, %v25, %v45
  %vm62 = vcmask 1046528
  %v63 = vrot.slane %v21, 1
  %v64 = vrot.slane %v22, 1
  %v65 = vsel %vm62, %v63, %v64
  %v66 = vrot.slane %v23, 1
  %v67 = vsel %vm62, %v64, %v66
  %v68 = vrot.slane %v24, 1
  %v69 = vsel %vm62, %v66, %v68
  %v70 = vrot.slane %v25, 1
  %v71 = vrot.slane %v26, 1
  %v72 = vsel %vm62, %v70, %v71
  %v73 = vrot.slane %v27, 1
  %v74 = vsel %vm62, %v71, %v73
  %v75 = vrot.slane %v28, 1
  %v76 = vsel %vm62, %v73, %v75
  %v85 = vsel %vm62, %v68, %v24
  %v86 = vsel %vm62, %v75, %v28
  %v87 = vld [vmem:[%s1] sm:$0xff]
  %v88 = vld [vmem:[%s1 + $0x8] sm:$0xff]
  %v89 = vld [vmem:[%s1 + $0x10] sm:$0xff]
  %v90 = vld [vmem:[%s1 + $0x18] sm:$0xff]
  %92 = vset.pattern.permute.xlu0 0
  %93 = vperm.xlu0 %92, %v87
  %v94 = vpop.permute.xlu0 %93
  %97 = vset.pattern.permute.xlu0 0
  %98 = vperm.xlu0 %97, %v88
  %v99 = vpop.permute.xlu0 %98
  %102 = vset.pattern.permute.xlu0 0
  %103 = vperm.xlu0 %102, %v89
  %v104 = vpop.permute.xlu0 %103
  %107 = vset.pattern.permute.xlu0 0
  %108 = vperm.xlu0 %107, %v90
  %v109 = vpop.permute.xlu0 %108
  %v111 = vmul.f32 %v94, %v60
  %v112 = vmul.f32 %v99, %v40
  %v113 = vmul.f32 %v104, %v42
  %v114 = vmul.f32 %v109, %v44
  %v115 = vmul.f32 %v94, %v61
  %v116 = vmul.f32 %v99, %v47
  %v117 = vmul.f32 %v104, %v49
  %v118 = vmul.f32 %v109, %v51
  %s119 = scalar_lea.vmem %s1, 32
  %v120 = vld [vmem:[%s119] sm:$0xff]
  %v121 = vld [vmem:[%s119 + $0x8] sm:$0xff]
  %v122 = vld [vmem:[%s119 + $0x10] sm:$0xff]
  %v123 = vld [vmem:[%s119 + $0x18] sm:$0xff]
  %125 = vset.pattern.permute.xlu0 0
  %126 = vperm.xlu0 %125, %v120
  %v127 = vpop.permute.xlu0 %126
  %130 = vset.pattern.permute.xlu0 0
  %131 = vperm.xlu0 %130, %v121
  %v132 = vpop.permute.xlu0 %131
  %135 = vset.pattern.permute.xlu0 0
  %136 = vperm.xlu0 %135, %v122
  %v137 = vpop.permute.xlu0 %136
  %140 = vset.pattern.permute.xlu0 0
  %141 = vperm.xlu0 %140, %v123
  %v142 = vpop.permute.xlu0 %141
  %v144 = vmul.f32 %v127, %v21
  %v145 = vmul.f32 %v132, %v22
  %v146 = vmul.f32 %v137, %v23
  %v147 = vmul.f32 %v142, %v24
  %v148 = vmul.f32 %v127, %v25
  %v149 = vmul.f32 %v132, %v26
  %v150 = vmul.f32 %v137, %v27
  %v151 = vmul.f32 %v142, %v28
  %v152 = vadd.f32 %v111, %v144
  %v153 = vadd.f32 %v112, %v145
  %v154 = vadd.f32 %v113, %v146
  %v155 = vadd.f32 %v114, %v147
  %v156 = vadd.f32 %v115, %v148
  %v157 = vadd.f32 %v116, %v149
  %v158 = vadd.f32 %v117, %v150
  %v159 = vadd.f32 %v118, %v151
  %s160 = scalar_lea.vmem %s1, 64
  %v161 = vld [vmem:[%s160] sm:$0xff]
  %v162 = vld [vmem:[%s160 + $0x8] sm:$0xff]
  %v163 = vld [vmem:[%s160 + $0x10] sm:$0xff]
  %v164 = vld [vmem:[%s160 + $0x18] sm:$0xff]
  %166 = vset.pattern.permute.xlu0 0
  %167 = vperm.xlu0 %166, %v161
  %v168 = vpop.permute.xlu0 %167
  %171 = vset.pattern.permute.xlu0 0
  %172 = vperm.xlu0 %171, %v162
  %v173 = vpop.permute.xlu0 %172
  %176 = vset.pattern.permute.xlu0 0
  %177 = vperm.xlu0 %176, %v163
  %v178 = vpop.permute.xlu0 %177
  %181 = vset.pattern.permute.xlu0 0
  %182 = vperm.xlu0 %181, %v164
  %v183 = vpop.permute.xlu0 %182
  %v185 = vmul.f32 %v168, %v21
  %v186 = vmul.f32 %v173, %v22
  %v187 = vmul.f32 %v178, %v23
  %v188 = vmul.f32 %v183, %v24
  %v189 = vmul.f32 %v168, %v25
  %v190 = vmul.f32 %v173, %v26
  %v191 = vmul.f32 %v178, %v27
  %v192 = vmul.f32 %v183, %v28
  %s193 = scalar_lea.vmem %s1, 96
  %v194 = vld [vmem:[%s193] sm:$0xff]
  %v195 = vld [vmem:[%s193 + $0x8] sm:$0xff]
  %v196 = vld [vmem:[%s193 + $0x10] sm:$0xff]
  %v197 = vld [vmem:[%s193 + $0x18] sm:$0xff]
  %199 = vset.pattern.permute.xlu0 0
  %200 = vperm.xlu0 %199, %v194
  %v201 = vpop.permute.xlu0 %200
  %204 = vset.pattern.permute.xlu0 0
  %205 = vperm.xlu0 %204, %v195
  %v206 = vpop.permute.xlu0 %205
  %209 = vset.pattern.permute.xlu0 0
  %210 = vperm.xlu0 %209, %v196
  %v211 = vpop.permute.xlu0 %210
  %214 = vset.pattern.permute.xlu0 0
  %215 = vperm.xlu0 %214, %v197
  %v216 = vpop.permute.xlu0 %215
  %v218 = vmul.f32 %v201, %v65
  %v219 = vmul.f32 %v206, %v67
  %v220 = vmul.f32 %v211, %v69
  %v221 = vmul.f32 %v216, %v85
  %v222 = vmul.f32 %v201, %v72
  %v223 = vmul.f32 %v206, %v74
  %v224 = vmul.f32 %v211, %v76
  %v225 = vmul.f32 %v216, %v86
  %v226 = vadd.f32 %v185, %v218
  %v227 = vadd.f32 %v186, %v219
  %v228 = vadd.f32 %v187, %v220
  %v229 = vadd.f32 %v188, %v221
  %v230 = vadd.f32 %v189, %v222
  %v231 = vadd.f32 %v190, %v223
  %v232 = vadd.f32 %v191, %v224
  %v233 = vadd.f32 %v192, %v225
  %v234 = vpack.c.bf16 %v152, %v152
  %v235 = vpack.c.bf16 %v153, %v153
  %v236 = vpack.c.bf16 %v154, %v154
  %v237 = vpack.c.bf16 %v155, %v155
  %v238 = vpack.c.bf16 %v156, %v156
  %v239 = vpack.c.bf16 %v157, %v157
  %v240 = vpack.c.bf16 %v158, %v158
  %v241 = vpack.c.bf16 %v159, %v159
  %242 = vst [vmem:[%s2] sm:$0xf] %v234
  %243 = vst [vmem:[%s2 + $0x4] sm:$0xf] %v235
  %244 = vst [vmem:[%s2 + $0x8] sm:$0xf] %v236
  %245 = vst [vmem:[%s2 + $0xc] sm:$0xf] %v237
  %246 = vst [vmem:[%s2 + $0x10] sm:$0xf] %v238
  %247 = vst [vmem:[%s2 + $0x14] sm:$0xf] %v239
  %248 = vst [vmem:[%s2 + $0x18] sm:$0xf] %v240
  %249 = vst [vmem:[%s2 + $0x1c] sm:$0xf] %v241
  %v250 = vpack.c.bf16 %v226, %v226
  %v251 = vpack.c.bf16 %v227, %v227
  %v252 = vpack.c.bf16 %v228, %v228
  %v253 = vpack.c.bf16 %v229, %v229
  %v254 = vpack.c.bf16 %v230, %v230
  %v255 = vpack.c.bf16 %v231, %v231
  %v256 = vpack.c.bf16 %v232, %v232
  %v257 = vpack.c.bf16 %v233, %v233
  %258 = vst [vmem:[%s3] sm:$0xf] %v250
  %259 = vst [vmem:[%s3 + $0x4] sm:$0xf] %v251
  %260 = vst [vmem:[%s3 + $0x8] sm:$0xf] %v252
  %261 = vst [vmem:[%s3 + $0xc] sm:$0xf] %v253
  %262 = vst [vmem:[%s3 + $0x10] sm:$0xf] %v254
  %263 = vst [vmem:[%s3 + $0x14] sm:$0xf] %v255
  %264 = vst [vmem:[%s3 + $0x18] sm:$0xf] %v256
  %265 = vst [vmem:[%s3 + $0x1c] sm:$0xf] %v257
  // Predicated region
  $region10: #{_lambda_.11} parent=0 // pred_check
    _
  $region11: #{_lambda_.11} parent=0 // pred_check_branch
    %267 = sbr.rel (0) target = $region13
  $region12: #{_lambda_.11} parent=0 // pred_region
    _
  $region13: #{_lambda_.11} parent=0 // pred_fallthru
    _
  // Predicated region
  $region14: #{_lambda_.11} parent=0 // pred_check
    _
  $region15: #{_lambda_.11} parent=0 // pred_check_branch
    %269 = sbr.rel (0) target = $region17
  $region16: #{_lambda_.11} parent=0 // pred_region
    _
  $region17: #{_lambda_.11} parent=0 // pred_fallthru
    _
  // Predicated region
  $region18: #{_lambda_.11} parent=0 // pred_check
    _
  $region19: #{_lambda_.11} parent=0 // pred_check_branch
    %271 = sbr.rel (0) target = $region21
  $region20: #{_lambda_.11} parent=0 // pred_region
    _
  $region21: #{_lambda_.11} parent=0 // pred_fallthru
    _
  // Predicated region
  $region22: #{_lambda_.11} parent=0 // pred_check
    _
  $region23: #{_lambda_.11} parent=0 // pred_check_branch
    %273 = sbr.rel (0) target = $region25
  $region24: #{_lambda_.11} parent=0 // pred_region
    _
  $region25: #{_lambda_.11} parent=0 // pred_fallthru
    _

// kernel: _lambda_.10
$region0: #{_lambda_.10}
  #allocation0 [shape = 'u32[]', space=smem, size = 0x4, offset = 0x4, fixed_abs, tag = 'smem constant byte address 0x4 - core index']
  #allocation1 [shape = 'u32[72,128]{1,0:T(1,128)}', space=vmem, size = 0x9000, scoped, tag = 'internal scratch']
  %s0 = inlined_call_operand.vmem [shape: bf16[2,32,128], index: 0, kind: input, shape index: {}]
  %s1 = inlined_call_operand.vmem [shape: bf16[2,32,128], index: 1, kind: input, shape index: {}]
  %s2 = inlined_call_operand.vmem [shape: bf16[1280,128], index: 2, kind: input, shape index: {}]
  %s3 = inlined_call_operand.vmem [shape: f32[1,128], index: 3, kind: input, shape index: {}]
  %s4 = inlined_call_operand.vmem [shape: f32[1,128], index: 4, kind: input, shape index: {}]
  %s5 = inlined_call_operand.vmem [shape: f32[1,128], index: 5, kind: input, shape index: {}]
  %s6 = inlined_call_operand.vmem [shape: bf16[64,128], index: 6, kind: output, shape index: {}]
  %s7 = sld [smem:[#allocation0]]
  $region34: #{_lambda_.10} parent=0
    _
  %s9 = ssub.s32 1, %s7
  %s10 = scalar_select 0, %s9, %s7
  // Predicated region
  $region2: #{_lambda_.10} parent=0 // pred_check
    _
  $region3: #{_lambda_.10} parent=0 // pred_check_branch
    %12 = sbr.rel (0) target = $region5
  $region4: #{_lambda_.10} parent=0 // pred_region
    _
  $region5: #{_lambda_.10} parent=0 // pred_fallthru
    _
  // Predicated region
  $region6: #{_lambda_.10} parent=0 // pred_check
    _
  $region7: #{_lambda_.10} parent=0 // pred_check_branch
    %14 = sbr.rel (0) target = $region9
  $region8: #{_lambda_.10} parent=0 // pred_region
    _
  $region9: #{_lambda_.10} parent=0 // pred_fallthru
    _
  // Predicated region
  $region10: #{_lambda_.10} parent=0 // pred_check
    _
  $region11: #{_lambda_.10} parent=0 // pred_check_branch
    %16 = sbr.rel (0) target = $region13
  $region12: #{_lambda_.10} parent=0 // pred_region
    _
  $region13: #{_lambda_.10} parent=0 // pred_fallthru
    _
  // Predicated region
  $region14: #{_lambda_.10} parent=0 // pred_check
    _
  $region15: #{_lambda_.10} parent=0 // pred_check_branch
    %18 = sbr.rel (0) target = $region17
  $region16: #{_lambda_.10} parent=0 // pred_region
    _
  $region17: #{_lambda_.10} parent=0 // pred_fallthru
    _
  // Predicated region
  $region18: #{_lambda_.10} parent=0 // pred_check
    _
  $region19: #{_lambda_.10} parent=0 // pred_check_branch
    %20 = sbr.rel (0) target = $region21
  $region20: #{_lambda_.10} parent=0 // pred_region
    _
  $region21: #{_lambda_.10} parent=0 // pred_fallthru
    _
  // Predicated region
  $region22: #{_lambda_.10} parent=0 // pred_check
    _
  $region23: #{_lambda_.10} parent=0 // pred_check_branch
    %22 = sbr.rel (0) target = $region25
  $region24: #{_lambda_.10} parent=0 // pred_region
    _
  $region25: #{_lambda_.10} parent=0 // pred_fallthru
    _
  %v23 = vld [vmem:[%s0] sm:$0xf]
  %v24 = vld [vmem:[%s0 + $0x4] sm:$0xf]
  %v25 = vld [vmem:[%s0 + $0x8] sm:$0xf]
  %v26 = vld [vmem:[%s0 + $0xc] sm:$0xf]
  %v27 = vld [vmem:[%s0 + $0x10] sm:$0xf]
  %v28 = vld [vmem:[%s0 + $0x14] sm:$0xf]
  %v29 = vld [vmem:[%s0 + $0x18] sm:$0xf]
  %v30 = vld [vmem:[%s0 + $0x1c] sm:$0xf]
  %v31 = vunpack.c.l.bf16 %v23
  %v32 = vunpack.c.l.bf16 %v24
  %v33 = vunpack.c.l.bf16 %v25
  %v34 = vunpack.c.l.bf16 %v26
  %v35 = vunpack.c.l.bf16 %v27
  %v36 = vunpack.c.l.bf16 %v28
  %v37 = vunpack.c.l.bf16 %v29
  %v38 = vunpack.c.l.bf16 %v30
  %v39 = vld [vmem:[%s1] sm:$0xf]
  %v40 = vld [vmem:[%s1 + $0x4] sm:$0xf]
  %v41 = vld [vmem:[%s1 + $0x8] sm:$0xf]
  %v42 = vld [vmem:[%s1 + $0xc] sm:$0xf]
  %v43 = vld [vmem:[%s1 + $0x10] sm:$0xf]
  %v44 = vld [vmem:[%s1 + $0x14] sm:$0xf]
  %v45 = vld [vmem:[%s1 + $0x18] sm:$0xf]
  %v46 = vld [vmem:[%s1 + $0x1c] sm:$0xf]
  %v47 = vunpack.c.l.bf16 %v39
  %v48 = vunpack.c.l.bf16 %v40
  %v49 = vunpack.c.l.bf16 %v41
  %v50 = vunpack.c.l.bf16 %v42
  %v51 = vunpack.c.l.bf16 %v43
  %v52 = vunpack.c.l.bf16 %v44
  %v53 = vunpack.c.l.bf16 %v45
  %v54 = vunpack.c.l.bf16 %v46
  %vm71 = vcmask 1041408
  %v72 = vrot.slane %v31, 6
  %v73 = vrot.slane %v47, 6
  %v74 = vrot.slane %v32, 6
  %v75 = vsel %vm71, %v72, %v74
  %v76 = vrot.slane %v48, 6
  %v77 = vsel %vm71, %v73, %v76
  %v78 = vrot.slane %v33, 6
  %v79 = vsel %vm71, %v74, %v78
  %v80 = vrot.slane %v49, 6
  %v81 = vsel %vm71, %v76, %v80
  %v82 = vrot.slane %v34, 6
  %v83 = vsel %vm71, %v78, %v82
  %v84 = vrot.slane %v50, 6
  %v85 = vsel %vm71, %v80, %v84
  %v86 = vrot.slane %v35, 6
  %v87 = vrot.slane %v51, 6
  %v88 = vrot.slane %v36, 6
  %v89 = vsel %vm71, %v86, %v88
  %v90 = vrot.slane %v52, 6
  %v91 = vsel %vm71, %v87, %v90
  %v92 = vrot.slane %v37, 6
  %v93 = vsel %vm71, %v88, %v92
  %v94 = vrot.slane %v53, 6
  %v95 = vsel %vm71, %v90, %v94
  %v96 = vrot.slane %v38, 6
  %v97 = vsel %vm71, %v92, %v96
  %v98 = vrot.slane %v54, 6
  %v99 = vsel %vm71, %v94, %v98
  %v120 = vsel %vm71, 0.0, %v72
  %v121 = vsel %vm71, 0.0, %v73
  %v122 = vsel %vm71, 0.0, %v86
  %v123 = vsel %vm71, 0.0, %v87
  %v124 = vsel %vm71, %v82, 0.0
  %v125 = vsel %vm71, %v84, 0.0
  %v126 = vsel %vm71, %v96, 0.0
  %v127 = vsel %vm71, %v98, 0.0
  %vm136 = vcmask 1046528
  %v137 = vrot.slane %v120, 1
  %v138 = vrot.slane %v75, 1
  %v139 = vsel %vm136, %v137, %v138
  %v140 = vrot.slane %v121, 1
  %v141 = vrot.slane %v77, 1
  %v142 = vsel %vm136, %v140, %v141
  %v143 = vrot.slane %v79, 1
  %v144 = vsel %vm136, %v138, %v143
  %v145 = vrot.slane %v81, 1
  %v146 = vsel %vm136, %v141, %v145
  %v147 = vrot.slane %v83, 1
  %v148 = vsel %vm136, %v143, %v147
  %v149 = vrot.slane %v85, 1
  %v150 = vsel %vm136, %v145, %v149
  %v151 = vrot.slane %v124, 1
  %v152 = vsel %vm136, %v147, %v151
  %v153 = vrot.slane %v125, 1
  %v154 = vsel %vm136, %v149, %v153
  %v155 = vrot.slane %v122, 1
  %v156 = vrot.slane %v89, 1
  %v157 = vsel %vm136, %v155, %v156
  %v158 = vrot.slane %v123, 1
  %v159 = vrot.slane %v91, 1
  %v160 = vsel %vm136, %v158, %v159
  %v161 = vrot.slane %v93, 1
  %v162 = vsel %vm136, %v156, %v161
  %v163 = vrot.slane %v95, 1
  %v164 = vsel %vm136, %v159, %v163
  %v165 = vrot.slane %v97, 1
  %v166 = vsel %vm136, %v161, %v165
  %v167 = vrot.slane %v99, 1
  %v168 = vsel %vm136, %v163, %v167
  %v169 = vrot.slane %v126, 1
  %v170 = vsel %vm136, %v165, %v169
  %v171 = vrot.slane %v127, 1
  %v172 = vsel %vm136, %v167, %v171
  %vm189 = vcmask 1045504
  %v190 = vrot.slane %v120, 2
  %v191 = vrot.slane %v75, 2
  %v192 = vsel %vm189, %v190, %v191
  %v193 = vrot.slane %v121, 2
  %v194 = vrot.slane %v77, 2
  %v195 = vsel %vm189, %v193, %v194
  %v196 = vrot.slane %v79, 2
  %v197 = vsel %vm189, %v191, %v196
  %v198 = vrot.slane %v81, 2
  %v199 = vsel %vm189, %v194, %v198
  %v200 = vrot.slane %v83, 2
  %v201 = vsel %vm189, %v196, %v200
  %v202 = vrot.slane %v85, 2
  %v203 = vsel %vm189, %v198, %v202
  %v204 = vrot.slane %v124, 2
  %v205 = vsel %vm189, %v200, %v204
  %v206 = vrot.slane %v125, 2
  %v207 = vsel %vm189, %v202, %v206
  %v208 = vrot.slane %v122, 2
  %v209 = vrot.slane %v89, 2
  %v210 = vsel %vm189, %v208, %v209
  %v211 = vrot.slane %v123, 2
  %v212 = vrot.slane %v91, 2
  %v213 = vsel %vm189, %v211, %v212
  %v214 = vrot.slane %v93, 2
  %v215 = vsel %vm189, %v209, %v214
  %v216 = vrot.slane %v95, 2
  %v217 = vsel %vm189, %v212, %v216
  %v218 = vrot.slane %v97, 2
  %v219 = vsel %vm189, %v214, %v218
  %v220 = vrot.slane %v99, 2
  %v221 = vsel %vm189, %v216, %v220
  %v222 = vrot.slane %v126, 2
  %v223 = vsel %vm189, %v218, %v222
  %v224 = vrot.slane %v127, 2
  %v225 = vsel %vm189, %v220, %v224
  %vm242 = vcmask 1044480
  %v243 = vrot.slane %v120, 3
  %v244 = vrot.slane %v75, 3
  %v245 = vsel %vm242, %v243, %v244
  %v246 = vrot.slane %v121, 3
  %v247 = vrot.slane %v77, 3
  %v248 = vsel %vm242, %v246, %v247
  %v249 = vrot.slane %v79, 3
  %v250 = vsel %vm242, %v244, %v249
  %v251 = vrot.slane %v81, 3
  %v252 = vsel %vm242, %v247, %v251
  %v253 = vrot.slane %v83, 3
  %v254 = vsel %vm242, %v249, %v253
  %v255 = vrot.slane %v85, 3
  %v256 = vsel %vm242, %v251, %v255
  %v257 = vrot.slane %v124, 3
  %v258 = vsel %vm242, %v253, %v257
  %v259 = vrot.slane %v125, 3
  %v260 = vsel %vm242, %v255, %v259
  %v261 = vrot.slane %v122, 3
  %v262 = vrot.slane %v89, 3
  %v263 = vsel %vm242, %v261, %v262
  %v264 = vrot.slane %v123, 3
  %v265 = vrot.slane %v91, 3
  %v266 = vsel %vm242, %v264, %v265
  %v267 = vrot.slane %v93, 3
  %v268 = vsel %vm242, %v262, %v267
  %v269 = vrot.slane %v95, 3
  %v270 = vsel %vm242, %v265, %v269
  %v271 = vrot.slane %v97, 3
  %v272 = vsel %vm242, %v267, %v271
  %v273 = vrot.slane %v99, 3
  %v274 = vsel %vm242, %v269, %v273
  %v275 = vrot.slane %v126, 3
  %v276 = vsel %vm242, %v271, %v275
  %v277 = vrot.slane %v127, 3
  %v278 = vsel %vm242, %v273, %v277
  %vm295 = vcmask 1043456
  %v296 = vrot.slane %v120, 4
  %v297 = vrot.slane %v75, 4
  %v298 = vsel %vm295, %v296, %v297
  %v299 = vrot.slane %v121, 4
  %v300 = vrot.slane %v77, 4
  %v301 = vsel %vm295, %v299, %v300
  %v302 = vrot.slane %v79, 4
  %v303 = vsel %vm295, %v297, %v302
  %v304 = vrot.slane %v81, 4
  %v305 = vsel %vm295, %v300, %v304
  %v306 = vrot.slane %v83, 4
  %v307 = vsel %vm295, %v302, %v306
  %v308 = vrot.slane %v85, 4
  %v309 = vsel %vm295, %v304, %v308
  %v310 = vrot.slane %v124, 4
  %v311 = vsel %vm295, %v306, %v310
  %v312 = vrot.slane %v125, 4
  %v313 = vsel %vm295, %v308, %v312
  %v314 = vrot.slane %v122, 4
  %v315 = vrot.slane %v89, 4
  %v316 = vsel %vm295, %v314, %v315
  %v317 = vrot.slane %v123, 4
  %v318 = vrot.slane %v91, 4
  %v319 = vsel %vm295, %v317, %v318
  %v320 = vrot.slane %v93, 4
  %v321 = vsel %vm295, %v315, %v320
  %v322 = vrot.slane %v95, 4
  %v323 = vsel %vm295, %v318, %v322
  %v324 = vrot.slane %v97, 4
  %v325 = vsel %vm295, %v320, %v324
  %v326 = vrot.slane %v99, 4
  %v327 = vsel %vm295, %v322, %v326
  %v328 = vrot.slane %v126, 4
  %v329 = vsel %vm295, %v324, %v328
  %v330 = vrot.slane %v127, 4
  %v331 = vsel %vm295, %v326, %v330
  %v348 = vpack.c.bf16 %v75, %v120
  %v349 = vpack.c.bf16 %v77, %v121
  %v350 = vpack.c.bf16 %v144, %v139
  %v351 = vpack.c.bf16 %v146, %v142
  %v352 = vpack.c.bf16 %v197, %v192
  %v353 = vpack.c.bf16 %v199, %v195
  %v354 = vpack.c.bf16 %v250, %v245
  %v355 = vpack.c.bf16 %v252, %v248
  %v356 = vpack.c.bf16 %v303, %v298
  %v357 = vpack.c.bf16 %v305, %v301
  %v358 = vpack.c.bf16 %v83, %v79
  %v359 = vpack.c.bf16 %v85, %v81
  %v360 = vpack.c.bf16 %v152, %v148
  %v361 = vpack.c.bf16 %v154, %v150
  %v362 = vpack.c.bf16 %v205, %v201
  %v363 = vpack.c.bf16 %v207, %v203
  %v364 = vpack.c.bf16 %v258, %v254
  %v365 = vpack.c.bf16 %v260, %v256
  %v366 = vpack.c.bf16 %v311, %v307
  %v367 = vpack.c.bf16 %v313, %v309
  %v368 = vpack.c.bf16 %v89, %v122
  %v369 = vpack.c.bf16 %v91, %v123
  %v370 = vpack.c.bf16 %v162, %v157
  %v371 = vpack.c.bf16 %v164, %v160
  %v372 = vpack.c.bf16 %v215, %v210
  %v373 = vpack.c.bf16 %v217, %v213
  %v374 = vpack.c.bf16 %v268, %v263
  %v375 = vpack.c.bf16 %v270, %v266
  %v376 = vpack.c.bf16 %v321, %v316
  %v377 = vpack.c.bf16 %v323, %v319
  %v378 = vpack.c.bf16 %v97, %v93
  %v379 = vpack.c.bf16 %v99, %v95
  %v380 = vpack.c.bf16 %v170, %v166
  %v381 = vpack.c.bf16 %v172, %v168
  %v382 = vpack.c.bf16 %v223, %v219
  %v383 = vpack.c.bf16 %v225, %v221
  %v384 = vpack.c.bf16 %v276, %v272
  %v385 = vpack.c.bf16 %v278, %v274
  %v386 = vpack.c.bf16 %v329, %v325
  %v387 = vpack.c.bf16 %v331, %v327
  %v388 = vld [vmem:[%s2] sm:$0xf]
  %v389 = vld [vmem:[%s2 + $0x4] sm:$0xf]
  %v390 = vld [vmem:[%s2 + $0x8] sm:$0xf]
  %v391 = vld [vmem:[%s2 + $0xc] sm:$0xf]
  %v392 = vld [vmem:[%s2 + $0x10] sm:$0xf]
  %v393 = vld [vmem:[%s2 + $0x14] sm:$0xf]
  %v394 = vld [vmem:[%s2 + $0x18] sm:$0xf]
  %v395 = vld [vmem:[%s2 + $0x1c] sm:$0xf]
  %v396 = vld [vmem:[%s2 + $0x20] sm:$0xf]
  %v397 = vld [vmem:[%s2 + $0x24] sm:$0xf]
  %v398 = vld [vmem:[%s2 + $0x28] sm:$0xf]
  %v399 = vld [vmem:[%s2 + $0x2c] sm:$0xf]
  %v400 = vld [vmem:[%s2 + $0x30] sm:$0xf]
  %v401 = vld [vmem:[%s2 + $0x34] sm:$0xf]
  %v402 = vld [vmem:[%s2 + $0x38] sm:$0xf]
  %v403 = vld [vmem:[%s2 + $0x3c] sm:$0xf]
  %v404 = vld [vmem:[%s2 + $0x40] sm:$0xf]
  %v405 = vld [vmem:[%s2 + $0x44] sm:$0xf]
  %v406 = vld [vmem:[%s2 + $0x48] sm:$0xf]
  %v407 = vld [vmem:[%s2 + $0x4c] sm:$0xf]
  %v408 = vld [vmem:[%s2 + $0x50] sm:$0xf]
  %v409 = vld [vmem:[%s2 + $0x54] sm:$0xf]
  %v410 = vld [vmem:[%s2 + $0x58] sm:$0xf]
  %v411 = vld [vmem:[%s2 + $0x5c] sm:$0xf]
  %v412 = vld [vmem:[%s2 + $0x60] sm:$0xf]
  %v413 = vld [vmem:[%s2 + $0x64] sm:$0xf]
  %v414 = vld [vmem:[%s2 + $0x68] sm:$0xf]
  %v415 = vld [vmem:[%s2 + $0x6c] sm:$0xf]
  %v416 = vld [vmem:[%s2 + $0x70] sm:$0xf]
  %v417 = vld [vmem:[%s2 + $0x74] sm:$0xf]
  %v418 = vld [vmem:[%s2 + $0x78] sm:$0xf]
  %v419 = vld [vmem:[%s2 + $0x7c] sm:$0xf]
  %v420 = vld [vmem:[%s2 + $0x80] sm:$0xf]
  %v421 = vld [vmem:[%s2 + $0x84] sm:$0xf]
  %v422 = vld [vmem:[%s2 + $0x88] sm:$0xf]
  %v423 = vld [vmem:[%s2 + $0x8c] sm:$0xf]
  %v424 = vld [vmem:[%s2 + $0x90] sm:$0xf]
  %v425 = vld [vmem:[%s2 + $0x94] sm:$0xf]
  %v426 = vld [vmem:[%s2 + $0x98] sm:$0xf]
  %v427 = vld [vmem:[%s2 + $0x9c] sm:$0xf]
  %v428 = vld [vmem:[%s2 + $0xa0] sm:$0xf]
  %v429 = vld [vmem:[%s2 + $0xa4] sm:$0xf]
  %v430 = vld [vmem:[%s2 + $0xa8] sm:$0xf]
  %v431 = vld [vmem:[%s2 + $0xac] sm:$0xf]
  %v432 = vld [vmem:[%s2 + $0xb0] sm:$0xf]
  %v433 = vld [vmem:[%s2 + $0xb4] sm:$0xf]
  %v434 = vld [vmem:[%s2 + $0xb8] sm:$0xf]
  %v435 = vld [vmem:[%s2 + $0xbc] sm:$0xf]
  %v436 = vld [vmem:[%s2 + $0xc0] sm:$0xf]
  %v437 = vld [vmem:[%s2 + $0xc4] sm:$0xf]
  %v438 = vld [vmem:[%s2 + $0xc8] sm:$0xf]
  %v439 = vld [vmem:[%s2 + $0xcc] sm:$0xf]
  %v440 = vld [vmem:[%s2 + $0xd0] sm:$0xf]
  %v441 = vld [vmem:[%s2 + $0xd4] sm:$0xf]
  %v442 = vld [vmem:[%s2 + $0xd8] sm:$0xf]
  %v443 = vld [vmem:[%s2 + $0xdc] sm:$0xf]
  %v444 = vld [vmem:[%s2 + $0xe0] sm:$0xf]
  %v445 = vld [vmem:[%s2 + $0xe4] sm:$0xf]
  %v446 = vld [vmem:[%s2 + $0xe8] sm:$0xf]
  %v447 = vld [vmem:[%s2 + $0xec] sm:$0xf]
  %v448 = vld [vmem:[%s2 + $0xf0] sm:$0xf]
  %v449 = vld [vmem:[%s2 + $0xf4] sm:$0xf]
  %v450 = vld [vmem:[%s2 + $0xf8] sm:$0xf]
  %v451 = vld [vmem:[%s2 + $0xfc] sm:$0xf]
  %v452 = vld [vmem:[%s2 + $0x100] sm:$0xf]
  %v453 = vld [vmem:[%s2 + $0x104] sm:$0xf]
  %v454 = vld [vmem:[%s2 + $0x108] sm:$0xf]
  %v455 = vld [vmem:[%s2 + $0x10c] sm:$0xf]
  %v456 = vld [vmem:[%s2 + $0x110] sm:$0xf]
  %v457 = vld [vmem:[%s2 + $0x114] sm:$0xf]
  %v458 = vld [vmem:[%s2 + $0x118] sm:$0xf]
  %v459 = vld [vmem:[%s2 + $0x11c] sm:$0xf]
  %v460 = vld [vmem:[%s2 + $0x120] sm:$0xf]
  %v461 = vld [vmem:[%s2 + $0x124] sm:$0xf]
  %v462 = vld [vmem:[%s2 + $0x128] sm:$0xf]
  %v463 = vld [vmem:[%s2 + $0x12c] sm:$0xf]
  %v464 = vld [vmem:[%s2 + $0x130] sm:$0xf]
  %v465 = vld [vmem:[%s2 + $0x134] sm:$0xf]
  %v466 = vld [vmem:[%s2 + $0x138] sm:$0xf]
  %v467 = vld [vmem:[%s2 + $0x13c] sm:$0xf]
  %v468 = vld [vmem:[%s2 + $0x140] sm:$0xf]
  %v469 = vld [vmem:[%s2 + $0x144] sm:$0xf]
  %v470 = vld [vmem:[%s2 + $0x148] sm:$0xf]
  %v471 = vld [vmem:[%s2 + $0x14c] sm:$0xf]
  %v472 = vld [vmem:[%s2 + $0x150] sm:$0xf]
  %v473 = vld [vmem:[%s2 + $0x154] sm:$0xf]
  %v474 = vld [vmem:[%s2 + $0x158] sm:$0xf]
  %v475 = vld [vmem:[%s2 + $0x15c] sm:$0xf]
  %v476 = vld [vmem:[%s2 + $0x160] sm:$0xf]
  %v477 = vld [vmem:[%s2 + $0x164] sm:$0xf]
  %v478 = vld [vmem:[%s2 + $0x168] sm:$0xf]
  %v479 = vld [vmem:[%s2 + $0x16c] sm:$0xf]
  %v480 = vld [vmem:[%s2 + $0x170] sm:$0xf]
  %v481 = vld [vmem:[%s2 + $0x174] sm:$0xf]
  %v482 = vld [vmem:[%s2 + $0x178] sm:$0xf]
  %v483 = vld [vmem:[%s2 + $0x17c] sm:$0xf]
  %v484 = vld [vmem:[%s2 + $0x180] sm:$0xf]
  %v485 = vld [vmem:[%s2 + $0x184] sm:$0xf]
  %v486 = vld [vmem:[%s2 + $0x188] sm:$0xf]
  %v487 = vld [vmem:[%s2 + $0x18c] sm:$0xf]
  %v488 = vld [vmem:[%s2 + $0x190] sm:$0xf]
  %v489 = vld [vmem:[%s2 + $0x194] sm:$0xf]
  %v490 = vld [vmem:[%s2 + $0x198] sm:$0xf]
  %v491 = vld [vmem:[%s2 + $0x19c] sm:$0xf]
  %v492 = vld [vmem:[%s2 + $0x1a0] sm:$0xf]
  %v493 = vld [vmem:[%s2 + $0x1a4] sm:$0xf]
  %v494 = vld [vmem:[%s2 + $0x1a8] sm:$0xf]
  %v495 = vld [vmem:[%s2 + $0x1ac] sm:$0xf]
  %v496 = vld [vmem:[%s2 + $0x1b0] sm:$0xf]
  %v497 = vld [vmem:[%s2 + $0x1b4] sm:$0xf]
  %v498 = vld [vmem:[%s2 + $0x1b8] sm:$0xf]
  %v499 = vld [vmem:[%s2 + $0x1bc] sm:$0xf]
  %v500 = vld [vmem:[%s2 + $0x1c0] sm:$0xf]
  %v501 = vld [vmem:[%s2 + $0x1c4] sm:$0xf]
  %v502 = vld [vmem:[%s2 + $0x1c8] sm:$0xf]
  %v503 = vld [vmem:[%s2 + $0x1cc] sm:$0xf]
  %v504 = vld [vmem:[%s2 + $0x1d0] sm:$0xf]
  %v505 = vld [vmem:[%s2 + $0x1d4] sm:$0xf]
  %v506 = vld [vmem:[%s2 + $0x1d8] sm:$0xf]
  %v507 = vld [vmem:[%s2 + $0x1dc] sm:$0xf]
  %v508 = vld [vmem:[%s2 + $0x1e0] sm:$0xf]
  %v509 = vld [vmem:[%s2 + $0x1e4] sm:$0xf]
  %v510 = vld [vmem:[%s2 + $0x1e8] sm:$0xf]
  %v511 = vld [vmem:[%s2 + $0x1ec] sm:$0xf]
  %v512 = vld [vmem:[%s2 + $0x1f0] sm:$0xf]
  %v513 = vld [vmem:[%s2 + $0x1f4] sm:$0xf]
  %v514 = vld [vmem:[%s2 + $0x1f8] sm:$0xf]
  %v515 = vld [vmem:[%s2 + $0x1fc] sm:$0xf]
  %v516 = vld [vmem:[%s2 + $0x200] sm:$0xf]
  %v517 = vld [vmem:[%s2 + $0x204] sm:$0xf]
  %v518 = vld [vmem:[%s2 + $0x208] sm:$0xf]
  %v519 = vld [vmem:[%s2 + $0x20c] sm:$0xf]
  %v520 = vld [vmem:[%s2 + $0x210] sm:$0xf]
  %v521 = vld [vmem:[%s2 + $0x214] sm:$0xf]
  %v522 = vld [vmem:[%s2 + $0x218] sm:$0xf]
  %v523 = vld [vmem:[%s2 + $0x21c] sm:$0xf]
  %v524 = vld [vmem:[%s2 + $0x220] sm:$0xf]
  %v525 = vld [vmem:[%s2 + $0x224] sm:$0xf]
  %v526 = vld [vmem:[%s2 + $0x228] sm:$0xf]
  %v527 = vld [vmem:[%s2 + $0x22c] sm:$0xf]
  %v528 = vld [vmem:[%s2 + $0x230] sm:$0xf]
  %v529 = vld [vmem:[%s2 + $0x234] sm:$0xf]
  %v530 = vld [vmem:[%s2 + $0x238] sm:$0xf]
  %v531 = vld [vmem:[%s2 + $0x23c] sm:$0xf]
  %v532 = vld [vmem:[%s2 + $0x240] sm:$0xf]
  %v533 = vld [vmem:[%s2 + $0x244] sm:$0xf]
  %v534 = vld [vmem:[%s2 + $0x248] sm:$0xf]
  %v535 = vld [vmem:[%s2 + $0x24c] sm:$0xf]
  %v536 = vld [vmem:[%s2 + $0x250] sm:$0xf]
  %v537 = vld [vmem:[%s2 + $0x254] sm:$0xf]
  %v538 = vld [vmem:[%s2 + $0x258] sm:$0xf]
  %v539 = vld [vmem:[%s2 + $0x25c] sm:$0xf]
  %v540 = vld [vmem:[%s2 + $0x260] sm:$0xf]
  %v541 = vld [vmem:[%s2 + $0x264] sm:$0xf]
  %v542 = vld [vmem:[%s2 + $0x268] sm:$0xf]
  %v543 = vld [vmem:[%s2 + $0x26c] sm:$0xf]
  %v544 = vld [vmem:[%s2 + $0x270] sm:$0xf]
  %v545 = vld [vmem:[%s2 + $0x274] sm:$0xf]
  %v546 = vld [vmem:[%s2 + $0x278] sm:$0xf]
  %v547 = vld [vmem:[%s2 + $0x27c] sm:$0xf]
  %v548 = vld [vmem:[%s3] sm:$0x1]
  %v550 = vperm.slane %v548, 0
  %v712 = vunpack.c.l.b16 %v388
  %v713 = vunpack.c.l.b16 %v389
  %v714 = vunpack.c.l.b16 %v390
  %v715 = vunpack.c.l.b16 %v391
  %v716 = vunpack.c.l.b16 %v392
  %v717 = vunpack.c.l.b16 %v393
  %v718 = vunpack.c.l.b16 %v394
  %v719 = vunpack.c.l.b16 %v395
  %v720 = vunpack.c.l.b16 %v396
  %v721 = vunpack.c.l.b16 %v397
  %v722 = vunpack.c.l.b16 %v398
  %v723 = vunpack.c.l.b16 %v399
  %v724 = vunpack.c.l.b16 %v400
  %v725 = vunpack.c.l.b16 %v401
  %v726 = vunpack.c.l.b16 %v402
  %v727 = vunpack.c.l.b16 %v403
  %v728 = vunpack.c.l.b16 %v404
  %v729 = vunpack.c.l.b16 %v405
  %v730 = vunpack.c.l.b16 %v406
  %v731 = vunpack.c.l.b16 %v407
  %v732 = vunpack.c.l.b16 %v408
  %v733 = vunpack.c.l.b16 %v409
  %v734 = vunpack.c.l.b16 %v410
  %v735 = vunpack.c.l.b16 %v411
  %v736 = vunpack.c.l.b16 %v412
  %v737 = vunpack.c.l.b16 %v413
  %v738 = vunpack.c.l.b16 %v414
  %v739 = vunpack.c.l.b16 %v415
  %v740 = vunpack.c.l.b16 %v416
  %v741 = vunpack.c.l.b16 %v417
  %v742 = vunpack.c.l.b16 %v418
  %v743 = vunpack.c.l.b16 %v419
  %v744 = vunpack.c.l.b16 %v420
  %v745 = vunpack.c.l.b16 %v421
  %v746 = vunpack.c.l.b16 %v422
  %v747 = vunpack.c.l.b16 %v423
  %v748 = vunpack.c.l.b16 %v424
  %v749 = vunpack.c.l.b16 %v425
  %v750 = vunpack.c.l.b16 %v426
  %v751 = vunpack.c.l.b16 %v427
  %v752 = vunpack.c.l.b16 %v428
  %v753 = vunpack.c.l.b16 %v429
  %v754 = vunpack.c.l.b16 %v430
  %v755 = vunpack.c.l.b16 %v431
  %v756 = vunpack.c.l.b16 %v432
  %v757 = vunpack.c.l.b16 %v433
  %v758 = vunpack.c.l.b16 %v434
  %v759 = vunpack.c.l.b16 %v435
  %v760 = vunpack.c.l.b16 %v436
  %v761 = vunpack.c.l.b16 %v437
  %v762 = vunpack.c.l.b16 %v438
  %v763 = vunpack.c.l.b16 %v439
  %v764 = vunpack.c.l.b16 %v440
  %v765 = vunpack.c.l.b16 %v441
  %v766 = vunpack.c.l.b16 %v442
  %v767 = vunpack.c.l.b16 %v443
  %v768 = vunpack.c.l.b16 %v444
  %v769 = vunpack.c.l.b16 %v445
  %v770 = vunpack.c.l.b16 %v446
  %v771 = vunpack.c.l.b16 %v447
  %v772 = vunpack.c.l.b16 %v448
  %v773 = vunpack.c.l.b16 %v449
  %v774 = vunpack.c.l.b16 %v450
  %v775 = vunpack.c.l.b16 %v451
  %v776 = vunpack.c.l.b16 %v452
  %v777 = vunpack.c.l.b16 %v453
  %v778 = vunpack.c.l.b16 %v454
  %v779 = vunpack.c.l.b16 %v455
  %v780 = vunpack.c.l.b16 %v456
  %v781 = vunpack.c.l.b16 %v457
  %v782 = vunpack.c.l.b16 %v458
  %v783 = vunpack.c.l.b16 %v459
  %v784 = vunpack.c.l.b16 %v460
  %v785 = vunpack.c.l.b16 %v461
  %v786 = vunpack.c.l.b16 %v462
  %v787 = vunpack.c.l.b16 %v463
  %v788 = vunpack.c.l.b16 %v464
  %v789 = vunpack.c.l.b16 %v465
  %v790 = vunpack.c.l.b16 %v466
  %v791 = vunpack.c.l.b16 %v467
  %v792 = vunpack.c.l.b16 %v468
  %v793 = vunpack.c.l.b16 %v469
  %v794 = vunpack.c.l.b16 %v470
  %v795 = vunpack.c.l.b16 %v471
  %v796 = vunpack.c.l.b16 %v472
  %v797 = vunpack.c.l.b16 %v473
  %v798 = vunpack.c.l.b16 %v474
  %v799 = vunpack.c.l.b16 %v475
  %v800 = vunpack.c.l.b16 %v476
  %v801 = vunpack.c.l.b16 %v477
  %v802 = vunpack.c.l.b16 %v478
  %v803 = vunpack.c.l.b16 %v479
  %v804 = vunpack.c.l.b16 %v480
  %v805 = vunpack.c.l.b16 %v481
  %v806 = vunpack.c.l.b16 %v482
  %v807 = vunpack.c.l.b16 %v483
  %v808 = vunpack.c.l.b16 %v484
  %v809 = vunpack.c.l.b16 %v485
  %v810 = vunpack.c.l.b16 %v486
  %v811 = vunpack.c.l.b16 %v487
  %v812 = vunpack.c.l.b16 %v488
  %v813 = vunpack.c.l.b16 %v489
  %v814 = vunpack.c.l.b16 %v490
  %v815 = vunpack.c.l.b16 %v491
  %v816 = vunpack.c.l.b16 %v492
  %v817 = vunpack.c.l.b16 %v493
  %v818 = vunpack.c.l.b16 %v494
  %v819 = vunpack.c.l.b16 %v495
  %v820 = vunpack.c.l.b16 %v496
  %v821 = vunpack.c.l.b16 %v497
  %v822 = vunpack.c.l.b16 %v498
  %v823 = vunpack.c.l.b16 %v499
  %v824 = vunpack.c.l.b16 %v500
  %v825 = vunpack.c.l.b16 %v501
  %v826 = vunpack.c.l.b16 %v502
  %v827 = vunpack.c.l.b16 %v503
  %v828 = vunpack.c.l.b16 %v504
  %v829 = vunpack.c.l.b16 %v505
  %v830 = vunpack.c.l.b16 %v506
  %v831 = vunpack.c.l.b16 %v507
  %v832 = vunpack.c.l.b16 %v508
  %v833 = vunpack.c.l.b16 %v509
  %v834 = vunpack.c.l.b16 %v510
  %v835 = vunpack.c.l.b16 %v511
  %v836 = vunpack.c.l.b16 %v512
  %v837 = vunpack.c.l.b16 %v513
  %v838 = vunpack.c.l.b16 %v514
  %v839 = vunpack.c.l.b16 %v515
  %v840 = vunpack.c.l.b16 %v516
  %v841 = vunpack.c.l.b16 %v517
  %v842 = vunpack.c.l.b16 %v518
  %v843 = vunpack.c.l.b16 %v519
  %v844 = vunpack.c.l.b16 %v520
  %v845 = vunpack.c.l.b16 %v521
  %v846 = vunpack.c.l.b16 %v522
  %v847 = vunpack.c.l.b16 %v523
  %v848 = vunpack.c.l.b16 %v524
  %v849 = vunpack.c.l.b16 %v525
  %v850 = vunpack.c.l.b16 %v526
  %v851 = vunpack.c.l.b16 %v527
  %v852 = vunpack.c.l.b16 %v528
  %v853 = vunpack.c.l.b16 %v529
  %v854 = vunpack.c.l.b16 %v530
  %v855 = vunpack.c.l.b16 %v531
  %v856 = vunpack.c.l.b16 %v532
  %v857 = vunpack.c.l.b16 %v533
  %v858 = vunpack.c.l.b16 %v534
  %v859 = vunpack.c.l.b16 %v535
  %v860 = vunpack.c.l.b16 %v536
  %v861 = vunpack.c.l.b16 %v537
  %v862 = vunpack.c.l.b16 %v538
  %v863 = vunpack.c.l.b16 %v539
  %v864 = vunpack.c.l.b16 %v540
  %v865 = vunpack.c.l.b16 %v541
  %v866 = vunpack.c.l.b16 %v542
  %v867 = vunpack.c.l.b16 %v543
  %v868 = vunpack.c.l.b16 %v544
  %v869 = vunpack.c.l.b16 %v545
  %v870 = vunpack.c.l.b16 %v546
  %v871 = vunpack.c.l.b16 %v547
  %v872 = vpack.c.b16 %v713, %v712
  %v873 = vpack.c.b16 %v715, %v714
  %v874 = vpack.c.b16 %v717, %v716
  %v875 = vpack.c.b16 %v719, %v718
  %v876 = vpack.c.b16 %v721, %v720
  %v877 = vpack.c.b16 %v723, %v722
  %v878 = vpack.c.b16 %v725, %v724
  %v879 = vpack.c.b16 %v727, %v726
  %v880 = vpack.c.b16 %v729, %v728
  %v881 = vpack.c.b16 %v731, %v730
  %v882 = vpack.c.b16 %v733, %v732
  %v883 = vpack.c.b16 %v735, %v734
  %v884 = vpack.c.b16 %v737, %v736
  %v885 = vpack.c.b16 %v739, %v738
  %v886 = vpack.c.b16 %v741, %v740
  %v887 = vpack.c.b16 %v743, %v742
  %v888 = vpack.c.b16 %v745, %v744
  %v889 = vpack.c.b16 %v747, %v746
  %v890 = vpack.c.b16 %v749, %v748
  %v891 = vpack.c.b16 %v751, %v750
  %v892 = vpack.c.b16 %v753, %v752
  %v893 = vpack.c.b16 %v755, %v754
  %v894 = vpack.c.b16 %v757, %v756
  %v895 = vpack.c.b16 %v759, %v758
  %v896 = vpack.c.b16 %v761, %v760
  %v897 = vpack.c.b16 %v763, %v762
  %v898 = vpack.c.b16 %v765, %v764
  %v899 = vpack.c.b16 %v767, %v766
  %v900 = vpack.c.b16 %v769, %v768
  %v901 = vpack.c.b16 %v771, %v770
  %v902 = vpack.c.b16 %v773, %v772
  %v903 = vpack.c.b16 %v775, %v774
  %v904 = vpack.c.b16 %v777, %v776
  %v905 = vpack.c.b16 %v779, %v778
  %v906 = vpack.c.b16 %v781, %v780
  %v907 = vpack.c.b16 %v783, %v782
  %v908 = vpack.c.b16 %v785, %v784
  %v909 = vpack.c.b16 %v787, %v786
  %v910 = vpack.c.b16 %v789, %v788
  %v911 = vpack.c.b16 %v791, %v790
  %v912 = vpack.c.b16 %v793, %v792
  %v913 = vpack.c.b16 %v795, %v794
  %v914 = vpack.c.b16 %v797, %v796
  %v915 = vpack.c.b16 %v799, %v798
  %v916 = vpack.c.b16 %v801, %v800
  %v917 = vpack.c.b16 %v803, %v802
  %v918 = vpack.c.b16 %v805, %v804
  %v919 = vpack.c.b16 %v807, %v806
  %v920 = vpack.c.b16 %v809, %v808
  %v921 = vpack.c.b16 %v811, %v810
  %v922 = vpack.c.b16 %v813, %v812
  %v923 = vpack.c.b16 %v815, %v814
  %v924 = vpack.c.b16 %v817, %v816
  %v925 = vpack.c.b16 %v819, %v818
  %v926 = vpack.c.b16 %v821, %v820
  %v927 = vpack.c.b16 %v823, %v822
  %v928 = vpack.c.b16 %v825, %v824
  %v929 = vpack.c.b16 %v827, %v826
  %v930 = vpack.c.b16 %v829, %v828
  %v931 = vpack.c.b16 %v831, %v830
  %v932 = vpack.c.b16 %v833, %v832
  %v933 = vpack.c.b16 %v835, %v834
  %v934 = vpack.c.b16 %v837, %v836
  %v935 = vpack.c.b16 %v839, %v838
  %v936 = vpack.c.b16 %v841, %v840
  %v937 = vpack.c.b16 %v843, %v842
  %v938 = vpack.c.b16 %v845, %v844
  %v939 = vpack.c.b16 %v847, %v846
  %v940 = vpack.c.b16 %v849, %v848
  %v941 = vpack.c.b16 %v851, %v850
  %v942 = vpack.c.b16 %v853, %v852
  %v943 = vpack.c.b16 %v855, %v854
  %v944 = vpack.c.b16 %v857, %v856
  %v945 = vpack.c.b16 %v859, %v858
  %v946 = vpack.c.b16 %v861, %v860
  %v947 = vpack.c.b16 %v863, %v862
  %v948 = vpack.c.b16 %v865, %v864
  %v949 = vpack.c.b16 %v867, %v866
  %v950 = vpack.c.b16 %v869, %v868
  %v951 = vpack.c.b16 %v871, %v870
  %1032 = vmatpush.bf16.msra.mxu0 %v879
  %1033 = vmatpush.bf16.msra.mxu0 %v878
  %1034 = vmatpush.bf16.msra.mxu0 %v877
  %1035 = vmatpush.bf16.msra.mxu0 %v876
  %1036 = vmatpush.bf16.msra.mxu0 %v875
  %1037 = vmatpush.bf16.msra.mxu0 %v874
  %1038 = vmatpush.bf16.msra.mxu0 %v873
  %1039 = vmatpush.bf16.msra.mxu0 %v872
  %1040 = vmatmul.bf16.gmra.mxu0 %v348
  %v1041 = vpop.f32.mrf.mxu0
  %v1042 = vadd.f32 %v550, %v1041
  %v1043 = vpop.f32.mrf.mxu0
  %v1044 = vadd.f32 %v550, %v1043
  %1045 = vmatmul.bf16.gmra.mxu0 %v358
  %v1046 = vpop.f32.mrf.mxu0
  %v1047 = vadd.f32 %v550, %v1046
  %v1048 = vpop.f32.mrf.mxu0
  %v1049 = vadd.f32 %v550, %v1048
  %1050 = vmatmul.bf16.gmra.mxu0 %v368
  %v1051 = vpop.f32.mrf.mxu0
  %v1052 = vadd.f32 %v550, %v1051
  %v1053 = vpop.f32.mrf.mxu0
  %v1054 = vadd.f32 %v550, %v1053
  %1055 = vmatmul.bf16.gmra.mxu0 %v378
  %v1056 = vpop.f32.mrf.mxu0
  %v1057 = vadd.f32 %v550, %v1056
  %v1058 = vpop.f32.mrf.mxu0
  %v1059 = vadd.f32 %v550, %v1058
  %1060 = vdwg.mxu0
  %1061 = vmatpush.bf16.msra.mxu0 %v887
  %1062 = vmatpush.bf16.msra.mxu0 %v886
  %1063 = vmatpush.bf16.msra.mxu0 %v885
  %1064 = vmatpush.bf16.msra.mxu0 %v884
  %1065 = vmatpush.bf16.msra.mxu0 %v883
  %1066 = vmatpush.bf16.msra.mxu0 %v882
  %1067 = vmatpush.bf16.msra.mxu0 %v881
  %1068 = vmatpush.bf16.msra.mxu0 %v880
  %1069 = vmatmul.bf16.gmra.mxu0 %v349
  %v1070 = vpop.f32.mrf.mxu0
  %v1071 = vadd.f32 %v1042, %v1070
  %v1072 = vpop.f32.mrf.mxu0
  %v1073 = vadd.f32 %v1044, %v1072
  %1074 = vmatmul.bf16.gmra.mxu0 %v359
  %v1075 = vpop.f32.mrf.mxu0
  %v1076 = vadd.f32 %v1047, %v1075
  %v1077 = vpop.f32.mrf.mxu0
  %v1078 = vadd.f32 %v1049, %v1077
  %1079 = vmatmul.bf16.gmra.mxu0 %v369
  %v1080 = vpop.f32.mrf.mxu0
  %v1081 = vadd.f32 %v1052, %v1080
  %v1082 = vpop.f32.mrf.mxu0
  %v1083 = vadd.f32 %v1054, %v1082
  %1084 = vmatmul.bf16.gmra.mxu0 %v379
  %v1085 = vpop.f32.mrf.mxu0
  %v1086 = vadd.f32 %v1057, %v1085
  %v1087 = vpop.f32.mrf.mxu0
  %v1088 = vadd.f32 %v1059, %v1087
  %1089 = vdwg.mxu0
  %1090 = vmatpush.bf16.msra.mxu0 %v895
  %1091 = vmatpush.bf16.msra.mxu0 %v894
  %1092 = vmatpush.bf16.msra.mxu0 %v893
  %1093 = vmatpush.bf16.msra.mxu0 %v892
  %1094 = vmatpush.bf16.msra.mxu0 %v891
  %1095 = vmatpush.bf16.msra.mxu0 %v890
  %1096 = vmatpush.bf16.msra.mxu0 %v889
  %1097 = vmatpush.bf16.msra.mxu0 %v888
  %1098 = vmatmul.bf16.gmra.mxu0 %v350
  %v1099 = vpop.f32.mrf.mxu0
  %v1100 = vadd.f32 %v1071, %v1099
  %v1101 = vpop.f32.mrf.mxu0
  %v1102 = vadd.f32 %v1073, %v1101
  %1103 = vmatmul.bf16.gmra.mxu0 %v360
  %v1104 = vpop.f32.mrf.mxu0
  %v1105 = vadd.f32 %v1076, %v1104
  %v1106 = vpop.f32.mrf.mxu0
  %v1107 = vadd.f32 %v1078, %v1106
  %1108 = vmatmul.bf16.gmra.mxu0 %v370
  %v1109 = vpop.f32.mrf.mxu0
  %v1110 = vadd.f32 %v1081, %v1109
  %v1111 = vpop.f32.mrf.mxu0
  %v1112 = vadd.f32 %v1083, %v1111
  %1113 = vmatmul.bf16.gmra.mxu0 %v380
  %v1114 = vpop.f32.mrf.mxu0
  %v1115 = vadd.f32 %v1086, %v1114
  %v1116 = vpop.f32.mrf.mxu0
  %v1117 = vadd.f32 %v1088, %v1116
  %1118 = vdwg.mxu0
  %1119 = vmatpush.bf16.msra.mxu0 %v903
  %1120 = vmatpush.bf16.msra.mxu0 %v902
  %1121 = vmatpush.bf16.msra.mxu0 %v901
  %1122 = vmatpush.bf16.msra.mxu0 %v900
  %1123 = vmatpush.bf16.msra.mxu0 %v899
  %1124 = vmatpush.bf16.msra.mxu0 %v898
  %1125 = vmatpush.bf16.msra.mxu0 %v897
  %1126 = vmatpush.bf16.msra.mxu0 %v896
  %1127 = vmatmul.bf16.gmra.mxu0 %v351
  %v1128 = vpop.f32.mrf.mxu0
  %v1129 = vadd.f32 %v1100, %v1128
  %v1130 = vpop.f32.mrf.mxu0
  %v1131 = vadd.f32 %v1102, %v1130
  %1132 = vmatmul.bf16.gmra.mxu0 %v361
  %v1133 = vpop.f32.mrf.mxu0
  %v1134 = vadd.f32 %v1105, %v1133
  %v1135 = vpop.f32.mrf.mxu0
  %v1136 = vadd.f32 %v1107, %v1135
  %1137 = vmatmul.bf16.gmra.mxu0 %v371
  %v1138 = vpop.f32.mrf.mxu0
  %v1139 = vadd.f32 %v1110, %v1138
  %v1140 = vpop.f32.mrf.mxu0
  %v1141 = vadd.f32 %v1112, %v1140
  %1142 = vmatmul.bf16.gmra.mxu0 %v381
  %v1143 = vpop.f32.mrf.mxu0
  %v1144 = vadd.f32 %v1115, %v1143
  %v1145 = vpop.f32.mrf.mxu0
  %v1146 = vadd.f32 %v1117, %v1145
  %1147 = vdwg.mxu0
  %1148 = vmatpush.bf16.msra.mxu0 %v911
  %1149 = vmatpush.bf16.msra.mxu0 %v910
  %1150 = vmatpush.bf16.msra.mxu0 %v909
  %1151 = vmatpush.bf16.msra.mxu0 %v908
  %1152 = vmatpush.bf16.msra.mxu0 %v907
  %1153 = vmatpush.bf16.msra.mxu0 %v906
  %1154 = vmatpush.bf16.msra.mxu0 %v905
  %1155 = vmatpush.bf16.msra.mxu0 %v904
  %1156 = vmatmul.bf16.gmra.mxu0 %v352
  %v1157 = vpop.f32.mrf.mxu0
  %v1158 = vadd.f32 %v1129, %v1157
  %v1159 = vpop.f32.mrf.mxu0
  %v1160 = vadd.f32 %v1131, %v1159
  %1161 = vmatmul.bf16.gmra.mxu0 %v362
  %v1162 = vpop.f32.mrf.mxu0
  %v1163 = vadd.f32 %v1134, %v1162
  %v1164 = vpop.f32.mrf.mxu0
  %v1165 = vadd.f32 %v1136, %v1164
  %1166 = vmatmul.bf16.gmra.mxu0 %v372
  %v1167 = vpop.f32.mrf.mxu0
  %v1168 = vadd.f32 %v1139, %v1167
  %v1169 = vpop.f32.mrf.mxu0
  %v1170 = vadd.f32 %v1141, %v1169
  %1171 = vmatmul.bf16.gmra.mxu0 %v382
  %v1172 = vpop.f32.mrf.mxu0
  %v1173 = vadd.f32 %v1144, %v1172
  %v1174 = vpop.f32.mrf.mxu0
  %v1175 = vadd.f32 %v1146, %v1174
  %1176 = vdwg.mxu0
  %1177 = vmatpush.bf16.msra.mxu0 %v919
  %1178 = vmatpush.bf16.msra.mxu0 %v918
  %1179 = vmatpush.bf16.msra.mxu0 %v917
  %1180 = vmatpush.bf16.msra.mxu0 %v916
  %1181 = vmatpush.bf16.msra.mxu0 %v915
  %1182 = vmatpush.bf16.msra.mxu0 %v914
  %1183 = vmatpush.bf16.msra.mxu0 %v913
  %1184 = vmatpush.bf16.msra.mxu0 %v912
  %1185 = vmatmul.bf16.gmra.mxu0 %v353
  %v1186 = vpop.f32.mrf.mxu0
  %v1187 = vadd.f32 %v1158, %v1186
  %v1188 = vpop.f32.mrf.mxu0
  %v1189 = vadd.f32 %v1160, %v1188
  %1190 = vmatmul.bf16.gmra.mxu0 %v363
  %v1191 = vpop.f32.mrf.mxu0
  %v1192 = vadd.f32 %v1163, %v1191
  %v1193 = vpop.f32.mrf.mxu0
  %v1194 = vadd.f32 %v1165, %v1193
  %1195 = vmatmul.bf16.gmra.mxu0 %v373
  %v1196 = vpop.f32.mrf.mxu0
  %v1197 = vadd.f32 %v1168, %v1196
  %v1198 = vpop.f32.mrf.mxu0
  %v1199 = vadd.f32 %v1170, %v1198
  %1200 = vmatmul.bf16.gmra.mxu0 %v383
  %v1201 = vpop.f32.mrf.mxu0
  %v1202 = vadd.f32 %v1173, %v1201
  %v1203 = vpop.f32.mrf.mxu0
  %v1204 = vadd.f32 %v1175, %v1203
  %1205 = vdwg.mxu0
  %1206 = vmatpush.bf16.msra.mxu0 %v927
  %1207 = vmatpush.bf16.msra.mxu0 %v926
  %1208 = vmatpush.bf16.msra.mxu0 %v925
  %1209 = vmatpush.bf16.msra.mxu0 %v924
  %1210 = vmatpush.bf16.msra.mxu0 %v923
  %1211 = vmatpush.bf16.msra.mxu0 %v922
  %1212 = vmatpush.bf16.msra.mxu0 %v921
  %1213 = vmatpush.bf16.msra.mxu0 %v920
  %1214 = vmatmul.bf16.gmra.mxu0 %v354
  %v1215 = vpop.f32.mrf.mxu0
  %v1216 = vadd.f32 %v1187, %v1215
  %v1217 = vpop.f32.mrf.mxu0
  %v1218 = vadd.f32 %v1189, %v1217
  %1219 = vmatmul.bf16.gmra.mxu0 %v364
  %v1220 = vpop.f32.mrf.mxu0
  %v1221 = vadd.f32 %v1192, %v1220
  %v1222 = vpop.f32.mrf.mxu0
  %v1223 = vadd.f32 %v1194, %v1222
  %1224 = vmatmul.bf16.gmra.mxu0 %v374
  %v1225 = vpop.f32.mrf.mxu0
  %v1226 = vadd.f32 %v1197, %v1225
  %v1227 = vpop.f32.mrf.mxu0
  %v1228 = vadd.f32 %v1199, %v1227
  %1229 = vmatmul.bf16.gmra.mxu0 %v384
  %v1230 = vpop.f32.mrf.mxu0
  %v1231 = vadd.f32 %v1202, %v1230
  %v1232 = vpop.f32.mrf.mxu0
  %v1233 = vadd.f32 %v1204, %v1232
  %1234 = vdwg.mxu0
  %1235 = vmatpush.bf16.msra.mxu0 %v935
  %1236 = vmatpush.bf16.msra.mxu0 %v934
  %1237 = vmatpush.bf16.msra.mxu0 %v933
  %1238 = vmatpush.bf16.msra.mxu0 %v932
  %1239 = vmatpush.bf16.msra.mxu0 %v931
  %1240 = vmatpush.bf16.msra.mxu0 %v930
  %1241 = vmatpush.bf16.msra.mxu0 %v929
  %1242 = vmatpush.bf16.msra.mxu0 %v928
  %1243 = vmatmul.bf16.gmra.mxu0 %v355
  %v1244 = vpop.f32.mrf.mxu0
  %v1245 = vadd.f32 %v1216, %v1244
  %v1246 = vpop.f32.mrf.mxu0
  %v1247 = vadd.f32 %v1218, %v1246
  %1248 = vmatmul.bf16.gmra.mxu0 %v365
  %v1249 = vpop.f32.mrf.mxu0
  %v1250 = vadd.f32 %v1221, %v1249
  %v1251 = vpop.f32.mrf.mxu0
  %v1252 = vadd.f32 %v1223, %v1251
  %1253 = vmatmul.bf16.gmra.mxu0 %v375
  %v1254 = vpop.f32.mrf.mxu0
  %v1255 = vadd.f32 %v1226, %v1254
  %v1256 = vpop.f32.mrf.mxu0
  %v1257 = vadd.f32 %v1228, %v1256
  %1258 = vmatmul.bf16.gmra.mxu0 %v385
  %v1259 = vpop.f32.mrf.mxu0
  %v1260 = vadd.f32 %v1231, %v1259
  %v1261 = vpop.f32.mrf.mxu0
  %v1262 = vadd.f32 %v1233, %v1261
  %1263 = vdwg.mxu0
  %1264 = vmatpush.bf16.msra.mxu0 %v943
  %1265 = vmatpush.bf16.msra.mxu0 %v942
  %1266 = vmatpush.bf16.msra.mxu0 %v941
  %1267 = vmatpush.bf16.msra.mxu0 %v940
  %1268 = vmatpush.bf16.msra.mxu0 %v939
  %1269 = vmatpush.bf16.msra.mxu0 %v938
  %1270 = vmatpush.bf16.msra.mxu0 %v937
  %1271 = vmatpush.bf16.msra.mxu0 %v936
  %1272 = vmatmul.bf16.gmra.mxu0 %v356
  %v1273 = vpop.f32.mrf.mxu0
  %v1274 = vadd.f32 %v1245, %v1273
  %v1275 = vpop.f32.mrf.mxu0
  %v1276 = vadd.f32 %v1247, %v1275
  %1277 = vmatmul.bf16.gmra.mxu0 %v366
  %v1278 = vpop.f32.mrf.mxu0
  %v1279 = vadd.f32 %v1250, %v1278
  %v1280 = vpop.f32.mrf.mxu0
  %v1281 = vadd.f32 %v1252, %v1280
  %1282 = vmatmul.bf16.gmra.mxu0 %v376
  %v1283 = vpop.f32.mrf.mxu0
  %v1284 = vadd.f32 %v1255, %v1283
  %v1285 = vpop.f32.mrf.mxu0
  %v1286 = vadd.f32 %v1257, %v1285
  %1287 = vmatmul.bf16.gmra.mxu0 %v386
  %v1288 = vpop.f32.mrf.mxu0
  %v1289 = vadd.f32 %v1260, %v1288
  %v1290 = vpop.f32.mrf.mxu0
  %v1291 = vadd.f32 %v1262, %v1290
  %1292 = vdwg.mxu0
  %1293 = vmatpush.bf16.msra.mxu0 %v951
  %1294 = vmatpush.bf16.msra.mxu0 %v950
  %1295 = vmatpush.bf16.msra.mxu0 %v949
  %1296 = vmatpush.bf16.msra.mxu0 %v948
  %1297 = vmatpush.bf16.msra.mxu0 %v947
  %1298 = vmatpush.bf16.msra.mxu0 %v946
  %1299 = vmatpush.bf16.msra.mxu0 %v945
  %1300 = vmatpush.bf16.msra.mxu0 %v944
  %1301 = vmatmul.bf16.gmra.mxu0 %v357
  %v1302 = vpop.f32.mrf.mxu0
  %v1303 = vadd.f32 %v1274, %v1302
  %v1304 = vpop.f32.mrf.mxu0
  %v1305 = vadd.f32 %v1276, %v1304
  %1306 = vmatmul.bf16.gmra.mxu0 %v367
  %v1307 = vpop.f32.mrf.mxu0
  %v1308 = vadd.f32 %v1279, %v1307
  %v1309 = vpop.f32.mrf.mxu0
  %v1310 = vadd.f32 %v1281, %v1309
  %1311 = vmatmul.bf16.gmra.mxu0 %v377
  %v1312 = vpop.f32.mrf.mxu0
  %v1313 = vadd.f32 %v1284, %v1312
  %v1314 = vpop.f32.mrf.mxu0
  %v1315 = vadd.f32 %v1286, %v1314
  %1316 = vmatmul.bf16.gmra.mxu0 %v387
  %v1317 = vpop.f32.mrf.mxu0
  %v1318 = vadd.f32 %v1289, %v1317
  %v1319 = vpop.f32.mrf.mxu0
  %v1320 = vadd.f32 %v1291, %v1319
  %1321 = vdwg.mxu0
  %v1322 = vadd.f32 %v1303, %v1305
  %v1323 = vadd.f32 %v1322, %v1308
  %v1324 = vadd.f32 %v1323, %v1310
  %v1325 = vadd.f32 %v1324, %v1313
  %v1326 = vadd.f32 %v1325, %v1315
  %v1327 = vadd.f32 %v1326, %v1318
  %v1328 = vadd.f32 %v1327, %v1320
  %v1329 = vrot.slane %v1328, 4
  %v1330 = vadd.f32 %v1328, %v1329
  %v1331 = vrot.slane %v1330, 2
  %v1332 = vadd.f32 %v1330, %v1331
  %v1333 = vrot.slane %v1332, 1
  %v1334 = vadd.f32 %v1332, %v1333
  %v1335 = vrcp.pop 64.0
  %v1336 = vmul.f32 64.0, %v1335
  %v1337 = vsub.f32 1.0, %v1336
  %v1338 = vmul.f32 %v1335, %v1337
  %v1339 = vadd.f32 %v1335, %v1338
  %vm1340 = vweird.f32 %v1335
  %v1341 = vsel %vm1340, %v1335, %v1339
  %v1342 = vmul.f32 %v1334, %v1341
  %v1343 = vsub.f32 %v1303, %v1342
  %v1344 = vsub.f32 %v1305, %v1342
  %v1345 = vsub.f32 %v1308, %v1342
  %v1346 = vsub.f32 %v1310, %v1342
  %v1347 = vsub.f32 %v1313, %v1342
  %v1348 = vsub.f32 %v1315, %v1342
  %v1349 = vsub.f32 %v1318, %v1342
  %v1350 = vsub.f32 %v1320, %v1342
  %v1351 = vmul.f32 %v1343, %v1343
  %v1352 = vmul.f32 %v1344, %v1344
  %v1353 = vmul.f32 %v1345, %v1345
  %v1354 = vmul.f32 %v1346, %v1346
  %v1355 = vmul.f32 %v1347, %v1347
  %v1356 = vmul.f32 %v1348, %v1348
  %v1357 = vmul.f32 %v1349, %v1349
  %v1358 = vmul.f32 %v1350, %v1350
  %v1359 = vadd.f32 %v1351, %v1352
  %v1360 = vadd.f32 %v1359, %v1353
  %v1361 = vadd.f32 %v1360, %v1354
  %v1362 = vadd.f32 %v1361, %v1355
  %v1363 = vadd.f32 %v1362, %v1356
  %v1364 = vadd.f32 %v1363, %v1357
  %v1365 = vadd.f32 %v1364, %v1358
  %v1366 = vrot.slane %v1365, 4
  %v1367 = vadd.f32 %v1365, %v1366
  %v1368 = vrot.slane %v1367, 2
  %v1369 = vadd.f32 %v1367, %v1368
  %v1370 = vrot.slane %v1369, 1
  %v1371 = vadd.f32 %v1369, %v1370
  %v1372 = vmul.f32 %v1371, %v1341
  %v1373 = vld [vmem:[%s4] sm:$0x1]
  %v1374 = vadd.f32 %v1372, 1e-05
  %v1375 = vrsqrt.pop %v1374
  %v1376 = vmul.f32 %v1375, %v1374
  %v1377 = vmul.f32 %v1376, %v1375
  %v1378 = vmul.f32 0.5, %v1377
  %v1379 = vsub.f32 1.5, %v1378
  %v1380 = vmul.f32 %v1375, %v1379
  %vm1381 = vweird.f32 %v1374
  %vm1382 = vweird.f32 %v1375
  %vm1383 = vmor %vm1381, %vm1382
  %v1384 = vsel %vm1383, %v1375, %v1380
  %v1385 = vmul.f32 %v1373, %v1384
  %v1386 = vld [vmem:[%s5] sm:$0x1]
  %v1387 = vmul.f32 %v1342, %v1385
  %v1388 = vsub.f32 %v1386, %v1387
  %v1390 = vperm.slane %v1385, 0
  %v1392 = vmul.f32 %v1303, %v1390
  %v1393 = vmul.f32 %v1305, %v1390
  %v1394 = vmul.f32 %v1308, %v1390
  %v1395 = vmul.f32 %v1310, %v1390
  %v1396 = vmul.f32 %v1313, %v1390
  %v1397 = vmul.f32 %v1315, %v1390
  %v1398 = vmul.f32 %v1318, %v1390
  %v1399 = vmul.f32 %v1320, %v1390
  %v1401 = vperm.slane %v1388, 0
  %v1403 = vadd.f32 %v1392, %v1401
  %v1404 = vadd.f32 %v1393, %v1401
  %v1405 = vadd.f32 %v1394, %v1401
  %v1406 = vadd.f32 %v1395, %v1401
  %v1407 = vadd.f32 %v1396, %v1401
  %v1408 = vadd.f32 %v1397, %v1401
  %v1409 = vadd.f32 %v1398, %v1401
  %v1410 = vadd.f32 %v1399, %v1401
  %v1411 = vmax.f32 %v1403, 0.0
  %v1412 = vmax.f32 %v1404, 0.0
  %v1413 = vmax.f32 %v1405, 0.0
  %v1414 = vmax.f32 %v1406, 0.0
  %v1415 = vmax.f32 %v1407, 0.0
  %v1416 = vmax.f32 %v1408, 0.0
  %v1417 = vmax.f32 %v1409, 0.0
  %v1418 = vmax.f32 %v1410, 0.0
  %v1419 = vpack.c.bf16 %v1411, %v1411
  %v1420 = vpack.c.bf16 %v1412, %v1412
  %v1421 = vpack.c.bf16 %v1413, %v1413
  %v1422 = vpack.c.bf16 %v1414, %v1414
  %v1423 = vpack.c.bf16 %v1415, %v1415
  %v1424 = vpack.c.bf16 %v1416, %v1416
  %v1425 = vpack.c.bf16 %v1417, %v1417
  %v1426 = vpack.c.bf16 %v1418, %v1418
  %1427 = vst [vmem:[%s6] sm:$0xf] %v1419
  %1428 = vst [vmem:[%s6 + $0x4] sm:$0xf] %v1420
  %1429 = vst [vmem:[%s6 + $0x8] sm:$0xf] %v1421
  %1430 = vst [vmem:[%s6 + $0xc] sm:$0xf] %v1422
  %1431 = vst [vmem:[%s6 + $0x10] sm:$0xf] %v1423
  %1432 = vst [vmem:[%s6 + $0x14] sm:$0xf] %v1424
  %1433 = vst [vmem:[%s6 + $0x18] sm:$0xf] %v1425
  %1434 = vst [vmem:[%s6 + $0x1c] sm:$0xf] %v1426
  // Predicated region
  $region26: #{_lambda_.10} parent=0 // pred_check
    _
  $region27: #{_lambda_.10} parent=0 // pred_check_branch
    %1436 = sbr.rel (0) target = $region29
  $region28: #{_lambda_.10} parent=0 // pred_region
    _
  $region29: #{_lambda_.10} parent=0 // pred_fallthru
    _
  // Predicated region
  $region30: #{_lambda_.10} parent=0 // pred_check
    _
  $region31: #{_lambda_.10} parent=0 // pred_check_branch
    %1438 = sbr.rel (0) target = $region33
  $region32: #{_lambda_.10} parent=0 // pred_region
    _
  $region33: #{_lambda_.10} parent=0 // pred_fallthru
    _

// kernel: _lambda_.13
$region0: #{_lambda_.13}
  #allocation0 [shape = 'u32[]', space=smem, size = 0x4, offset = 0x4, fixed_abs, tag = 'smem constant byte address 0x4 - core index']
  #allocation1 [shape = 'u32[72,128]{1,0:T(1,128)}', space=vmem, size = 0x9000, scoped, tag = 'internal scratch']
  %s0 = inlined_call_operand.vmem [shape: bf16[2,64,128], index: 0, kind: input, shape index: {}]
  %s1 = inlined_call_operand.vmem [shape: bf16[640,128], index: 1, kind: input, shape index: {}]
  %s2 = inlined_call_operand.vmem [shape: f32[1,128], index: 2, kind: input, shape index: {}]
  %s3 = inlined_call_operand.vmem [shape: f32[128,128], index: 3, kind: output, shape index: {}]
  %s4 = sld [smem:[#allocation0]]
  $region22: #{_lambda_.13} parent=0
    _
  %s6 = ssub.s32 1, %s4
  %s7 = scalar_select 0, %s6, %s4
  // Predicated region
  $region2: #{_lambda_.13} parent=0 // pred_check
    _
  $region3: #{_lambda_.13} parent=0 // pred_check_branch
    %9 = sbr.rel (0) target = $region5
  $region4: #{_lambda_.13} parent=0 // pred_region
    _
  $region5: #{_lambda_.13} parent=0 // pred_fallthru
    _
  // Predicated region
  $region6: #{_lambda_.13} parent=0 // pred_check
    _
  $region7: #{_lambda_.13} parent=0 // pred_check_branch
    %11 = sbr.rel (0) target = $region9
  $region8: #{_lambda_.13} parent=0 // pred_region
    _
  $region9: #{_lambda_.13} parent=0 // pred_fallthru
    _
  // Predicated region
  $region10: #{_lambda_.13} parent=0 // pred_check
    _
  $region11: #{_lambda_.13} parent=0 // pred_check_branch
    %13 = sbr.rel (0) target = $region13
  $region12: #{_lambda_.13} parent=0 // pred_region
    _
  $region13: #{_lambda_.13} parent=0 // pred_fallthru
    _
  %v14 = vld [vmem:[%s0] sm:$0xf]
  %v15 = vld [vmem:[%s0 + $0x4] sm:$0xf]
  %v16 = vld [vmem:[%s0 + $0x8] sm:$0xf]
  %v17 = vld [vmem:[%s0 + $0xc] sm:$0xf]
  %v18 = vld [vmem:[%s0 + $0x10] sm:$0xf]
  %v19 = vld [vmem:[%s0 + $0x14] sm:$0xf]
  %v20 = vld [vmem:[%s0 + $0x18] sm:$0xf]
  %v21 = vld [vmem:[%s0 + $0x1c] sm:$0xf]
  %v22 = vld [vmem:[%s0 + $0x20] sm:$0xf]
  %v23 = vld [vmem:[%s0 + $0x24] sm:$0xf]
  %v24 = vld [vmem:[%s0 + $0x28] sm:$0xf]
  %v25 = vld [vmem:[%s0 + $0x2c] sm:$0xf]
  %v26 = vld [vmem:[%s0 + $0x30] sm:$0xf]
  %v27 = vld [vmem:[%s0 + $0x34] sm:$0xf]
  %v28 = vld [vmem:[%s0 + $0x38] sm:$0xf]
  %v29 = vld [vmem:[%s0 + $0x3c] sm:$0xf]
  %v30 = vunpack.c.l.bf16 %v14
  %v31 = vunpack.c.l.bf16 %v15
  %v32 = vunpack.c.l.bf16 %v16
  %v33 = vunpack.c.l.bf16 %v17
  %v34 = vunpack.c.l.bf16 %v18
  %v35 = vunpack.c.l.bf16 %v19
  %v36 = vunpack.c.l.bf16 %v20
  %v37 = vunpack.c.l.bf16 %v21
  %v38 = vunpack.c.l.bf16 %v22
  %v39 = vunpack.c.l.bf16 %v23
  %v40 = vunpack.c.l.bf16 %v24
  %v41 = vunpack.c.l.bf16 %v25
  %v42 = vunpack.c.l.bf16 %v26
  %v43 = vunpack.c.l.bf16 %v27
  %v44 = vunpack.c.l.bf16 %v28
  %v45 = vunpack.c.l.bf16 %v29
  %vm62 = vcmask 1041408
  %v63 = vrot.slane %v30, 6
  %v64 = vrot.slane %v31, 6
  %v65 = vsel %vm62, %v63, %v64
  %v66 = vrot.slane %v32, 6
  %v67 = vsel %vm62, %v64, %v66
  %v68 = vrot.slane %v33, 6
  %v69 = vsel %vm62, %v66, %v68
  %v70 = vrot.slane %v34, 6
  %v71 = vsel %vm62, %v68, %v70
  %v72 = vrot.slane %v35, 6
  %v73 = vsel %vm62, %v70, %v72
  %v74 = vrot.slane %v36, 6
  %v75 = vsel %vm62, %v72, %v74
  %v76 = vrot.slane %v37, 6
  %v77 = vsel %vm62, %v74, %v76
  %v78 = vrot.slane %v38, 6
  %v79 = vrot.slane %v39, 6
  %v80 = vsel %vm62, %v78, %v79
  %v81 = vrot.slane %v40, 6
  %v82 = vsel %vm62, %v79, %v81
  %v83 = vrot.slane %v41, 6
  %v84 = vsel %vm62, %v81, %v83
  %v85 = vrot.slane %v42, 6
  %v86 = vsel %vm62, %v83, %v85
  %v87 = vrot.slane %v43, 6
  %v88 = vsel %vm62, %v85, %v87
  %v89 = vrot.slane %v44, 6
  %v90 = vsel %vm62, %v87, %v89
  %v91 = vrot.slane %v45, 6
  %v92 = vsel %vm62, %v89, %v91
  %v111 = vsel %vm62, 0.0, %v63
  %v112 = vsel %vm62, 0.0, %v78
  %v113 = vsel %vm62, %v76, 0.0
  %v114 = vsel %vm62, %v91, 0.0
  %vm119 = vcmask 1046528
  %v120 = vrot.slane %v111, 1
  %v121 = vrot.slane %v65, 1
  %v122 = vsel %vm119, %v120, %v121
  %v123 = vrot.slane %v67, 1
  %v124 = vsel %vm119, %v121, %v123
  %v125 = vrot.slane %v69, 1
  %v126 = vsel %vm119, %v123, %v125
  %v127 = vrot.slane %v71, 1
  %v128 = vsel %vm119, %v125, %v127
  %v129 = vrot.slane %v73, 1
  %v130 = vsel %vm119, %v127, %v129
  %v131 = vrot.slane %v75, 1
  %v132 = vsel %vm119, %v129, %v131
  %v133 = vrot.slane %v77, 1
  %v134 = vsel %vm119, %v131, %v133
  %v135 = vrot.slane %v113, 1
  %v136 = vsel %vm119, %v133, %v135
  %v137 = vrot.slane %v112, 1
  %v138 = vrot.slane %v80, 1
  %v139 = vsel %vm119, %v137, %v138
  %v140 = vrot.slane %v82, 1
  %v141 = vsel %vm119, %v138, %v140
  %v142 = vrot.slane %v84, 1
  %v143 = vsel %vm119, %v140, %v142
  %v144 = vrot.slane %v86, 1
  %v145 = vsel %vm119, %v142, %v144
  %v146 = vrot.slane %v88, 1
  %v147 = vsel %vm119, %v144, %v146
  %v148 = vrot.slane %v90, 1
  %v149 = vsel %vm119, %v146, %v148
  %v150 = vrot.slane %v92, 1
  %v151 = vsel %vm119, %v148, %v150
  %v152 = vrot.slane %v114, 1
  %v153 = vsel %vm119, %v150, %v152
  %vm170 = vcmask 1045504
  %v171 = vrot.slane %v111, 2
  %v172 = vrot.slane %v65, 2
  %v173 = vsel %vm170, %v171, %v172
  %v174 = vrot.slane %v67, 2
  %v175 = vsel %vm170, %v172, %v174
  %v176 = vrot.slane %v69, 2
  %v177 = vsel %vm170, %v174, %v176
  %v178 = vrot.slane %v71, 2
  %v179 = vsel %vm170, %v176, %v178
  %v180 = vrot.slane %v73, 2
  %v181 = vsel %vm170, %v178, %v180
  %v182 = vrot.slane %v75, 2
  %v183 = vsel %vm170, %v180, %v182
  %v184 = vrot.slane %v77, 2
  %v185 = vsel %vm170, %v182, %v184
  %v186 = vrot.slane %v113, 2
  %v187 = vsel %vm170, %v184, %v186
  %v188 = vrot.slane %v112, 2
  %v189 = vrot.slane %v80, 2
  %v190 = vsel %vm170, %v188, %v189
  %v191 = vrot.slane %v82, 2
  %v192 = vsel %vm170, %v189, %v191
  %v193 = vrot.slane %v84, 2
  %v194 = vsel %vm170, %v191, %v193
  %v195 = vrot.slane %v86, 2
  %v196 = vsel %vm170, %v193, %v195
  %v197 = vrot.slane %v88, 2
  %v198 = vsel %vm170, %v195, %v197
  %v199 = vrot.slane %v90, 2
  %v200 = vsel %vm170, %v197, %v199
  %v201 = vrot.slane %v92, 2
  %v202 = vsel %vm170, %v199, %v201
  %v203 = vrot.slane %v114, 2
  %v204 = vsel %vm170, %v201, %v203
  %vm221 = vcmask 1044480
  %v222 = vrot.slane %v111, 3
  %v223 = vrot.slane %v65, 3
  %v224 = vsel %vm221, %v222, %v223
  %v225 = vrot.slane %v67, 3
  %v226 = vsel %vm221, %v223, %v225
  %v227 = vrot.slane %v69, 3
  %v228 = vsel %vm221, %v225, %v227
  %v229 = vrot.slane %v71, 3
  %v230 = vsel %vm221, %v227, %v229
  %v231 = vrot.slane %v73, 3
  %v232 = vsel %vm221, %v229, %v231
  %v233 = vrot.slane %v75, 3
  %v234 = vsel %vm221, %v231, %v233
  %v235 = vrot.slane %v77, 3
  %v236 = vsel %vm221, %v233, %v235
  %v237 = vrot.slane %v113, 3
  %v238 = vsel %vm221, %v235, %v237
  %v239 = vrot.slane %v112, 3
  %v240 = vrot.slane %v80, 3
  %v241 = vsel %vm221, %v239, %v240
  %v242 = vrot.slane %v82, 3
  %v243 = vsel %vm221, %v240, %v242
  %v244 = vrot.slane %v84, 3
  %v245 = vsel %vm221, %v242, %v244
  %v246 = vrot.slane %v86, 3
  %v247 = vsel %vm221, %v244, %v246
  %v248 = vrot.slane %v88, 3
  %v249 = vsel %vm221, %v246, %v248
  %v250 = vrot.slane %v90, 3
  %v251 = vsel %vm221, %v248, %v250
  %v252 = vrot.slane %v92, 3
  %v253 = vsel %vm221, %v250, %v252
  %v254 = vrot.slane %v114, 3
  %v255 = vsel %vm221, %v252, %v254
  %vm272 = vcmask 1043456
  %v273 = vrot.slane %v111, 4
  %v274 = vrot.slane %v65, 4
  %v275 = vsel %vm272, %v273, %v274
  %v276 = vrot.slane %v67, 4
  %v277 = vsel %vm272, %v274, %v276
  %v278 = vrot.slane %v69, 4
  %v279 = vsel %vm272, %v276, %v278
  %v280 = vrot.slane %v71, 4
  %v281 = vsel %vm272, %v278, %v280
  %v282 = vrot.slane %v73, 4
  %v283 = vsel %vm272, %v280, %v282
  %v284 = vrot.slane %v75, 4
  %v285 = vsel %vm272, %v282, %v284
  %v286 = vrot.slane %v77, 4
  %v287 = vsel %vm272, %v284, %v286
  %v288 = vrot.slane %v113, 4
  %v289 = vsel %vm272, %v286, %v288
  %v290 = vrot.slane %v112, 4
  %v291 = vrot.slane %v80, 4
  %v292 = vsel %vm272, %v290, %v291
  %v293 = vrot.slane %v82, 4
  %v294 = vsel %vm272, %v291, %v293
  %v295 = vrot.slane %v84, 4
  %v296 = vsel %vm272, %v293, %v295
  %v297 = vrot.slane %v86, 4
  %v298 = vsel %vm272, %v295, %v297
  %v299 = vrot.slane %v88, 4
  %v300 = vsel %vm272, %v297, %v299
  %v301 = vrot.slane %v90, 4
  %v302 = vsel %vm272, %v299, %v301
  %v303 = vrot.slane %v92, 4
  %v304 = vsel %vm272, %v301, %v303
  %v305 = vrot.slane %v114, 4
  %v306 = vsel %vm272, %v303, %v305
  %v323 = vpack.c.bf16 %v65, %v111
  %v324 = vpack.c.bf16 %v124, %v122
  %v325 = vpack.c.bf16 %v175, %v173
  %v326 = vpack.c.bf16 %v226, %v224
  %v327 = vpack.c.bf16 %v277, %v275
  %v328 = vpack.c.bf16 %v69, %v67
  %v329 = vpack.c.bf16 %v128, %v126
  %v330 = vpack.c.bf16 %v179, %v177
  %v331 = vpack.c.bf16 %v230, %v228
  %v332 = vpack.c.bf16 %v281, %v279
  %v333 = vpack.c.bf16 %v73, %v71
  %v334 = vpack.c.bf16 %v132, %v130
  %v335 = vpack.c.bf16 %v183, %v181
  %v336 = vpack.c.bf16 %v234, %v232
  %v337 = vpack.c.bf16 %v285, %v283
  %v338 = vpack.c.bf16 %v77, %v75
  %v339 = vpack.c.bf16 %v136, %v134
  %v340 = vpack.c.bf16 %v187, %v185
  %v341 = vpack.c.bf16 %v238, %v236
  %v342 = vpack.c.bf16 %v289, %v287
  %v343 = vpack.c.bf16 %v80, %v112
  %v344 = vpack.c.bf16 %v141, %v139
  %v345 = vpack.c.bf16 %v192, %v190
  %v346 = vpack.c.bf16 %v243, %v241
  %v347 = vpack.c.bf16 %v294, %v292
  %v348 = vpack.c.bf16 %v84, %v82
  %v349 = vpack.c.bf16 %v145, %v143
  %v350 = vpack.c.bf16 %v196, %v194
  %v351 = vpack.c.bf16 %v247, %v245
  %v352 = vpack.c.bf16 %v298, %v296
  %v353 = vpack.c.bf16 %v88, %v86
  %v354 = vpack.c.bf16 %v149, %v147
  %v355 = vpack.c.bf16 %v200, %v198
  %v356 = vpack.c.bf16 %v251, %v249
  %v357 = vpack.c.bf16 %v302, %v300
  %v358 = vpack.c.bf16 %v92, %v90
  %v359 = vpack.c.bf16 %v153, %v151
  %v360 = vpack.c.bf16 %v204, %v202
  %v361 = vpack.c.bf16 %v255, %v253
  %v362 = vpack.c.bf16 %v306, %v304
  %v363 = vld [vmem:[%s1] sm:$0xf]
  %v364 = vld [vmem:[%s1 + $0x4] sm:$0xf]
  %v365 = vld [vmem:[%s1 + $0x8] sm:$0xf]
  %v366 = vld [vmem:[%s1 + $0xc] sm:$0xf]
  %v367 = vld [vmem:[%s1 + $0x10] sm:$0xf]
  %v368 = vld [vmem:[%s1 + $0x14] sm:$0xf]
  %v369 = vld [vmem:[%s1 + $0x18] sm:$0xf]
  %v370 = vld [vmem:[%s1 + $0x1c] sm:$0xf]
  %v371 = vld [vmem:[%s1 + $0x20] sm:$0xf]
  %v372 = vld [vmem:[%s1 + $0x24] sm:$0xf]
  %v373 = vld [vmem:[%s1 + $0x28] sm:$0xf]
  %v374 = vld [vmem:[%s1 + $0x2c] sm:$0xf]
  %v375 = vld [vmem:[%s1 + $0x30] sm:$0xf]
  %v376 = vld [vmem:[%s1 + $0x34] sm:$0xf]
  %v377 = vld [vmem:[%s1 + $0x38] sm:$0xf]
  %v378 = vld [vmem:[%s1 + $0x3c] sm:$0xf]
  %v379 = vld [vmem:[%s1 + $0x40] sm:$0xf]
  %v380 = vld [vmem:[%s1 + $0x44] sm:$0xf]
  %v381 = vld [vmem:[%s1 + $0x48] sm:$0xf]
  %v382 = vld [vmem:[%s1 + $0x4c] sm:$0xf]
  %v383 = vld [vmem:[%s1 + $0x50] sm:$0xf]
  %v384 = vld [vmem:[%s1 + $0x54] sm:$0xf]
  %v385 = vld [vmem:[%s1 + $0x58] sm:$0xf]
  %v386 = vld [vmem:[%s1 + $0x5c] sm:$0xf]
  %v387 = vld [vmem:[%s1 + $0x60] sm:$0xf]
  %v388 = vld [vmem:[%s1 + $0x64] sm:$0xf]
  %v389 = vld [vmem:[%s1 + $0x68] sm:$0xf]
  %v390 = vld [vmem:[%s1 + $0x6c] sm:$0xf]
  %v391 = vld [vmem:[%s1 + $0x70] sm:$0xf]
  %v392 = vld [vmem:[%s1 + $0x74] sm:$0xf]
  %v393 = vld [vmem:[%s1 + $0x78] sm:$0xf]
  %v394 = vld [vmem:[%s1 + $0x7c] sm:$0xf]
  %v395 = vld [vmem:[%s1 + $0x80] sm:$0xf]
  %v396 = vld [vmem:[%s1 + $0x84] sm:$0xf]
  %v397 = vld [vmem:[%s1 + $0x88] sm:$0xf]
  %v398 = vld [vmem:[%s1 + $0x8c] sm:$0xf]
  %v399 = vld [vmem:[%s1 + $0x90] sm:$0xf]
  %v400 = vld [vmem:[%s1 + $0x94] sm:$0xf]
  %v401 = vld [vmem:[%s1 + $0x98] sm:$0xf]
  %v402 = vld [vmem:[%s1 + $0x9c] sm:$0xf]
  %v403 = vld [vmem:[%s1 + $0xa0] sm:$0xf]
  %v404 = vld [vmem:[%s1 + $0xa4] sm:$0xf]
  %v405 = vld [vmem:[%s1 + $0xa8] sm:$0xf]
  %v406 = vld [vmem:[%s1 + $0xac] sm:$0xf]
  %v407 = vld [vmem:[%s1 + $0xb0] sm:$0xf]
  %v408 = vld [vmem:[%s1 + $0xb4] sm:$0xf]
  %v409 = vld [vmem:[%s1 + $0xb8] sm:$0xf]
  %v410 = vld [vmem:[%s1 + $0xbc] sm:$0xf]
  %v411 = vld [vmem:[%s1 + $0xc0] sm:$0xf]
  %v412 = vld [vmem:[%s1 + $0xc4] sm:$0xf]
  %v413 = vld [vmem:[%s1 + $0xc8] sm:$0xf]
  %v414 = vld [vmem:[%s1 + $0xcc] sm:$0xf]
  %v415 = vld [vmem:[%s1 + $0xd0] sm:$0xf]
  %v416 = vld [vmem:[%s1 + $0xd4] sm:$0xf]
  %v417 = vld [vmem:[%s1 + $0xd8] sm:$0xf]
  %v418 = vld [vmem:[%s1 + $0xdc] sm:$0xf]
  %v419 = vld [vmem:[%s1 + $0xe0] sm:$0xf]
  %v420 = vld [vmem:[%s1 + $0xe4] sm:$0xf]
  %v421 = vld [vmem:[%s1 + $0xe8] sm:$0xf]
  %v422 = vld [vmem:[%s1 + $0xec] sm:$0xf]
  %v423 = vld [vmem:[%s1 + $0xf0] sm:$0xf]
  %v424 = vld [vmem:[%s1 + $0xf4] sm:$0xf]
  %v425 = vld [vmem:[%s1 + $0xf8] sm:$0xf]
  %v426 = vld [vmem:[%s1 + $0xfc] sm:$0xf]
  %v427 = vld [vmem:[%s1 + $0x100] sm:$0xf]
  %v428 = vld [vmem:[%s1 + $0x104] sm:$0xf]
  %v429 = vld [vmem:[%s1 + $0x108] sm:$0xf]
  %v430 = vld [vmem:[%s1 + $0x10c] sm:$0xf]
  %v431 = vld [vmem:[%s1 + $0x110] sm:$0xf]
  %v432 = vld [vmem:[%s1 + $0x114] sm:$0xf]
  %v433 = vld [vmem:[%s1 + $0x118] sm:$0xf]
  %v434 = vld [vmem:[%s1 + $0x11c] sm:$0xf]
  %v435 = vld [vmem:[%s1 + $0x120] sm:$0xf]
  %v436 = vld [vmem:[%s1 + $0x124] sm:$0xf]
  %v437 = vld [vmem:[%s1 + $0x128] sm:$0xf]
  %v438 = vld [vmem:[%s1 + $0x12c] sm:$0xf]
  %v439 = vld [vmem:[%s1 + $0x130] sm:$0xf]
  %v440 = vld [vmem:[%s1 + $0x134] sm:$0xf]
  %v441 = vld [vmem:[%s1 + $0x138] sm:$0xf]
  %v442 = vld [vmem:[%s1 + $0x13c] sm:$0xf]
  %v443 = vld [vmem:[%s2] sm:$0x1]
  %v445 = vperm.slane %v443, 0
  %v527 = vunpack.c.l.b16 %v363
  %v528 = vunpack.c.l.b16 %v364
  %v529 = vunpack.c.l.b16 %v365
  %v530 = vunpack.c.l.b16 %v366
  %v531 = vunpack.c.l.b16 %v367
  %v532 = vunpack.c.l.b16 %v368
  %v533 = vunpack.c.l.b16 %v369
  %v534 = vunpack.c.l.b16 %v370
  %v535 = vunpack.c.l.b16 %v371
  %v536 = vunpack.c.l.b16 %v372
  %v537 = vunpack.c.l.b16 %v373
  %v538 = vunpack.c.l.b16 %v374
  %v539 = vunpack.c.l.b16 %v375
  %v540 = vunpack.c.l.b16 %v376
  %v541 = vunpack.c.l.b16 %v377
  %v542 = vunpack.c.l.b16 %v378
  %v543 = vunpack.c.l.b16 %v379
  %v544 = vunpack.c.l.b16 %v380
  %v545 = vunpack.c.l.b16 %v381
  %v546 = vunpack.c.l.b16 %v382
  %v547 = vunpack.c.l.b16 %v383
  %v548 = vunpack.c.l.b16 %v384
  %v549 = vunpack.c.l.b16 %v385
  %v550 = vunpack.c.l.b16 %v386
  %v551 = vunpack.c.l.b16 %v387
  %v552 = vunpack.c.l.b16 %v388
  %v553 = vunpack.c.l.b16 %v389
  %v554 = vunpack.c.l.b16 %v390
  %v555 = vunpack.c.l.b16 %v391
  %v556 = vunpack.c.l.b16 %v392
  %v557 = vunpack.c.l.b16 %v393
  %v558 = vunpack.c.l.b16 %v394
  %v559 = vunpack.c.l.b16 %v395
  %v560 = vunpack.c.l.b16 %v396
  %v561 = vunpack.c.l.b16 %v397
  %v562 = vunpack.c.l.b16 %v398
  %v563 = vunpack.c.l.b16 %v399
  %v564 = vunpack.c.l.b16 %v400
  %v565 = vunpack.c.l.b16 %v401
  %v566 = vunpack.c.l.b16 %v402
  %v567 = vunpack.c.l.b16 %v403
  %v568 = vunpack.c.l.b16 %v404
  %v569 = vunpack.c.l.b16 %v405
  %v570 = vunpack.c.l.b16 %v406
  %v571 = vunpack.c.l.b16 %v407
  %v572 = vunpack.c.l.b16 %v408
  %v573 = vunpack.c.l.b16 %v409
  %v574 = vunpack.c.l.b16 %v410
  %v575 = vunpack.c.l.b16 %v411
  %v576 = vunpack.c.l.b16 %v412
  %v577 = vunpack.c.l.b16 %v413
  %v578 = vunpack.c.l.b16 %v414
  %v579 = vunpack.c.l.b16 %v415
  %v580 = vunpack.c.l.b16 %v416
  %v581 = vunpack.c.l.b16 %v417
  %v582 = vunpack.c.l.b16 %v418
  %v583 = vunpack.c.l.b16 %v419
  %v584 = vunpack.c.l.b16 %v420
  %v585 = vunpack.c.l.b16 %v421
  %v586 = vunpack.c.l.b16 %v422
  %v587 = vunpack.c.l.b16 %v423
  %v588 = vunpack.c.l.b16 %v424
  %v589 = vunpack.c.l.b16 %v425
  %v590 = vunpack.c.l.b16 %v426
  %v591 = vunpack.c.l.b16 %v427
  %v592 = vunpack.c.l.b16 %v428
  %v593 = vunpack.c.l.b16 %v429
  %v594 = vunpack.c.l.b16 %v430
  %v595 = vunpack.c.l.b16 %v431
  %v596 = vunpack.c.l.b16 %v432
  %v597 = vunpack.c.l.b16 %v433
  %v598 = vunpack.c.l.b16 %v434
  %v599 = vunpack.c.l.b16 %v435
  %v600 = vunpack.c.l.b16 %v436
  %v601 = vunpack.c.l.b16 %v437
  %v602 = vunpack.c.l.b16 %v438
  %v603 = vunpack.c.l.b16 %v439
  %v604 = vunpack.c.l.b16 %v440
  %v605 = vunpack.c.l.b16 %v441
  %v606 = vunpack.c.l.b16 %v442
  %v607 = vpack.c.b16 %v528, %v527
  %v608 = vpack.c.b16 %v530, %v529
  %v609 = vpack.c.b16 %v532, %v531
  %v610 = vpack.c.b16 %v534, %v533
  %v611 = vpack.c.b16 %v536, %v535
  %v612 = vpack.c.b16 %v538, %v537
  %v613 = vpack.c.b16 %v540, %v539
  %v614 = vpack.c.b16 %v542, %v541
  %v615 = vpack.c.b16 %v544, %v543
  %v616 = vpack.c.b16 %v546, %v545
  %v617 = vpack.c.b16 %v548, %v547
  %v618 = vpack.c.b16 %v550, %v549
  %v619 = vpack.c.b16 %v552, %v551
  %v620 = vpack.c.b16 %v554, %v553
  %v621 = vpack.c.b16 %v556, %v555
  %v622 = vpack.c.b16 %v558, %v557
  %v623 = vpack.c.b16 %v560, %v559
  %v624 = vpack.c.b16 %v562, %v561
  %v625 = vpack.c.b16 %v564, %v563
  %v626 = vpack.c.b16 %v566, %v565
  %v627 = vpack.c.b16 %v568, %v567
  %v628 = vpack.c.b16 %v570, %v569
  %v629 = vpack.c.b16 %v572, %v571
  %v630 = vpack.c.b16 %v574, %v573
  %v631 = vpack.c.b16 %v576, %v575
  %v632 = vpack.c.b16 %v578, %v577
  %v633 = vpack.c.b16 %v580, %v579
  %v634 = vpack.c.b16 %v582, %v581
  %v635 = vpack.c.b16 %v584, %v583
  %v636 = vpack.c.b16 %v586, %v585
  %v637 = vpack.c.b16 %v588, %v587
  %v638 = vpack.c.b16 %v590, %v589
  %v639 = vpack.c.b16 %v592, %v591
  %v640 = vpack.c.b16 %v594, %v593
  %v641 = vpack.c.b16 %v596, %v595
  %v642 = vpack.c.b16 %v598, %v597
  %v643 = vpack.c.b16 %v600, %v599
  %v644 = vpack.c.b16 %v602, %v601
  %v645 = vpack.c.b16 %v604, %v603
  %v646 = vpack.c.b16 %v606, %v605
  %687 = vmatpush.bf16.msra.mxu0 %v614
  %688 = vmatpush.bf16.msra.mxu0 %v613
  %689 = vmatpush.bf16.msra.mxu0 %v612
  %690 = vmatpush.bf16.msra.mxu0 %v611
  %691 = vmatpush.bf16.msra.mxu0 %v610
  %692 = vmatpush.bf16.msra.mxu0 %v609
  %693 = vmatpush.bf16.msra.mxu0 %v608
  %694 = vmatpush.bf16.msra.mxu0 %v607
  %695 = vmatmul.bf16.gmra.mxu0 %v323
  %v696 = vpop.f32.mrf.mxu0
  %v697 = vadd.f32 %v445, %v696
  %v698 = vpop.f32.mrf.mxu0
  %v699 = vadd.f32 %v445, %v698
  %700 = vmatmul.bf16.gmra.mxu0 %v328
  %v701 = vpop.f32.mrf.mxu0
  %v702 = vadd.f32 %v445, %v701
  %v703 = vpop.f32.mrf.mxu0
  %v704 = vadd.f32 %v445, %v703
  %705 = vmatmul.bf16.gmra.mxu0 %v333
  %v706 = vpop.f32.mrf.mxu0
  %v707 = vadd.f32 %v445, %v706
  %v708 = vpop.f32.mrf.mxu0
  %v709 = vadd.f32 %v445, %v708
  %710 = vmatmul.bf16.gmra.mxu0 %v338
  %v711 = vpop.f32.mrf.mxu0
  %v712 = vadd.f32 %v445, %v711
  %v713 = vpop.f32.mrf.mxu0
  %v714 = vadd.f32 %v445, %v713
  %715 = vmatmul.bf16.gmra.mxu0 %v343
  %v716 = vpop.f32.mrf.mxu0
  %v717 = vadd.f32 %v445, %v716
  %v718 = vpop.f32.mrf.mxu0
  %v719 = vadd.f32 %v445, %v718
  %720 = vmatmul.bf16.gmra.mxu0 %v348
  %v721 = vpop.f32.mrf.mxu0
  %v722 = vadd.f32 %v445, %v721
  %v723 = vpop.f32.mrf.mxu0
  %v724 = vadd.f32 %v445, %v723
  %725 = vmatmul.bf16.gmra.mxu0 %v353
  %v726 = vpop.f32.mrf.mxu0
  %v727 = vadd.f32 %v445, %v726
  %v728 = vpop.f32.mrf.mxu0
  %v729 = vadd.f32 %v445, %v728
  %730 = vmatmul.bf16.gmra.mxu0 %v358
  %v731 = vpop.f32.mrf.mxu0
  %v732 = vadd.f32 %v445, %v731
  %v733 = vpop.f32.mrf.mxu0
  %v734 = vadd.f32 %v445, %v733
  %735 = vdwg.mxu0
  %736 = vmatpush.bf16.msra.mxu0 %v622
  %737 = vmatpush.bf16.msra.mxu0 %v621
  %738 = vmatpush.bf16.msra.mxu0 %v620
  %739 = vmatpush.bf16.msra.mxu0 %v619
  %740 = vmatpush.bf16.msra.mxu0 %v618
  %741 = vmatpush.bf16.msra.mxu0 %v617
  %742 = vmatpush.bf16.msra.mxu0 %v616
  %743 = vmatpush.bf16.msra.mxu0 %v615
  %744 = vmatmul.bf16.gmra.mxu0 %v324
  %v745 = vpop.f32.mrf.mxu0
  %v746 = vadd.f32 %v697, %v745
  %v747 = vpop.f32.mrf.mxu0
  %v748 = vadd.f32 %v699, %v747
  %749 = vmatmul.bf16.gmra.mxu0 %v329
  %v750 = vpop.f32.mrf.mxu0
  %v751 = vadd.f32 %v702, %v750
  %v752 = vpop.f32.mrf.mxu0
  %v753 = vadd.f32 %v704, %v752
  %754 = vmatmul.bf16.gmra.mxu0 %v334
  %v755 = vpop.f32.mrf.mxu0
  %v756 = vadd.f32 %v707, %v755
  %v757 = vpop.f32.mrf.mxu0
  %v758 = vadd.f32 %v709, %v757
  %759 = vmatmul.bf16.gmra.mxu0 %v339
  %v760 = vpop.f32.mrf.mxu0
  %v761 = vadd.f32 %v712, %v760
  %v762 = vpop.f32.mrf.mxu0
  %v763 = vadd.f32 %v714, %v762
  %764 = vmatmul.bf16.gmra.mxu0 %v344
  %v765 = vpop.f32.mrf.mxu0
  %v766 = vadd.f32 %v717, %v765
  %v767 = vpop.f32.mrf.mxu0
  %v768 = vadd.f32 %v719, %v767
  %769 = vmatmul.bf16.gmra.mxu0 %v349
  %v770 = vpop.f32.mrf.mxu0
  %v771 = vadd.f32 %v722, %v770
  %v772 = vpop.f32.mrf.mxu0
  %v773 = vadd.f32 %v724, %v772
  %774 = vmatmul.bf16.gmra.mxu0 %v354
  %v775 = vpop.f32.mrf.mxu0
  %v776 = vadd.f32 %v727, %v775
  %v777 = vpop.f32.mrf.mxu0
  %v778 = vadd.f32 %v729, %v777
  %779 = vmatmul.bf16.gmra.mxu0 %v359
  %v780 = vpop.f32.mrf.mxu0
  %v781 = vadd.f32 %v732, %v780
  %v782 = vpop.f32.mrf.mxu0
  %v783 = vadd.f32 %v734, %v782
  %784 = vdwg.mxu0
  %785 = vmatpush.bf16.msra.mxu0 %v630
  %786 = vmatpush.bf16.msra.mxu0 %v629
  %787 = vmatpush.bf16.msra.mxu0 %v628
  %788 = vmatpush.bf16.msra.mxu0 %v627
  %789 = vmatpush.bf16.msra.mxu0 %v626
  %790 = vmatpush.bf16.msra.mxu0 %v625
  %791 = vmatpush.bf16.msra.mxu0 %v624
  %792 = vmatpush.bf16.msra.mxu0 %v623
  %793 = vmatmul.bf16.gmra.mxu0 %v325
  %v794 = vpop.f32.mrf.mxu0
  %v795 = vadd.f32 %v746, %v794
  %v796 = vpop.f32.mrf.mxu0
  %v797 = vadd.f32 %v748, %v796
  %798 = vmatmul.bf16.gmra.mxu0 %v330
  %v799 = vpop.f32.mrf.mxu0
  %v800 = vadd.f32 %v751, %v799
  %v801 = vpop.f32.mrf.mxu0
  %v802 = vadd.f32 %v753, %v801
  %803 = vmatmul.bf16.gmra.mxu0 %v335
  %v804 = vpop.f32.mrf.mxu0
  %v805 = vadd.f32 %v756, %v804
  %v806 = vpop.f32.mrf.mxu0
  %v807 = vadd.f32 %v758, %v806
  %808 = vmatmul.bf16.gmra.mxu0 %v340
  %v809 = vpop.f32.mrf.mxu0
  %v810 = vadd.f32 %v761, %v809
  %v811 = vpop.f32.mrf.mxu0
  %v812 = vadd.f32 %v763, %v811
  %813 = vmatmul.bf16.gmra.mxu0 %v345
  %v814 = vpop.f32.mrf.mxu0
  %v815 = vadd.f32 %v766, %v814
  %v816 = vpop.f32.mrf.mxu0
  %v817 = vadd.f32 %v768, %v816
  %818 = vmatmul.bf16.gmra.mxu0 %v350
  %v819 = vpop.f32.mrf.mxu0
  %v820 = vadd.f32 %v771, %v819
  %v821 = vpop.f32.mrf.mxu0
  %v822 = vadd.f32 %v773, %v821
  %823 = vmatmul.bf16.gmra.mxu0 %v355
  %v824 = vpop.f32.mrf.mxu0
  %v825 = vadd.f32 %v776, %v824
  %v826 = vpop.f32.mrf.mxu0
  %v827 = vadd.f32 %v778, %v826
  %828 = vmatmul.bf16.gmra.mxu0 %v360
  %v829 = vpop.f32.mrf.mxu0
  %v830 = vadd.f32 %v781, %v829
  %v831 = vpop.f32.mrf.mxu0
  %v832 = vadd.f32 %v783, %v831
  %833 = vdwg.mxu0
  %834 = vmatpush.bf16.msra.mxu0 %v638
  %835 = vmatpush.bf16.msra.mxu0 %v637
  %836 = vmatpush.bf16.msra.mxu0 %v636
  %837 = vmatpush.bf16.msra.mxu0 %v635
  %838 = vmatpush.bf16.msra.mxu0 %v634
  %839 = vmatpush.bf16.msra.mxu0 %v633
  %840 = vmatpush.bf16.msra.mxu0 %v632
  %841 = vmatpush.bf16.msra.mxu0 %v631
  %842 = vmatmul.bf16.gmra.mxu0 %v326
  %v843 = vpop.f32.mrf.mxu0
  %v844 = vadd.f32 %v795, %v843
  %v845 = vpop.f32.mrf.mxu0
  %v846 = vadd.f32 %v797, %v845
  %847 = vmatmul.bf16.gmra.mxu0 %v331
  %v848 = vpop.f32.mrf.mxu0
  %v849 = vadd.f32 %v800, %v848
  %v850 = vpop.f32.mrf.mxu0
  %v851 = vadd.f32 %v802, %v850
  %852 = vmatmul.bf16.gmra.mxu0 %v336
  %v853 = vpop.f32.mrf.mxu0
  %v854 = vadd.f32 %v805, %v853
  %v855 = vpop.f32.mrf.mxu0
  %v856 = vadd.f32 %v807, %v855
  %857 = vmatmul.bf16.gmra.mxu0 %v341
  %v858 = vpop.f32.mrf.mxu0
  %v859 = vadd.f32 %v810, %v858
  %v860 = vpop.f32.mrf.mxu0
  %v861 = vadd.f32 %v812, %v860
  %862 = vmatmul.bf16.gmra.mxu0 %v346
  %v863 = vpop.f32.mrf.mxu0
  %v864 = vadd.f32 %v815, %v863
  %v865 = vpop.f32.mrf.mxu0
  %v866 = vadd.f32 %v817, %v865
  %867 = vmatmul.bf16.gmra.mxu0 %v351
  %v868 = vpop.f32.mrf.mxu0
  %v869 = vadd.f32 %v820, %v868
  %v870 = vpop.f32.mrf.mxu0
  %v871 = vadd.f32 %v822, %v870
  %872 = vmatmul.bf16.gmra.mxu0 %v356
  %v873 = vpop.f32.mrf.mxu0
  %v874 = vadd.f32 %v825, %v873
  %v875 = vpop.f32.mrf.mxu0
  %v876 = vadd.f32 %v827, %v875
  %877 = vmatmul.bf16.gmra.mxu0 %v361
  %v878 = vpop.f32.mrf.mxu0
  %v879 = vadd.f32 %v830, %v878
  %v880 = vpop.f32.mrf.mxu0
  %v881 = vadd.f32 %v832, %v880
  %882 = vdwg.mxu0
  %883 = vmatpush.bf16.msra.mxu0 %v646
  %884 = vmatpush.bf16.msra.mxu0 %v645
  %885 = vmatpush.bf16.msra.mxu0 %v644
  %886 = vmatpush.bf16.msra.mxu0 %v643
  %887 = vmatpush.bf16.msra.mxu0 %v642
  %888 = vmatpush.bf16.msra.mxu0 %v641
  %889 = vmatpush.bf16.msra.mxu0 %v640
  %890 = vmatpush.bf16.msra.mxu0 %v639
  %891 = vmatmul.bf16.gmra.mxu0 %v327
  %v892 = vpop.f32.mrf.mxu0
  %v893 = vadd.f32 %v844, %v892
  %v894 = vpop.f32.mrf.mxu0
  %v895 = vadd.f32 %v846, %v894
  %896 = vmatmul.bf16.gmra.mxu0 %v332
  %v897 = vpop.f32.mrf.mxu0
  %v898 = vadd.f32 %v849, %v897
  %v899 = vpop.f32.mrf.mxu0
  %v900 = vadd.f32 %v851, %v899
  %901 = vmatmul.bf16.gmra.mxu0 %v337
  %v902 = vpop.f32.mrf.mxu0
  %v903 = vadd.f32 %v854, %v902
  %v904 = vpop.f32.mrf.mxu0
  %v905 = vadd.f32 %v856, %v904
  %906 = vmatmul.bf16.gmra.mxu0 %v342
  %v907 = vpop.f32.mrf.mxu0
  %v908 = vadd.f32 %v859, %v907
  %v909 = vpop.f32.mrf.mxu0
  %v910 = vadd.f32 %v861, %v909
  %911 = vmatmul.bf16.gmra.mxu0 %v347
  %v912 = vpop.f32.mrf.mxu0
  %v913 = vadd.f32 %v864, %v912
  %v914 = vpop.f32.mrf.mxu0
  %v915 = vadd.f32 %v866, %v914
  %916 = vmatmul.bf16.gmra.mxu0 %v352
  %v917 = vpop.f32.mrf.mxu0
  %v918 = vadd.f32 %v869, %v917
  %v919 = vpop.f32.mrf.mxu0
  %v920 = vadd.f32 %v871, %v919
  %921 = vmatmul.bf16.gmra.mxu0 %v357
  %v922 = vpop.f32.mrf.mxu0
  %v923 = vadd.f32 %v874, %v922
  %v924 = vpop.f32.mrf.mxu0
  %v925 = vadd.f32 %v876, %v924
  %926 = vmatmul.bf16.gmra.mxu0 %v362
  %v927 = vpop.f32.mrf.mxu0
  %v928 = vadd.f32 %v879, %v927
  %v929 = vpop.f32.mrf.mxu0
  %v930 = vadd.f32 %v881, %v929
  %931 = vdwg.mxu0
  %932 = vst [vmem:[%s3] sm:$0xff] %v893
  %933 = vst [vmem:[%s3 + $0x8] sm:$0xff] %v895
  %934 = vst [vmem:[%s3 + $0x10] sm:$0xff] %v898
  %935 = vst [vmem:[%s3 + $0x18] sm:$0xff] %v900
  %936 = vst [vmem:[%s3 + $0x20] sm:$0xff] %v903
  %937 = vst [vmem:[%s3 + $0x28] sm:$0xff] %v905
  %938 = vst [vmem:[%s3 + $0x30] sm:$0xff] %v908
  %939 = vst [vmem:[%s3 + $0x38] sm:$0xff] %v910
  %940 = vst [vmem:[%s3 + $0x40] sm:$0xff] %v913
  %941 = vst [vmem:[%s3 + $0x48] sm:$0xff] %v915
  %942 = vst [vmem:[%s3 + $0x50] sm:$0xff] %v918
  %943 = vst [vmem:[%s3 + $0x58] sm:$0xff] %v920
  %944 = vst [vmem:[%s3 + $0x60] sm:$0xff] %v923
  %945 = vst [vmem:[%s3 + $0x68] sm:$0xff] %v925
  %946 = vst [vmem:[%s3 + $0x70] sm:$0xff] %v928
  %947 = vst [vmem:[%s3 + $0x78] sm:$0xff] %v930
  // Predicated region
  $region14: #{_lambda_.13} parent=0 // pred_check
    _
  $region15: #{_lambda_.13} parent=0 // pred_check_branch
    %949 = sbr.rel (0) target = $region17
  $region16: #{_lambda_.13} parent=0 // pred_region
    _
  $region17: #{_lambda_.13} parent=0 // pred_fallthru
    _
  // Predicated region
  $region18: #{_lambda_.13} parent=0 // pred_check
    _
  $region19: #{_lambda_.13} parent=0 // pred_check_branch
    %951 = sbr.rel (0) target = $region21
  $region20: #{_lambda_.13} parent=0 // pred_region
    _
  $region21: #{_lambda_.13} parent=0 // pred_fallthru
    _

// kernel: _lambda_.12
$region0: #{_lambda_.12}
  #allocation0 [shape = 'u32[]', space=smem, size = 0x4, offset = 0x4, fixed_abs, tag = 'smem constant byte address 0x4 - core index']
  #allocation1 [shape = 'u32[72,128]{1,0:T(1,128)}', space=vmem, size = 0x9000, scoped, tag = 'internal scratch']
  %s0 = inlined_call_operand.vmem [shape: bf16[2,64,128], index: 0, kind: input, shape index: {}]
  %s1 = inlined_call_operand.vmem [shape: bf16[2,64,128], index: 1, kind: input, shape index: {}]
  %s2 = inlined_call_operand.vmem [shape: bf16[1280,128], index: 2, kind: input, shape index: {}]
  %s3 = inlined_call_operand.vmem [shape: f32[1,128], index: 3, kind: input, shape index: {}]
  %s4 = inlined_call_operand.vmem [shape: f32[1,128], index: 4, kind: input, shape index: {}]
  %s5 = inlined_call_operand.vmem [shape: f32[1,128], index: 5, kind: input, shape index: {}]
  %s6 = inlined_call_operand.vmem [shape: bf16[128,128], index: 6, kind: output, shape index: {}]
  %s7 = sld [smem:[#allocation0]]
  $region34: #{_lambda_.12} parent=0
    _
  %s9 = ssub.s32 1, %s7
  %s10 = scalar_select 0, %s9, %s7
  // Predicated region
  $region2: #{_lambda_.12} parent=0 // pred_check
    _
  $region3: #{_lambda_.12} parent=0 // pred_check_branch
    %12 = sbr.rel (0) target = $region5
  $region4: #{_lambda_.12} parent=0 // pred_region
    _
  $region5: #{_lambda_.12} parent=0 // pred_fallthru
    _
  // Predicated region
  $region6: #{_lambda_.12} parent=0 // pred_check
    _
  $region7: #{_lambda_.12} parent=0 // pred_check_branch
    %14 = sbr.rel (0) target = $region9
  $region8: #{_lambda_.12} parent=0 // pred_region
    _
  $region9: #{_lambda_.12} parent=0 // pred_fallthru
    _
  // Predicated region
  $region10: #{_lambda_.12} parent=0 // pred_check
    _
  $region11: #{_lambda_.12} parent=0 // pred_check_branch
    %16 = sbr.rel (0) target = $region13
  $region12: #{_lambda_.12} parent=0 // pred_region
    _
  $region13: #{_lambda_.12} parent=0 // pred_fallthru
    _
  // Predicated region
  $region14: #{_lambda_.12} parent=0 // pred_check
    _
  $region15: #{_lambda_.12} parent=0 // pred_check_branch
    %18 = sbr.rel (0) target = $region17
  $region16: #{_lambda_.12} parent=0 // pred_region
    _
  $region17: #{_lambda_.12} parent=0 // pred_fallthru
    _
  // Predicated region
  $region18: #{_lambda_.12} parent=0 // pred_check
    _
  $region19: #{_lambda_.12} parent=0 // pred_check_branch
    %20 = sbr.rel (0) target = $region21
  $region20: #{_lambda_.12} parent=0 // pred_region
    _
  $region21: #{_lambda_.12} parent=0 // pred_fallthru
    _
  // Predicated region
  $region22: #{_lambda_.12} parent=0 // pred_check
    _
  $region23: #{_lambda_.12} parent=0 // pred_check_branch
    %22 = sbr.rel (0) target = $region25
  $region24: #{_lambda_.12} parent=0 // pred_region
    _
  $region25: #{_lambda_.12} parent=0 // pred_fallthru
    _
  %v23 = vld [vmem:[%s0] sm:$0xf]
  %v24 = vld [vmem:[%s0 + $0x4] sm:$0xf]
  %v25 = vld [vmem:[%s0 + $0x8] sm:$0xf]
  %v26 = vld [vmem:[%s0 + $0xc] sm:$0xf]
  %v27 = vld [vmem:[%s0 + $0x10] sm:$0xf]
  %v28 = vld [vmem:[%s0 + $0x14] sm:$0xf]
  %v29 = vld [vmem:[%s0 + $0x18] sm:$0xf]
  %v30 = vld [vmem:[%s0 + $0x1c] sm:$0xf]
  %v31 = vld [vmem:[%s0 + $0x20] sm:$0xf]
  %v32 = vld [vmem:[%s0 + $0x24] sm:$0xf]
  %v33 = vld [vmem:[%s0 + $0x28] sm:$0xf]
  %v34 = vld [vmem:[%s0 + $0x2c] sm:$0xf]
  %v35 = vld [vmem:[%s0 + $0x30] sm:$0xf]
  %v36 = vld [vmem:[%s0 + $0x34] sm:$0xf]
  %v37 = vld [vmem:[%s0 + $0x38] sm:$0xf]
  %v38 = vld [vmem:[%s0 + $0x3c] sm:$0xf]
  %v39 = vunpack.c.l.bf16 %v23
  %v40 = vunpack.c.l.bf16 %v24
  %v41 = vunpack.c.l.bf16 %v25
  %v42 = vunpack.c.l.bf16 %v26
  %v43 = vunpack.c.l.bf16 %v27
  %v44 = vunpack.c.l.bf16 %v28
  %v45 = vunpack.c.l.bf16 %v29
  %v46 = vunpack.c.l.bf16 %v30
  %v47 = vunpack.c.l.bf16 %v31
  %v48 = vunpack.c.l.bf16 %v32
  %v49 = vunpack.c.l.bf16 %v33
  %v50 = vunpack.c.l.bf16 %v34
  %v51 = vunpack.c.l.bf16 %v35
  %v52 = vunpack.c.l.bf16 %v36
  %v53 = vunpack.c.l.bf16 %v37
  %v54 = vunpack.c.l.bf16 %v38
  %v55 = vld [vmem:[%s1] sm:$0xf]
  %v56 = vld [vmem:[%s1 + $0x4] sm:$0xf]
  %v57 = vld [vmem:[%s1 + $0x8] sm:$0xf]
  %v58 = vld [vmem:[%s1 + $0xc] sm:$0xf]
  %v59 = vld [vmem:[%s1 + $0x10] sm:$0xf]
  %v60 = vld [vmem:[%s1 + $0x14] sm:$0xf]
  %v61 = vld [vmem:[%s1 + $0x18] sm:$0xf]
  %v62 = vld [vmem:[%s1 + $0x1c] sm:$0xf]
  %v63 = vld [vmem:[%s1 + $0x20] sm:$0xf]
  %v64 = vld [vmem:[%s1 + $0x24] sm:$0xf]
  %v65 = vld [vmem:[%s1 + $0x28] sm:$0xf]
  %v66 = vld [vmem:[%s1 + $0x2c] sm:$0xf]
  %v67 = vld [vmem:[%s1 + $0x30] sm:$0xf]
  %v68 = vld [vmem:[%s1 + $0x34] sm:$0xf]
  %v69 = vld [vmem:[%s1 + $0x38] sm:$0xf]
  %v70 = vld [vmem:[%s1 + $0x3c] sm:$0xf]
  %v71 = vunpack.c.l.bf16 %v55
  %v72 = vunpack.c.l.bf16 %v56
  %v73 = vunpack.c.l.bf16 %v57
  %v74 = vunpack.c.l.bf16 %v58
  %v75 = vunpack.c.l.bf16 %v59
  %v76 = vunpack.c.l.bf16 %v60
  %v77 = vunpack.c.l.bf16 %v61
  %v78 = vunpack.c.l.bf16 %v62
  %v79 = vunpack.c.l.bf16 %v63
  %v80 = vunpack.c.l.bf16 %v64
  %v81 = vunpack.c.l.bf16 %v65
  %v82 = vunpack.c.l.bf16 %v66
  %v83 = vunpack.c.l.bf16 %v67
  %v84 = vunpack.c.l.bf16 %v68
  %v85 = vunpack.c.l.bf16 %v69
  %v86 = vunpack.c.l.bf16 %v70
  %vm119 = vcmask 1041408
  %v120 = vrot.slane %v39, 6
  %v121 = vrot.slane %v71, 6
  %v122 = vrot.slane %v40, 6
  %v123 = vsel %vm119, %v120, %v122
  %v124 = vrot.slane %v72, 6
  %v125 = vsel %vm119, %v121, %v124
  %v126 = vrot.slane %v41, 6
  %v127 = vsel %vm119, %v122, %v126
  %v128 = vrot.slane %v73, 6
  %v129 = vsel %vm119, %v124, %v128
  %v130 = vrot.slane %v42, 6
  %v131 = vsel %vm119, %v126, %v130
  %v132 = vrot.slane %v74, 6
  %v133 = vsel %vm119, %v128, %v132
  %v134 = vrot.slane %v43, 6
  %v135 = vsel %vm119, %v130, %v134
  %v136 = vrot.slane %v75, 6
  %v137 = vsel %vm119, %v132, %v136
  %v138 = vrot.slane %v44, 6
  %v139 = vsel %vm119, %v134, %v138
  %v140 = vrot.slane %v76, 6
  %v141 = vsel %vm119, %v136, %v140
  %v142 = vrot.slane %v45, 6
  %v143 = vsel %vm119, %v138, %v142
  %v144 = vrot.slane %v77, 6
  %v145 = vsel %vm119, %v140, %v144
  %v146 = vrot.slane %v46, 6
  %v147 = vsel %vm119, %v142, %v146
  %v148 = vrot.slane %v78, 6
  %v149 = vsel %vm119, %v144, %v148
  %v150 = vrot.slane %v47, 6
  %v151 = vrot.slane %v79, 6
  %v152 = vrot.slane %v48, 6
  %v153 = vsel %vm119, %v150, %v152
  %v154 = vrot.slane %v80, 6
  %v155 = vsel %vm119, %v151, %v154
  %v156 = vrot.slane %v49, 6
  %v157 = vsel %vm119, %v152, %v156
  %v158 = vrot.slane %v81, 6
  %v159 = vsel %vm119, %v154, %v158
  %v160 = vrot.slane %v50, 6
  %v161 = vsel %vm119, %v156, %v160
  %v162 = vrot.slane %v82, 6
  %v163 = vsel %vm119, %v158, %v162
  %v164 = vrot.slane %v51, 6
  %v165 = vsel %vm119, %v160, %v164
  %v166 = vrot.slane %v83, 6
  %v167 = vsel %vm119, %v162, %v166
  %v168 = vrot.slane %v52, 6
  %v169 = vsel %vm119, %v164, %v168
  %v170 = vrot.slane %v84, 6
  %v171 = vsel %vm119, %v166, %v170
  %v172 = vrot.slane %v53, 6
  %v173 = vsel %vm119, %v168, %v172
  %v174 = vrot.slane %v85, 6
  %v175 = vsel %vm119, %v170, %v174
  %v176 = vrot.slane %v54, 6
  %v177 = vsel %vm119, %v172, %v176
  %v178 = vrot.slane %v86, 6
  %v179 = vsel %vm119, %v174, %v178
  %v216 = vsel %vm119, 0.0, %v120
  %v217 = vsel %vm119, 0.0, %v121
  %v218 = vsel %vm119, 0.0, %v150
  %v219 = vsel %vm119, 0.0, %v151
  %v220 = vsel %vm119, %v146, 0.0
  %v221 = vsel %vm119, %v148, 0.0
  %v222 = vsel %vm119, %v176, 0.0
  %v223 = vsel %vm119, %v178, 0.0
  %vm232 = vcmask 1046528
  %v233 = vrot.slane %v216, 1
  %v234 = vrot.slane %v123, 1
  %v235 = vsel %vm232, %v233, %v234
  %v236 = vrot.slane %v217, 1
  %v237 = vrot.slane %v125, 1
  %v238 = vsel %vm232, %v236, %v237
  %v239 = vrot.slane %v127, 1
  %v240 = vsel %vm232, %v234, %v239
  %v241 = vrot.slane %v129, 1
  %v242 = vsel %vm232, %v237, %v241
  %v243 = vrot.slane %v131, 1
  %v244 = vsel %vm232, %v239, %v243
  %v245 = vrot.slane %v133, 1
  %v246 = vsel %vm232, %v241, %v245
  %v247 = vrot.slane %v135, 1
  %v248 = vsel %vm232, %v243, %v247
  %v249 = vrot.slane %v137, 1
  %v250 = vsel %vm232, %v245, %v249
  %v251 = vrot.slane %v139, 1
  %v252 = vsel %vm232, %v247, %v251
  %v253 = vrot.slane %v141, 1
  %v254 = vsel %vm232, %v249, %v253
  %v255 = vrot.slane %v143, 1
  %v256 = vsel %vm232, %v251, %v255
  %v257 = vrot.slane %v145, 1
  %v258 = vsel %vm232, %v253, %v257
  %v259 = vrot.slane %v147, 1
  %v260 = vsel %vm232, %v255, %v259
  %v261 = vrot.slane %v149, 1
  %v262 = vsel %vm232, %v257, %v261
  %v263 = vrot.slane %v220, 1
  %v264 = vsel %vm232, %v259, %v263
  %v265 = vrot.slane %v221, 1
  %v266 = vsel %vm232, %v261, %v265
  %v267 = vrot.slane %v218, 1
  %v268 = vrot.slane %v153, 1
  %v269 = vsel %vm232, %v267, %v268
  %v270 = vrot.slane %v219, 1
  %v271 = vrot.slane %v155, 1
  %v272 = vsel %vm232, %v270, %v271
  %v273 = vrot.slane %v157, 1
  %v274 = vsel %vm232, %v268, %v273
  %v275 = vrot.slane %v159, 1
  %v276 = vsel %vm232, %v271, %v275
  %v277 = vrot.slane %v161, 1
  %v278 = vsel %vm232, %v273, %v277
  %v279 = vrot.slane %v163, 1
  %v280 = vsel %vm232, %v275, %v279
  %v281 = vrot.slane %v165, 1
  %v282 = vsel %vm232, %v277, %v281
  %v283 = vrot.slane %v167, 1
  %v284 = vsel %vm232, %v279, %v283
  %v285 = vrot.slane %v169, 1
  %v286 = vsel %vm232, %v281, %v285
  %v287 = vrot.slane %v171, 1
  %v288 = vsel %vm232, %v283, %v287
  %v289 = vrot.slane %v173, 1
  %v290 = vsel %vm232, %v285, %v289
  %v291 = vrot.slane %v175, 1
  %v292 = vsel %vm232, %v287, %v291
  %v293 = vrot.slane %v177, 1
  %v294 = vsel %vm232, %v289, %v293
  %v295 = vrot.slane %v179, 1
  %v296 = vsel %vm232, %v291, %v295
  %v297 = vrot.slane %v222, 1
  %v298 = vsel %vm232, %v293, %v297
  %v299 = vrot.slane %v223, 1
  %v300 = vsel %vm232, %v295, %v299
  %vm333 = vcmask 1045504
  %v334 = vrot.slane %v216, 2
  %v335 = vrot.slane %v123, 2
  %v336 = vsel %vm333, %v334, %v335
  %v337 = vrot.slane %v217, 2
  %v338 = vrot.slane %v125, 2
  %v339 = vsel %vm333, %v337, %v338
  %v340 = vrot.slane %v127, 2
  %v341 = vsel %vm333, %v335, %v340
  %v342 = vrot.slane %v129, 2
  %v343 = vsel %vm333, %v338, %v342
  %v344 = vrot.slane %v131, 2
  %v345 = vsel %vm333, %v340, %v344
  %v346 = vrot.slane %v133, 2
  %v347 = vsel %vm333, %v342, %v346
  %v348 = vrot.slane %v135, 2
  %v349 = vsel %vm333, %v344, %v348
  %v350 = vrot.slane %v137, 2
  %v351 = vsel %vm333, %v346, %v350
  %v352 = vrot.slane %v139, 2
  %v353 = vsel %vm333, %v348, %v352
  %v354 = vrot.slane %v141, 2
  %v355 = vsel %vm333, %v350, %v354
  %v356 = vrot.slane %v143, 2
  %v357 = vsel %vm333, %v352, %v356
  %v358 = vrot.slane %v145, 2
  %v359 = vsel %vm333, %v354, %v358
  %v360 = vrot.slane %v147, 2
  %v361 = vsel %vm333, %v356, %v360
  %v362 = vrot.slane %v149, 2
  %v363 = vsel %vm333, %v358, %v362
  %v364 = vrot.slane %v220, 2
  %v365 = vsel %vm333, %v360, %v364
  %v366 = vrot.slane %v221, 2
  %v367 = vsel %vm333, %v362, %v366
  %v368 = vrot.slane %v218, 2
  %v369 = vrot.slane %v153, 2
  %v370 = vsel %vm333, %v368, %v369
  %v371 = vrot.slane %v219, 2
  %v372 = vrot.slane %v155, 2
  %v373 = vsel %vm333, %v371, %v372
  %v374 = vrot.slane %v157, 2
  %v375 = vsel %vm333, %v369, %v374
  %v376 = vrot.slane %v159, 2
  %v377 = vsel %vm333, %v372, %v376
  %v378 = vrot.slane %v161, 2
  %v379 = vsel %vm333, %v374, %v378
  %v380 = vrot.slane %v163, 2
  %v381 = vsel %vm333, %v376, %v380
  %v382 = vrot.slane %v165, 2
  %v383 = vsel %vm333, %v378, %v382
  %v384 = vrot.slane %v167, 2
  %v385 = vsel %vm333, %v380, %v384
  %v386 = vrot.slane %v169, 2
  %v387 = vsel %vm333, %v382, %v386
  %v388 = vrot.slane %v171, 2
  %v389 = vsel %vm333, %v384, %v388
  %v390 = vrot.slane %v173, 2
  %v391 = vsel %vm333, %v386, %v390
  %v392 = vrot.slane %v175, 2
  %v393 = vsel %vm333, %v388, %v392
  %v394 = vrot.slane %v177, 2
  %v395 = vsel %vm333, %v390, %v394
  %v396 = vrot.slane %v179, 2
  %v397 = vsel %vm333, %v392, %v396
  %v398 = vrot.slane %v222, 2
  %v399 = vsel %vm333, %v394, %v398
  %v400 = vrot.slane %v223, 2
  %v401 = vsel %vm333, %v396, %v400
  %vm434 = vcmask 1044480
  %v435 = vrot.slane %v216, 3
  %v436 = vrot.slane %v123, 3
  %v437 = vsel %vm434, %v435, %v436
  %v438 = vrot.slane %v217, 3
  %v439 = vrot.slane %v125, 3
  %v440 = vsel %vm434, %v438, %v439
  %v441 = vrot.slane %v127, 3
  %v442 = vsel %vm434, %v436, %v441
  %v443 = vrot.slane %v129, 3
  %v444 = vsel %vm434, %v439, %v443
  %v445 = vrot.slane %v131, 3
  %v446 = vsel %vm434, %v441, %v445
  %v447 = vrot.slane %v133, 3
  %v448 = vsel %vm434, %v443, %v447
  %v449 = vrot.slane %v135, 3
  %v450 = vsel %vm434, %v445, %v449
  %v451 = vrot.slane %v137, 3
  %v452 = vsel %vm434, %v447, %v451
  %v453 = vrot.slane %v139, 3
  %v454 = vsel %vm434, %v449, %v453
  %v455 = vrot.slane %v141, 3
  %v456 = vsel %vm434, %v451, %v455
  %v457 = vrot.slane %v143, 3
  %v458 = vsel %vm434, %v453, %v457
  %v459 = vrot.slane %v145, 3
  %v460 = vsel %vm434, %v455, %v459
  %v461 = vrot.slane %v147, 3
  %v462 = vsel %vm434, %v457, %v461
  %v463 = vrot.slane %v149, 3
  %v464 = vsel %vm434, %v459, %v463
  %v465 = vrot.slane %v220, 3
  %v466 = vsel %vm434, %v461, %v465
  %v467 = vrot.slane %v221, 3
  %v468 = vsel %vm434, %v463, %v467
  %v469 = vrot.slane %v218, 3
  %v470 = vrot.slane %v153, 3
  %v471 = vsel %vm434, %v469, %v470
  %v472 = vrot.slane %v219, 3
  %v473 = vrot.slane %v155, 3
  %v474 = vsel %vm434, %v472, %v473
  %v475 = vrot.slane %v157, 3
  %v476 = vsel %vm434, %v470, %v475
  %v477 = vrot.slane %v159, 3
  %v478 = vsel %vm434, %v473, %v477
  %v479 = vrot.slane %v161, 3
  %v480 = vsel %vm434, %v475, %v479
  %v481 = vrot.slane %v163, 3
  %v482 = vsel %vm434, %v477, %v481
  %v483 = vrot.slane %v165, 3
  %v484 = vsel %vm434, %v479, %v483
  %v485 = vrot.slane %v167, 3
  %v486 = vsel %vm434, %v481, %v485
  %v487 = vrot.slane %v169, 3
  %v488 = vsel %vm434, %v483, %v487
  %v489 = vrot.slane %v171, 3
  %v490 = vsel %vm434, %v485, %v489
  %v491 = vrot.slane %v173, 3
  %v492 = vsel %vm434, %v487, %v491
  %v493 = vrot.slane %v175, 3
  %v494 = vsel %vm434, %v489, %v493
  %v495 = vrot.slane %v177, 3
  %v496 = vsel %vm434, %v491, %v495
  %v497 = vrot.slane %v179, 3
  %v498 = vsel %vm434, %v493, %v497
  %v499 = vrot.slane %v222, 3
  %v500 = vsel %vm434, %v495, %v499
  %v501 = vrot.slane %v223, 3
  %v502 = vsel %vm434, %v497, %v501
  %vm535 = vcmask 1043456
  %v536 = vrot.slane %v216, 4
  %v537 = vrot.slane %v123, 4
  %v538 = vsel %vm535, %v536, %v537
  %v539 = vrot.slane %v217, 4
  %v540 = vrot.slane %v125, 4
  %v541 = vsel %vm535, %v539, %v540
  %v542 = vrot.slane %v127, 4
  %v543 = vsel %vm535, %v537, %v542
  %v544 = vrot.slane %v129, 4
  %v545 = vsel %vm535, %v540, %v544
  %v546 = vrot.slane %v131, 4
  %v547 = vsel %vm535, %v542, %v546
  %v548 = vrot.slane %v133, 4
  %v549 = vsel %vm535, %v544, %v548
  %v550 = vrot.slane %v135, 4
  %v551 = vsel %vm535, %v546, %v550
  %v552 = vrot.slane %v137, 4
  %v553 = vsel %vm535, %v548, %v552
  %v554 = vrot.slane %v139, 4
  %v555 = vsel %vm535, %v550, %v554
  %v556 = vrot.slane %v141, 4
  %v557 = vsel %vm535, %v552, %v556
  %v558 = vrot.slane %v143, 4
  %v559 = vsel %vm535, %v554, %v558
  %v560 = vrot.slane %v145, 4
  %v561 = vsel %vm535, %v556, %v560
  %v562 = vrot.slane %v147, 4
  %v563 = vsel %vm535, %v558, %v562
  %v564 = vrot.slane %v149, 4
  %v565 = vsel %vm535, %v560, %v564
  %v566 = vrot.slane %v220, 4
  %v567 = vsel %vm535, %v562, %v566
  %v568 = vrot.slane %v221, 4
  %v569 = vsel %vm535, %v564, %v568
  %v570 = vrot.slane %v218, 4
  %v571 = vrot.slane %v153, 4
  %v572 = vsel %vm535, %v570, %v571
  %v573 = vrot.slane %v219, 4
  %v574 = vrot.slane %v155, 4
  %v575 = vsel %vm535, %v573, %v574
  %v576 = vrot.slane %v157, 4
  %v577 = vsel %vm535, %v571, %v576
  %v578 = vrot.slane %v159, 4
  %v579 = vsel %vm535, %v574, %v578
  %v580 = vrot.slane %v161, 4
  %v581 = vsel %vm535, %v576, %v580
  %v582 = vrot.slane %v163, 4
  %v583 = vsel %vm535, %v578, %v582
  %v584 = vrot.slane %v165, 4
  %v585 = vsel %vm535, %v580, %v584
  %v586 = vrot.slane %v167, 4
  %v587 = vsel %vm535, %v582, %v586
  %v588 = vrot.slane %v169, 4
  %v589 = vsel %vm535, %v584, %v588
  %v590 = vrot.slane %v171, 4
  %v591 = vsel %vm535, %v586, %v590
  %v592 = vrot.slane %v173, 4
  %v593 = vsel %vm535, %v588, %v592
  %v594 = vrot.slane %v175, 4
  %v595 = vsel %vm535, %v590, %v594
  %v596 = vrot.slane %v177, 4
  %v597 = vsel %vm535, %v592, %v596
  %v598 = vrot.slane %v179, 4
  %v599 = vsel %vm535, %v594, %v598
  %v600 = vrot.slane %v222, 4
  %v601 = vsel %vm535, %v596, %v600
  %v602 = vrot.slane %v223, 4
  %v603 = vsel %vm535, %v598, %v602
  %v636 = vpack.c.bf16 %v123, %v216
  %v637 = vpack.c.bf16 %v125, %v217
  %v638 = vpack.c.bf16 %v240, %v235
  %v639 = vpack.c.bf16 %v242, %v238
  %v640 = vpack.c.bf16 %v341, %v336
  %v641 = vpack.c.bf16 %v343, %v339
  %v642 = vpack.c.bf16 %v442, %v437
  %v643 = vpack.c.bf16 %v444, %v440
  %v644 = vpack.c.bf16 %v543, %v538
  %v645 = vpack.c.bf16 %v545, %v541
  %v646 = vpack.c.bf16 %v131, %v127
  %v647 = vpack.c.bf16 %v133, %v129
  %v648 = vpack.c.bf16 %v248, %v244
  %v649 = vpack.c.bf16 %v250, %v246
  %v650 = vpack.c.bf16 %v349, %v345
  %v651 = vpack.c.bf16 %v351, %v347
  %v652 = vpack.c.bf16 %v450, %v446
  %v653 = vpack.c.bf16 %v452, %v448
  %v654 = vpack.c.bf16 %v551, %v547
  %v655 = vpack.c.bf16 %v553, %v549
  %v656 = vpack.c.bf16 %v139, %v135
  %v657 = vpack.c.bf16 %v141, %v137
  %v658 = vpack.c.bf16 %v256, %v252
  %v659 = vpack.c.bf16 %v258, %v254
  %v660 = vpack.c.bf16 %v357, %v353
  %v661 = vpack.c.bf16 %v359, %v355
  %v662 = vpack.c.bf16 %v458, %v454
  %v663 = vpack.c.bf16 %v460, %v456
  %v664 = vpack.c.bf16 %v559, %v555
  %v665 = vpack.c.bf16 %v561, %v557
  %v666 = vpack.c.bf16 %v147, %v143
  %v667 = vpack.c.bf16 %v149, %v145
  %v668 = vpack.c.bf16 %v264, %v260
  %v669 = vpack.c.bf16 %v266, %v262
  %v670 = vpack.c.bf16 %v365, %v361
  %v671 = vpack.c.bf16 %v367, %v363
  %v672 = vpack.c.bf16 %v466, %v462
  %v673 = vpack.c.bf16 %v468, %v464
  %v674 = vpack.c.bf16 %v567, %v563
  %v675 = vpack.c.bf16 %v569, %v565
  %v676 = vpack.c.bf16 %v153, %v218
  %v677 = vpack.c.bf16 %v155, %v219
  %v678 = vpack.c.bf16 %v274, %v269
  %v679 = vpack.c.bf16 %v276, %v272
  %v680 = vpack.c.bf16 %v375, %v370
  %v681 = vpack.c.bf16 %v377, %v373
  %v682 = vpack.c.bf16 %v476, %v471
  %v683 = vpack.c.bf16 %v478, %v474
  %v684 = vpack.c.bf16 %v577, %v572
  %v685 = vpack.c.bf16 %v579, %v575
  %v686 = vpack.c.bf16 %v161, %v157
  %v687 = vpack.c.bf16 %v163, %v159
  %v688 = vpack.c.bf16 %v282, %v278
  %v689 = vpack.c.bf16 %v284, %v280
  %v690 = vpack.c.bf16 %v383, %v379
  %v691 = vpack.c.bf16 %v385, %v381
  %v692 = vpack.c.bf16 %v484, %v480
  %v693 = vpack.c.bf16 %v486, %v482
  %v694 = vpack.c.bf16 %v585, %v581
  %v695 = vpack.c.bf16 %v587, %v583
  %v696 = vpack.c.bf16 %v169, %v165
  %v697 = vpack.c.bf16 %v171, %v167
  %v698 = vpack.c.bf16 %v290, %v286
  %v699 = vpack.c.bf16 %v292, %v288
  %v700 = vpack.c.bf16 %v391, %v387
  %v701 = vpack.c.bf16 %v393, %v389
  %v702 = vpack.c.bf16 %v492, %v488
  %v703 = vpack.c.bf16 %v494, %v490
  %v704 = vpack.c.bf16 %v593, %v589
  %v705 = vpack.c.bf16 %v595, %v591
  %v706 = vpack.c.bf16 %v177, %v173
  %v707 = vpack.c.bf16 %v179, %v175
  %v708 = vpack.c.bf16 %v298, %v294
  %v709 = vpack.c.bf16 %v300, %v296
  %v710 = vpack.c.bf16 %v399, %v395
  %v711 = vpack.c.bf16 %v401, %v397
  %v712 = vpack.c.bf16 %v500, %v496
  %v713 = vpack.c.bf16 %v502, %v498
  %v714 = vpack.c.bf16 %v601, %v597
  %v715 = vpack.c.bf16 %v603, %v599
  %v716 = vld [vmem:[%s2] sm:$0xf]
  %v717 = vld [vmem:[%s2 + $0x4] sm:$0xf]
  %v718 = vld [vmem:[%s2 + $0x8] sm:$0xf]
  %v719 = vld [vmem:[%s2 + $0xc] sm:$0xf]
  %v720 = vld [vmem:[%s2 + $0x10] sm:$0xf]
  %v721 = vld [vmem:[%s2 + $0x14] sm:$0xf]
  %v722 = vld [vmem:[%s2 + $0x18] sm:$0xf]
  %v723 = vld [vmem:[%s2 + $0x1c] sm:$0xf]
  %v724 = vld [vmem:[%s2 + $0x20] sm:$0xf]
  %v725 = vld [vmem:[%s2 + $0x24] sm:$0xf]
  %v726 = vld [vmem:[%s2 + $0x28] sm:$0xf]
  %v727 = vld [vmem:[%s2 + $0x2c] sm:$0xf]
  %v728 = vld [vmem:[%s2 + $0x30] sm:$0xf]
  %v729 = vld [vmem:[%s2 + $0x34] sm:$0xf]
  %v730 = vld [vmem:[%s2 + $0x38] sm:$0xf]
  %v731 = vld [vmem:[%s2 + $0x3c] sm:$0xf]
  %v732 = vld [vmem:[%s2 + $0x40] sm:$0xf]
  %v733 = vld [vmem:[%s2 + $0x44] sm:$0xf]
  %v734 = vld [vmem:[%s2 + $0x48] sm:$0xf]
  %v735 = vld [vmem:[%s2 + $0x4c] sm:$0xf]
  %v736 = vld [vmem:[%s2 + $0x50] sm:$0xf]
  %v737 = vld [vmem:[%s2 + $0x54] sm:$0xf]
  %v738 = vld [vmem:[%s2 + $0x58] sm:$0xf]
  %v739 = vld [vmem:[%s2 + $0x5c] sm:$0xf]
  %v740 = vld [vmem:[%s2 + $0x60] sm:$0xf]
  %v741 = vld [vmem:[%s2 + $0x64] sm:$0xf]
  %v742 = vld [vmem:[%s2 + $0x68] sm:$0xf]
  %v743 = vld [vmem:[%s2 + $0x6c] sm:$0xf]
  %v744 = vld [vmem:[%s2 + $0x70] sm:$0xf]
  %v745 = vld [vmem:[%s2 + $0x74] sm:$0xf]
  %v746 = vld [vmem:[%s2 + $0x78] sm:$0xf]
  %v747 = vld [vmem:[%s2 + $0x7c] sm:$0xf]
  %v748 = vld [vmem:[%s2 + $0x80] sm:$0xf]
  %v749 = vld [vmem:[%s2 + $0x84] sm:$0xf]
  %v750 = vld [vmem:[%s2 + $0x88] sm:$0xf]
  %v751 = vld [vmem:[%s2 + $0x8c] sm:$0xf]
  %v752 = vld [vmem:[%s2 + $0x90] sm:$0xf]
  %v753 = vld [vmem:[%s2 + $0x94] sm:$0xf]
  %v754 = vld [vmem:[%s2 + $0x98] sm:$0xf]
  %v755 = vld [vmem:[%s2 + $0x9c] sm:$0xf]
  %v756 = vld [vmem:[%s2 + $0xa0] sm:$0xf]
  %v757 = vld [vmem:[%s2 + $0xa4] sm:$0xf]
  %v758 = vld [vmem:[%s2 + $0xa8] sm:$0xf]
  %v759 = vld [vmem:[%s2 + $0xac] sm:$0xf]
  %v760 = vld [vmem:[%s2 + $0xb0] sm:$0xf]
  %v761 = vld [vmem:[%s2 + $0xb4] sm:$0xf]
  %v762 = vld [vmem:[%s2 + $0xb8] sm:$0xf]
  %v763 = vld [vmem:[%s2 + $0xbc] sm:$0xf]
  %v764 = vld [vmem:[%s2 + $0xc0] sm:$0xf]
  %v765 = vld [vmem:[%s2 + $0xc4] sm:$0xf]
  %v766 = vld [vmem:[%s2 + $0xc8] sm:$0xf]
  %v767 = vld [vmem:[%s2 + $0xcc] sm:$0xf]
  %v768 = vld [vmem:[%s2 + $0xd0] sm:$0xf]
  %v769 = vld [vmem:[%s2 + $0xd4] sm:$0xf]
  %v770 = vld [vmem:[%s2 + $0xd8] sm:$0xf]
  %v771 = vld [vmem:[%s2 + $0xdc] sm:$0xf]
  %v772 = vld [vmem:[%s2 + $0xe0] sm:$0xf]
  %v773 = vld [vmem:[%s2 + $0xe4] sm:$0xf]
  %v774 = vld [vmem:[%s2 + $0xe8] sm:$0xf]
  %v775 = vld [vmem:[%s2 + $0xec] sm:$0xf]
  %v776 = vld [vmem:[%s2 + $0xf0] sm:$0xf]
  %v777 = vld [vmem:[%s2 + $0xf4] sm:$0xf]
  %v778 = vld [vmem:[%s2 + $0xf8] sm:$0xf]
  %v779 = vld [vmem:[%s2 + $0xfc] sm:$0xf]
  %v780 = vld [vmem:[%s2 + $0x100] sm:$0xf]
  %v781 = vld [vmem:[%s2 + $0x104] sm:$0xf]
  %v782 = vld [vmem:[%s2 + $0x108] sm:$0xf]
  %v783 = vld [vmem:[%s2 + $0x10c] sm:$0xf]
  %v784 = vld [vmem:[%s2 + $0x110] sm:$0xf]
  %v785 = vld [vmem:[%s2 + $0x114] sm:$0xf]
  %v786 = vld [vmem:[%s2 + $0x118] sm:$0xf]
  %v787 = vld [vmem:[%s2 + $0x11c] sm:$0xf]
  %v788 = vld [vmem:[%s2 + $0x120] sm:$0xf]
  %v789 = vld [vmem:[%s2 + $0x124] sm:$0xf]
  %v790 = vld [vmem:[%s2 + $0x128] sm:$0xf]
  %v791 = vld [vmem:[%s2 + $0x12c] sm:$0xf]
  %v792 = vld [vmem:[%s2 + $0x130] sm:$0xf]
  %v793 = vld [vmem:[%s2 + $0x134] sm:$0xf]
  %v794 = vld [vmem:[%s2 + $0x138] sm:$0xf]
  %v795 = vld [vmem:[%s2 + $0x13c] sm:$0xf]
  %v796 = vld [vmem:[%s2 + $0x140] sm:$0xf]
  %v797 = vld [vmem:[%s2 + $0x144] sm:$0xf]
  %v798 = vld [vmem:[%s2 + $0x148] sm:$0xf]
  %v799 = vld [vmem:[%s2 + $0x14c] sm:$0xf]
  %v800 = vld [vmem:[%s2 + $0x150] sm:$0xf]
  %v801 = vld [vmem:[%s2 + $0x154] sm:$0xf]
  %v802 = vld [vmem:[%s2 + $0x158] sm:$0xf]
  %v803 = vld [vmem:[%s2 + $0x15c] sm:$0xf]
  %v804 = vld [vmem:[%s2 + $0x160] sm:$0xf]
  %v805 = vld [vmem:[%s2 + $0x164] sm:$0xf]
  %v806 = vld [vmem:[%s2 + $0x168] sm:$0xf]
  %v807 = vld [vmem:[%s2 + $0x16c] sm:$0xf]
  %v808 = vld [vmem:[%s2 + $0x170] sm:$0xf]
  %v809 = vld [vmem:[%s2 + $0x174] sm:$0xf]
  %v810 = vld [vmem:[%s2 + $0x178] sm:$0xf]
  %v811 = vld [vmem:[%s2 + $0x17c] sm:$0xf]
  %v812 = vld [vmem:[%s2 + $0x180] sm:$0xf]
  %v813 = vld [vmem:[%s2 + $0x184] sm:$0xf]
  %v814 = vld [vmem:[%s2 + $0x188] sm:$0xf]
  %v815 = vld [vmem:[%s2 + $0x18c] sm:$0xf]
  %v816 = vld [vmem:[%s2 + $0x190] sm:$0xf]
  %v817 = vld [vmem:[%s2 + $0x194] sm:$0xf]
  %v818 = vld [vmem:[%s2 + $0x198] sm:$0xf]
  %v819 = vld [vmem:[%s2 + $0x19c] sm:$0xf]
  %v820 = vld [vmem:[%s2 + $0x1a0] sm:$0xf]
  %v821 = vld [vmem:[%s2 + $0x1a4] sm:$0xf]
  %v822 = vld [vmem:[%s2 + $0x1a8] sm:$0xf]
  %v823 = vld [vmem:[%s2 + $0x1ac] sm:$0xf]
  %v824 = vld [vmem:[%s2 + $0x1b0] sm:$0xf]
  %v825 = vld [vmem:[%s2 + $0x1b4] sm:$0xf]
  %v826 = vld [vmem:[%s2 + $0x1b8] sm:$0xf]
  %v827 = vld [vmem:[%s2 + $0x1bc] sm:$0xf]
  %v828 = vld [vmem:[%s2 + $0x1c0] sm:$0xf]
  %v829 = vld [vmem:[%s2 + $0x1c4] sm:$0xf]
  %v830 = vld [vmem:[%s2 + $0x1c8] sm:$0xf]
  %v831 = vld [vmem:[%s2 + $0x1cc] sm:$0xf]
  %v832 = vld [vmem:[%s2 + $0x1d0] sm:$0xf]
  %v833 = vld [vmem:[%s2 + $0x1d4] sm:$0xf]
  %v834 = vld [vmem:[%s2 + $0x1d8] sm:$0xf]
  %v835 = vld [vmem:[%s2 + $0x1dc] sm:$0xf]
  %v836 = vld [vmem:[%s2 + $0x1e0] sm:$0xf]
  %v837 = vld [vmem:[%s2 + $0x1e4] sm:$0xf]
  %v838 = vld [vmem:[%s2 + $0x1e8] sm:$0xf]
  %v839 = vld [vmem:[%s2 + $0x1ec] sm:$0xf]
  %v840 = vld [vmem:[%s2 + $0x1f0] sm:$0xf]
  %v841 = vld [vmem:[%s2 + $0x1f4] sm:$0xf]
  %v842 = vld [vmem:[%s2 + $0x1f8] sm:$0xf]
  %v843 = vld [vmem:[%s2 + $0x1fc] sm:$0xf]
  %v844 = vld [vmem:[%s2 + $0x200] sm:$0xf]
  %v845 = vld [vmem:[%s2 + $0x204] sm:$0xf]
  %v846 = vld [vmem:[%s2 + $0x208] sm:$0xf]
  %v847 = vld [vmem:[%s2 + $0x20c] sm:$0xf]
  %v848 = vld [vmem:[%s2 + $0x210] sm:$0xf]
  %v849 = vld [vmem:[%s2 + $0x214] sm:$0xf]
  %v850 = vld [vmem:[%s2 + $0x218] sm:$0xf]
  %v851 = vld [vmem:[%s2 + $0x21c] sm:$0xf]
  %v852 = vld [vmem:[%s2 + $0x220] sm:$0xf]
  %v853 = vld [vmem:[%s2 + $0x224] sm:$0xf]
  %v854 = vld [vmem:[%s2 + $0x228] sm:$0xf]
  %v855 = vld [vmem:[%s2 + $0x22c] sm:$0xf]
  %v856 = vld [vmem:[%s2 + $0x230] sm:$0xf]
  %v857 = vld [vmem:[%s2 + $0x234] sm:$0xf]
  %v858 = vld [vmem:[%s2 + $0x238] sm:$0xf]
  %v859 = vld [vmem:[%s2 + $0x23c] sm:$0xf]
  %v860 = vld [vmem:[%s2 + $0x240] sm:$0xf]
  %v861 = vld [vmem:[%s2 + $0x244] sm:$0xf]
  %v862 = vld [vmem:[%s2 + $0x248] sm:$0xf]
  %v863 = vld [vmem:[%s2 + $0x24c] sm:$0xf]
  %v864 = vld [vmem:[%s2 + $0x250] sm:$0xf]
  %v865 = vld [vmem:[%s2 + $0x254] sm:$0xf]
  %v866 = vld [vmem:[%s2 + $0x258] sm:$0xf]
  %v867 = vld [vmem:[%s2 + $0x25c] sm:$0xf]
  %v868 = vld [vmem:[%s2 + $0x260] sm:$0xf]
  %v869 = vld [vmem:[%s2 + $0x264] sm:$0xf]
  %v870 = vld [vmem:[%s2 + $0x268] sm:$0xf]
  %v871 = vld [vmem:[%s2 + $0x26c] sm:$0xf]
  %v872 = vld [vmem:[%s2 + $0x270] sm:$0xf]
  %v873 = vld [vmem:[%s2 + $0x274] sm:$0xf]
  %v874 = vld [vmem:[%s2 + $0x278] sm:$0xf]
  %v875 = vld [vmem:[%s2 + $0x27c] sm:$0xf]
  %v876 = vld [vmem:[%s3] sm:$0x1]
  %v878 = vperm.slane %v876, 0
  %v1040 = vunpack.c.l.b16 %v716
  %v1041 = vunpack.c.l.b16 %v717
  %v1042 = vunpack.c.l.b16 %v718
  %v1043 = vunpack.c.l.b16 %v719
  %v1044 = vunpack.c.l.b16 %v720
  %v1045 = vunpack.c.l.b16 %v721
  %v1046 = vunpack.c.l.b16 %v722
  %v1047 = vunpack.c.l.b16 %v723
  %v1048 = vunpack.c.l.b16 %v724
  %v1049 = vunpack.c.l.b16 %v725
  %v1050 = vunpack.c.l.b16 %v726
  %v1051 = vunpack.c.l.b16 %v727
  %v1052 = vunpack.c.l.b16 %v728
  %v1053 = vunpack.c.l.b16 %v729
  %v1054 = vunpack.c.l.b16 %v730
  %v1055 = vunpack.c.l.b16 %v731
  %v1056 = vunpack.c.l.b16 %v732
  %v1057 = vunpack.c.l.b16 %v733
  %v1058 = vunpack.c.l.b16 %v734
  %v1059 = vunpack.c.l.b16 %v735
  %v1060 = vunpack.c.l.b16 %v736
  %v1061 = vunpack.c.l.b16 %v737
  %v1062 = vunpack.c.l.b16 %v738
  %v1063 = vunpack.c.l.b16 %v739
  %v1064 = vunpack.c.l.b16 %v740
  %v1065 = vunpack.c.l.b16 %v741
  %v1066 = vunpack.c.l.b16 %v742
  %v1067 = vunpack.c.l.b16 %v743
  %v1068 = vunpack.c.l.b16 %v744
  %v1069 = vunpack.c.l.b16 %v745
  %v1070 = vunpack.c.l.b16 %v746
  %v1071 = vunpack.c.l.b16 %v747
  %v1072 = vunpack.c.l.b16 %v748
  %v1073 = vunpack.c.l.b16 %v749
  %v1074 = vunpack.c.l.b16 %v750
  %v1075 = vunpack.c.l.b16 %v751
  %v1076 = vunpack.c.l.b16 %v752
  %v1077 = vunpack.c.l.b16 %v753
  %v1078 = vunpack.c.l.b16 %v754
  %v1079 = vunpack.c.l.b16 %v755
  %v1080 = vunpack.c.l.b16 %v756
  %v1081 = vunpack.c.l.b16 %v757
  %v1082 = vunpack.c.l.b16 %v758
  %v1083 = vunpack.c.l.b16 %v759
  %v1084 = vunpack.c.l.b16 %v760
  %v1085 = vunpack.c.l.b16 %v761
  %v1086 = vunpack.c.l.b16 %v762
  %v1087 = vunpack.c.l.b16 %v763
  %v1088 = vunpack.c.l.b16 %v764
  %v1089 = vunpack.c.l.b16 %v765
  %v1090 = vunpack.c.l.b16 %v766
  %v1091 = vunpack.c.l.b16 %v767
  %v1092 = vunpack.c.l.b16 %v768
  %v1093 = vunpack.c.l.b16 %v769
  %v1094 = vunpack.c.l.b16 %v770
  %v1095 = vunpack.c.l.b16 %v771
  %v1096 = vunpack.c.l.b16 %v772
  %v1097 = vunpack.c.l.b16 %v773
  %v1098 = vunpack.c.l.b16 %v774
  %v1099 = vunpack.c.l.b16 %v775
  %v1100 = vunpack.c.l.b16 %v776
  %v1101 = vunpack.c.l.b16 %v777
  %v1102 = vunpack.c.l.b16 %v778
  %v1103 = vunpack.c.l.b16 %v779
  %v1104 = vunpack.c.l.b16 %v780
  %v1105 = vunpack.c.l.b16 %v781
  %v1106 = vunpack.c.l.b16 %v782
  %v1107 = vunpack.c.l.b16 %v783
  %v1108 = vunpack.c.l.b16 %v784
  %v1109 = vunpack.c.l.b16 %v785
  %v1110 = vunpack.c.l.b16 %v786
  %v1111 = vunpack.c.l.b16 %v787
  %v1112 = vunpack.c.l.b16 %v788
  %v1113 = vunpack.c.l.b16 %v789
  %v1114 = vunpack.c.l.b16 %v790
  %v1115 = vunpack.c.l.b16 %v791
  %v1116 = vunpack.c.l.b16 %v792
  %v1117 = vunpack.c.l.b16 %v793
  %v1118 = vunpack.c.l.b16 %v794
  %v1119 = vunpack.c.l.b16 %v795
  %v1120 = vunpack.c.l.b16 %v796
  %v1121 = vunpack.c.l.b16 %v797
  %v1122 = vunpack.c.l.b16 %v798
  %v1123 = vunpack.c.l.b16 %v799
  %v1124 = vunpack.c.l.b16 %v800
  %v1125 = vunpack.c.l.b16 %v801
  %v1126 = vunpack.c.l.b16 %v802
  %v1127 = vunpack.c.l.b16 %v803
  %v1128 = vunpack.c.l.b16 %v804
  %v1129 = vunpack.c.l.b16 %v805
  %v1130 = vunpack.c.l.b16 %v806
  %v1131 = vunpack.c.l.b16 %v807
  %v1132 = vunpack.c.l.b16 %v808
  %v1133 = vunpack.c.l.b16 %v809
  %v1134 = vunpack.c.l.b16 %v810
  %v1135 = vunpack.c.l.b16 %v811
  %v1136 = vunpack.c.l.b16 %v812
  %v1137 = vunpack.c.l.b16 %v813
  %v1138 = vunpack.c.l.b16 %v814
  %v1139 = vunpack.c.l.b16 %v815
  %v1140 = vunpack.c.l.b16 %v816
  %v1141 = vunpack.c.l.b16 %v817
  %v1142 = vunpack.c.l.b16 %v818
  %v1143 = vunpack.c.l.b16 %v819
  %v1144 = vunpack.c.l.b16 %v820
  %v1145 = vunpack.c.l.b16 %v821
  %v1146 = vunpack.c.l.b16 %v822
  %v1147 = vunpack.c.l.b16 %v823
  %v1148 = vunpack.c.l.b16 %v824
  %v1149 = vunpack.c.l.b16 %v825
  %v1150 = vunpack.c.l.b16 %v826
  %v1151 = vunpack.c.l.b16 %v827
  %v1152 = vunpack.c.l.b16 %v828
  %v1153 = vunpack.c.l.b16 %v829
  %v1154 = vunpack.c.l.b16 %v830
  %v1155 = vunpack.c.l.b16 %v831
  %v1156 = vunpack.c.l.b16 %v832
  %v1157 = vunpack.c.l.b16 %v833
  %v1158 = vunpack.c.l.b16 %v834
  %v1159 = vunpack.c.l.b16 %v835
  %v1160 = vunpack.c.l.b16 %v836
  %v1161 = vunpack.c.l.b16 %v837
  %v1162 = vunpack.c.l.b16 %v838
  %v1163 = vunpack.c.l.b16 %v839
  %v1164 = vunpack.c.l.b16 %v840
  %v1165 = vunpack.c.l.b16 %v841
  %v1166 = vunpack.c.l.b16 %v842
  %v1167 = vunpack.c.l.b16 %v843
  %v1168 = vunpack.c.l.b16 %v844
  %v1169 = vunpack.c.l.b16 %v845
  %v1170 = vunpack.c.l.b16 %v846
  %v1171 = vunpack.c.l.b16 %v847
  %v1172 = vunpack.c.l.b16 %v848
  %v1173 = vunpack.c.l.b16 %v849
  %v1174 = vunpack.c.l.b16 %v850
  %v1175 = vunpack.c.l.b16 %v851
  %v1176 = vunpack.c.l.b16 %v852
  %v1177 = vunpack.c.l.b16 %v853
  %v1178 = vunpack.c.l.b16 %v854
  %v1179 = vunpack.c.l.b16 %v855
  %v1180 = vunpack.c.l.b16 %v856
  %v1181 = vunpack.c.l.b16 %v857
  %v1182 = vunpack.c.l.b16 %v858
  %v1183 = vunpack.c.l.b16 %v859
  %v1184 = vunpack.c.l.b16 %v860
  %v1185 = vunpack.c.l.b16 %v861
  %v1186 = vunpack.c.l.b16 %v862
  %v1187 = vunpack.c.l.b16 %v863
  %v1188 = vunpack.c.l.b16 %v864
  %v1189 = vunpack.c.l.b16 %v865
  %v1190 = vunpack.c.l.b16 %v866
  %v1191 = vunpack.c.l.b16 %v867
  %v1192 = vunpack.c.l.b16 %v868
  %v1193 = vunpack.c.l.b16 %v869
  %v1194 = vunpack.c.l.b16 %v870
  %v1195 = vunpack.c.l.b16 %v871
  %v1196 = vunpack.c.l.b16 %v872
  %v1197 = vunpack.c.l.b16 %v873
  %v1198 = vunpack.c.l.b16 %v874
  %v1199 = vunpack.c.l.b16 %v875
  %v1200 = vpack.c.b16 %v1041, %v1040
  %v1201 = vpack.c.b16 %v1043, %v1042
  %v1202 = vpack.c.b16 %v1045, %v1044
  %v1203 = vpack.c.b16 %v1047, %v1046
  %v1204 = vpack.c.b16 %v1049, %v1048
  %v1205 = vpack.c.b16 %v1051, %v1050
  %v1206 = vpack.c.b16 %v1053, %v1052
  %v1207 = vpack.c.b16 %v1055, %v1054
  %v1208 = vpack.c.b16 %v1057, %v1056
  %v1209 = vpack.c.b16 %v1059, %v1058
  %v1210 = vpack.c.b16 %v1061, %v1060
  %v1211 = vpack.c.b16 %v1063, %v1062
  %v1212 = vpack.c.b16 %v1065, %v1064
  %v1213 = vpack.c.b16 %v1067, %v1066
  %v1214 = vpack.c.b16 %v1069, %v1068
  %v1215 = vpack.c.b16 %v1071, %v1070
  %v1216 = vpack.c.b16 %v1073, %v1072
  %v1217 = vpack.c.b16 %v1075, %v1074
  %v1218 = vpack.c.b16 %v1077, %v1076
  %v1219 = vpack.c.b16 %v1079, %v1078
  %v1220 = vpack.c.b16 %v1081, %v1080
  %v1221 = vpack.c.b16 %v1083, %v1082
  %v1222 = vpack.c.b16 %v1085, %v1084
  %v1223 = vpack.c.b16 %v1087, %v1086
  %v1224 = vpack.c.b16 %v1089, %v1088
  %v1225 = vpack.c.b16 %v1091, %v1090
  %v1226 = vpack.c.b16 %v1093, %v1092
  %v1227 = vpack.c.b16 %v1095, %v1094
  %v1228 = vpack.c.b16 %v1097, %v1096
  %v1229 = vpack.c.b16 %v1099, %v1098
  %v1230 = vpack.c.b16 %v1101, %v1100
  %v1231 = vpack.c.b16 %v1103, %v1102
  %v1232 = vpack.c.b16 %v1105, %v1104
  %v1233 = vpack.c.b16 %v1107, %v1106
  %v1234 = vpack.c.b16 %v1109, %v1108
  %v1235 = vpack.c.b16 %v1111, %v1110
  %v1236 = vpack.c.b16 %v1113, %v1112
  %v1237 = vpack.c.b16 %v1115, %v1114
  %v1238 = vpack.c.b16 %v1117, %v1116
  %v1239 = vpack.c.b16 %v1119, %v1118
  %v1240 = vpack.c.b16 %v1121, %v1120
  %v1241 = vpack.c.b16 %v1123, %v1122
  %v1242 = vpack.c.b16 %v1125, %v1124
  %v1243 = vpack.c.b16 %v1127, %v1126
  %v1244 = vpack.c.b16 %v1129, %v1128
  %v1245 = vpack.c.b16 %v1131, %v1130
  %v1246 = vpack.c.b16 %v1133, %v1132
  %v1247 = vpack.c.b16 %v1135, %v1134
  %v1248 = vpack.c.b16 %v1137, %v1136
  %v1249 = vpack.c.b16 %v1139, %v1138
  %v1250 = vpack.c.b16 %v1141, %v1140
  %v1251 = vpack.c.b16 %v1143, %v1142
  %v1252 = vpack.c.b16 %v1145, %v1144
  %v1253 = vpack.c.b16 %v1147, %v1146
  %v1254 = vpack.c.b16 %v1149, %v1148
  %v1255 = vpack.c.b16 %v1151, %v1150
  %v1256 = vpack.c.b16 %v1153, %v1152
  %v1257 = vpack.c.b16 %v1155, %v1154
  %v1258 = vpack.c.b16 %v1157, %v1156
  %v1259 = vpack.c.b16 %v1159, %v1158
  %v1260 = vpack.c.b16 %v1161, %v1160
  %v1261 = vpack.c.b16 %v1163, %v1162
  %v1262 = vpack.c.b16 %v1165, %v1164
  %v1263 = vpack.c.b16 %v1167, %v1166
  %v1264 = vpack.c.b16 %v1169, %v1168
  %v1265 = vpack.c.b16 %v1171, %v1170
  %v1266 = vpack.c.b16 %v1173, %v1172
  %v1267 = vpack.c.b16 %v1175, %v1174
  %v1268 = vpack.c.b16 %v1177, %v1176
  %v1269 = vpack.c.b16 %v1179, %v1178
  %v1270 = vpack.c.b16 %v1181, %v1180
  %v1271 = vpack.c.b16 %v1183, %v1182
  %v1272 = vpack.c.b16 %v1185, %v1184
  %v1273 = vpack.c.b16 %v1187, %v1186
  %v1274 = vpack.c.b16 %v1189, %v1188
  %v1275 = vpack.c.b16 %v1191, %v1190
  %v1276 = vpack.c.b16 %v1193, %v1192
  %v1277 = vpack.c.b16 %v1195, %v1194
  %v1278 = vpack.c.b16 %v1197, %v1196
  %v1279 = vpack.c.b16 %v1199, %v1198
  %1360 = vmatpush.bf16.msra.mxu0 %v1207
  %1361 = vmatpush.bf16.msra.mxu0 %v1206
  %1362 = vmatpush.bf16.msra.mxu0 %v1205
  %1363 = vmatpush.bf16.msra.mxu0 %v1204
  %1364 = vmatpush.bf16.msra.mxu0 %v1203
  %1365 = vmatpush.bf16.msra.mxu0 %v1202
  %1366 = vmatpush.bf16.msra.mxu0 %v1201
  %1367 = vmatpush.bf16.msra.mxu0 %v1200
  %1368 = vmatmul.bf16.gmra.mxu0 %v636
  %v1369 = vpop.f32.mrf.mxu0
  %v1370 = vadd.f32 %v878, %v1369
  %v1371 = vpop.f32.mrf.mxu0
  %v1372 = vadd.f32 %v878, %v1371
  %1373 = vmatmul.bf16.gmra.mxu0 %v646
  %v1374 = vpop.f32.mrf.mxu0
  %v1375 = vadd.f32 %v878, %v1374
  %v1376 = vpop.f32.mrf.mxu0
  %v1377 = vadd.f32 %v878, %v1376
  %1378 = vmatmul.bf16.gmra.mxu0 %v656
  %v1379 = vpop.f32.mrf.mxu0
  %v1380 = vadd.f32 %v878, %v1379
  %v1381 = vpop.f32.mrf.mxu0
  %v1382 = vadd.f32 %v878, %v1381
  %1383 = vmatmul.bf16.gmra.mxu0 %v666
  %v1384 = vpop.f32.mrf.mxu0
  %v1385 = vadd.f32 %v878, %v1384
  %v1386 = vpop.f32.mrf.mxu0
  %v1387 = vadd.f32 %v878, %v1386
  %1388 = vmatmul.bf16.gmra.mxu0 %v676
  %v1389 = vpop.f32.mrf.mxu0
  %v1390 = vadd.f32 %v878, %v1389
  %v1391 = vpop.f32.mrf.mxu0
  %v1392 = vadd.f32 %v878, %v1391
  %1393 = vmatmul.bf16.gmra.mxu0 %v686
  %v1394 = vpop.f32.mrf.mxu0
  %v1395 = vadd.f32 %v878, %v1394
  %v1396 = vpop.f32.mrf.mxu0
  %v1397 = vadd.f32 %v878, %v1396
  %1398 = vmatmul.bf16.gmra.mxu0 %v696
  %v1399 = vpop.f32.mrf.mxu0
  %v1400 = vadd.f32 %v878, %v1399
  %v1401 = vpop.f32.mrf.mxu0
  %v1402 = vadd.f32 %v878, %v1401
  %1403 = vmatmul.bf16.gmra.mxu0 %v706
  %v1404 = vpop.f32.mrf.mxu0
  %v1405 = vadd.f32 %v878, %v1404
  %v1406 = vpop.f32.mrf.mxu0
  %v1407 = vadd.f32 %v878, %v1406
  %1408 = vdwg.mxu0
  %1409 = vmatpush.bf16.msra.mxu0 %v1215
  %1410 = vmatpush.bf16.msra.mxu0 %v1214
  %1411 = vmatpush.bf16.msra.mxu0 %v1213
  %1412 = vmatpush.bf16.msra.mxu0 %v1212
  %1413 = vmatpush.bf16.msra.mxu0 %v1211
  %1414 = vmatpush.bf16.msra.mxu0 %v1210
  %1415 = vmatpush.bf16.msra.mxu0 %v1209
  %1416 = vmatpush.bf16.msra.mxu0 %v1208
  %1417 = vmatmul.bf16.gmra.mxu0 %v637
  %v1418 = vpop.f32.mrf.mxu0
  %v1419 = vadd.f32 %v1370, %v1418
  %v1420 = vpop.f32.mrf.mxu0
  %v1421 = vadd.f32 %v1372, %v1420
  %1422 = vmatmul.bf16.gmra.mxu0 %v647
  %v1423 = vpop.f32.mrf.mxu0
  %v1424 = vadd.f32 %v1375, %v1423
  %v1425 = vpop.f32.mrf.mxu0
  %v1426 = vadd.f32 %v1377, %v1425
  %1427 = vmatmul.bf16.gmra.mxu0 %v657
  %v1428 = vpop.f32.mrf.mxu0
  %v1429 = vadd.f32 %v1380, %v1428
  %v1430 = vpop.f32.mrf.mxu0
  %v1431 = vadd.f32 %v1382, %v1430
  %1432 = vmatmul.bf16.gmra.mxu0 %v667
  %v1433 = vpop.f32.mrf.mxu0
  %v1434 = vadd.f32 %v1385, %v1433
  %v1435 = vpop.f32.mrf.mxu0
  %v1436 = vadd.f32 %v1387, %v1435
  %1437 = vmatmul.bf16.gmra.mxu0 %v677
  %v1438 = vpop.f32.mrf.mxu0
  %v1439 = vadd.f32 %v1390, %v1438
  %v1440 = vpop.f32.mrf.mxu0
  %v1441 = vadd.f32 %v1392, %v1440
  %1442 = vmatmul.bf16.gmra.mxu0 %v687
  %v1443 = vpop.f32.mrf.mxu0
  %v1444 = vadd.f32 %v1395, %v1443
  %v1445 = vpop.f32.mrf.mxu0
  %v1446 = vadd.f32 %v1397, %v1445
  %1447 = vmatmul.bf16.gmra.mxu0 %v697
  %v1448 = vpop.f32.mrf.mxu0
  %v1449 = vadd.f32 %v1400, %v1448
  %v1450 = vpop.f32.mrf.mxu0
  %v1451 = vadd.f32 %v1402, %v1450
  %1452 = vmatmul.bf16.gmra.mxu0 %v707
  %v1453 = vpop.f32.mrf.mxu0
  %v1454 = vadd.f32 %v1405, %v1453
  %v1455 = vpop.f32.mrf.mxu0
  %v1456 = vadd.f32 %v1407, %v1455
  %1457 = vdwg.mxu0
  %1458 = vmatpush.bf16.msra.mxu0 %v1223
  %1459 = vmatpush.bf16.msra.mxu0 %v1222
  %1460 = vmatpush.bf16.msra.mxu0 %v1221
  %1461 = vmatpush.bf16.msra.mxu0 %v1220
  %1462 = vmatpush.bf16.msra.mxu0 %v1219
  %1463 = vmatpush.bf16.msra.mxu0 %v1218
  %1464 = vmatpush.bf16.msra.mxu0 %v1217
  %1465 = vmatpush.bf16.msra.mxu0 %v1216
  %1466 = vmatmul.bf16.gmra.mxu0 %v638
  %v1467 = vpop.f32.mrf.mxu0
  %v1468 = vadd.f32 %v1419, %v1467
  %v1469 = vpop.f32.mrf.mxu0
  %v1470 = vadd.f32 %v1421, %v1469
  %1471 = vmatmul.bf16.gmra.mxu0 %v648
  %v1472 = vpop.f32.mrf.mxu0
  %v1473 = vadd.f32 %v1424, %v1472
  %v1474 = vpop.f32.mrf.mxu0
  %v1475 = vadd.f32 %v1426, %v1474
  %1476 = vmatmul.bf16.gmra.mxu0 %v658
  %v1477 = vpop.f32.mrf.mxu0
  %v1478 = vadd.f32 %v1429, %v1477
  %v1479 = vpop.f32.mrf.mxu0
  %v1480 = vadd.f32 %v1431, %v1479
  %1481 = vmatmul.bf16.gmra.mxu0 %v668
  %v1482 = vpop.f32.mrf.mxu0
  %v1483 = vadd.f32 %v1434, %v1482
  %v1484 = vpop.f32.mrf.mxu0
  %v1485 = vadd.f32 %v1436, %v1484
  %1486 = vmatmul.bf16.gmra.mxu0 %v678
  %v1487 = vpop.f32.mrf.mxu0
  %v1488 = vadd.f32 %v1439, %v1487
  %v1489 = vpop.f32.mrf.mxu0
  %v1490 = vadd.f32 %v1441, %v1489
  %1491 = vmatmul.bf16.gmra.mxu0 %v688
  %v1492 = vpop.f32.mrf.mxu0
  %v1493 = vadd.f32 %v1444, %v1492
  %v1494 = vpop.f32.mrf.mxu0
  %v1495 = vadd.f32 %v1446, %v1494
  %1496 = vmatmul.bf16.gmra.mxu0 %v698
  %v1497 = vpop.f32.mrf.mxu0
  %v1498 = vadd.f32 %v1449, %v1497
  %v1499 = vpop.f32.mrf.mxu0
  %v1500 = vadd.f32 %v1451, %v1499
  %1501 = vmatmul.bf16.gmra.mxu0 %v708
  %v1502 = vpop.f32.mrf.mxu0
  %v1503 = vadd.f32 %v1454, %v1502
  %v1504 = vpop.f32.mrf.mxu0
  %v1505 = vadd.f32 %v1456, %v1504
  %1506 = vdwg.mxu0
  %1507 = vmatpush.bf16.msra.mxu0 %v1231
  %1508 = vmatpush.bf16.msra.mxu0 %v1230
  %1509 = vmatpush.bf16.msra.mxu0 %v1229
  %1510 = vmatpush.bf16.msra.mxu0 %v1228
  %1511 = vmatpush.bf16.msra.mxu0 %v1227
  %1512 = vmatpush.bf16.msra.mxu0 %v1226
  %1513 = vmatpush.bf16.msra.mxu0 %v1225
  %1514 = vmatpush.bf16.msra.mxu0 %v1224
  %1515 = vmatmul.bf16.gmra.mxu0 %v639
  %v1516 = vpop.f32.mrf.mxu0
  %v1517 = vadd.f32 %v1468, %v1516
  %v1518 = vpop.f32.mrf.mxu0
  %v1519 = vadd.f32 %v1470, %v1518
  %1520 = vmatmul.bf16.gmra.mxu0 %v649
  %v1521 = vpop.f32.mrf.mxu0
  %v1522 = vadd.f32 %v1473, %v1521
  %v1523 = vpop.f32.mrf.mxu0
  %v1524 = vadd.f32 %v1475, %v1523
  %1525 = vmatmul.bf16.gmra.mxu0 %v659
  %v1526 = vpop.f32.mrf.mxu0
  %v1527 = vadd.f32 %v1478, %v1526
  %v1528 = vpop.f32.mrf.mxu0
  %v1529 = vadd.f32 %v1480, %v1528
  %1530 = vmatmul.bf16.gmra.mxu0 %v669
  %v1531 = vpop.f32.mrf.mxu0
  %v1532 = vadd.f32 %v1483, %v1531
  %v1533 = vpop.f32.mrf.mxu0
  %v1534 = vadd.f32 %v1485, %v1533
  %1535 = vmatmul.bf16.gmra.mxu0 %v679
  %v1536 = vpop.f32.mrf.mxu0
  %v1537 = vadd.f32 %v1488, %v1536
  %v1538 = vpop.f32.mrf.mxu0
  %v1539 = vadd.f32 %v1490, %v1538
  %1540 = vmatmul.bf16.gmra.mxu0 %v689
  %v1541 = vpop.f32.mrf.mxu0
  %v1542 = vadd.f32 %v1493, %v1541
  %v1543 = vpop.f32.mrf.mxu0
  %v1544 = vadd.f32 %v1495, %v1543
  %1545 = vmatmul.bf16.gmra.mxu0 %v699
  %v1546 = vpop.f32.mrf.mxu0
  %v1547 = vadd.f32 %v1498, %v1546
  %v1548 = vpop.f32.mrf.mxu0
  %v1549 = vadd.f32 %v1500, %v1548
  %1550 = vmatmul.bf16.gmra.mxu0 %v709
  %v1551 = vpop.f32.mrf.mxu0
  %v1552 = vadd.f32 %v1503, %v1551
  %v1553 = vpop.f32.mrf.mxu0
  %v1554 = vadd.f32 %v1505, %v1553
  %1555 = vdwg.mxu0
  %1556 = vmatpush.bf16.msra.mxu0 %v1239
  %1557 = vmatpush.bf16.msra.mxu0 %v1238
  %1558 = vmatpush.bf16.msra.mxu0 %v1237
  %1559 = vmatpush.bf16.msra.mxu0 %v1236
  %1560 = vmatpush.bf16.msra.mxu0 %v1235
  %1561 = vmatpush.bf16.msra.mxu0 %v1234
  %1562 = vmatpush.bf16.msra.mxu0 %v1233
  %1563 = vmatpush.bf16.msra.mxu0 %v1232
  %1564 = vmatmul.bf16.gmra.mxu0 %v640
  %v1565 = vpop.f32.mrf.mxu0
  %v1566 = vadd.f32 %v1517, %v1565
  %v1567 = vpop.f32.mrf.mxu0
  %v1568 = vadd.f32 %v1519, %v1567
  %1569 = vmatmul.bf16.gmra.mxu0 %v650
  %v1570 = vpop.f32.mrf.mxu0
  %v1571 = vadd.f32 %v1522, %v1570
  %v1572 = vpop.f32.mrf.mxu0
  %v1573 = vadd.f32 %v1524, %v1572
  %1574 = vmatmul.bf16.gmra.mxu0 %v660
  %v1575 = vpop.f32.mrf.mxu0
  %v1576 = vadd.f32 %v1527, %v1575
  %v1577 = vpop.f32.mrf.mxu0
  %v1578 = vadd.f32 %v1529, %v1577
  %1579 = vmatmul.bf16.gmra.mxu0 %v670
  %v1580 = vpop.f32.mrf.mxu0
  %v1581 = vadd.f32 %v1532, %v1580
  %v1582 = vpop.f32.mrf.mxu0
  %v1583 = vadd.f32 %v1534, %v1582
  %1584 = vmatmul.bf16.gmra.mxu0 %v680
  %v1585 = vpop.f32.mrf.mxu0
  %v1586 = vadd.f32 %v1537, %v1585
  %v1587 = vpop.f32.mrf.mxu0
  %v1588 = vadd.f32 %v1539, %v1587
  %1589 = vmatmul.bf16.gmra.mxu0 %v690
  %v1590 = vpop.f32.mrf.mxu0
  %v1591 = vadd.f32 %v1542, %v1590
  %v1592 = vpop.f32.mrf.mxu0
  %v1593 = vadd.f32 %v1544, %v1592
  %1594 = vmatmul.bf16.gmra.mxu0 %v700
  %v1595 = vpop.f32.mrf.mxu0
  %v1596 = vadd.f32 %v1547, %v1595
  %v1597 = vpop.f32.mrf.mxu0
  %v1598 = vadd.f32 %v1549, %v1597
  %1599 = vmatmul.bf16.gmra.mxu0 %v710
  %v1600 = vpop.f32.mrf.mxu0
  %v1601 = vadd.f32 %v1552, %v1600
  %v1602 = vpop.f32.mrf.mxu0
  %v1603 = vadd.f32 %v1554, %v1602
  %1604 = vdwg.mxu0
  %1605 = vmatpush.bf16.msra.mxu0 %v1247
  %1606 = vmatpush.bf16.msra.mxu0 %v1246
  %1607 = vmatpush.bf16.msra.mxu0 %v1245
  %1608 = vmatpush.bf16.msra.mxu0 %v1244
  %1609 = vmatpush.bf16.msra.mxu0 %v1243
  %1610 = vmatpush.bf16.msra.mxu0 %v1242
  %1611 = vmatpush.bf16.msra.mxu0 %v1241
  %1612 = vmatpush.bf16.msra.mxu0 %v1240
  %1613 = vmatmul.bf16.gmra.mxu0 %v641
  %v1614 = vpop.f32.mrf.mxu0
  %v1615 = vadd.f32 %v1566, %v1614
  %v1616 = vpop.f32.mrf.mxu0
  %v1617 = vadd.f32 %v1568, %v1616
  %1618 = vmatmul.bf16.gmra.mxu0 %v651
  %v1619 = vpop.f32.mrf.mxu0
  %v1620 = vadd.f32 %v1571, %v1619
  %v1621 = vpop.f32.mrf.mxu0
  %v1622 = vadd.f32 %v1573, %v1621
  %1623 = vmatmul.bf16.gmra.mxu0 %v661
  %v1624 = vpop.f32.mrf.mxu0
  %v1625 = vadd.f32 %v1576, %v1624
  %v1626 = vpop.f32.mrf.mxu0
  %v1627 = vadd.f32 %v1578, %v1626
  %1628 = vmatmul.bf16.gmra.mxu0 %v671
  %v1629 = vpop.f32.mrf.mxu0
  %v1630 = vadd.f32 %v1581, %v1629
  %v1631 = vpop.f32.mrf.mxu0
  %v1632 = vadd.f32 %v1583, %v1631
  %1633 = vmatmul.bf16.gmra.mxu0 %v681
  %v1634 = vpop.f32.mrf.mxu0
  %v1635 = vadd.f32 %v1586, %v1634
  %v1636 = vpop.f32.mrf.mxu0
  %v1637 = vadd.f32 %v1588, %v1636
  %1638 = vmatmul.bf16.gmra.mxu0 %v691
  %v1639 = vpop.f32.mrf.mxu0
  %v1640 = vadd.f32 %v1591, %v1639
  %v1641 = vpop.f32.mrf.mxu0
  %v1642 = vadd.f32 %v1593, %v1641
  %1643 = vmatmul.bf16.gmra.mxu0 %v701
  %v1644 = vpop.f32.mrf.mxu0
  %v1645 = vadd.f32 %v1596, %v1644
  %v1646 = vpop.f32.mrf.mxu0
  %v1647 = vadd.f32 %v1598, %v1646
  %1648 = vmatmul.bf16.gmra.mxu0 %v711
  %v1649 = vpop.f32.mrf.mxu0
  %v1650 = vadd.f32 %v1601, %v1649
  %v1651 = vpop.f32.mrf.mxu0
  %v1652 = vadd.f32 %v1603, %v1651
  %1653 = vdwg.mxu0
  %1654 = vmatpush.bf16.msra.mxu0 %v1255
  %1655 = vmatpush.bf16.msra.mxu0 %v1254
  %1656 = vmatpush.bf16.msra.mxu0 %v1253
  %1657 = vmatpush.bf16.msra.mxu0 %v1252
  %1658 = vmatpush.bf16.msra.mxu0 %v1251
  %1659 = vmatpush.bf16.msra.mxu0 %v1250
  %1660 = vmatpush.bf16.msra.mxu0 %v1249
  %1661 = vmatpush.bf16.msra.mxu0 %v1248
  %1662 = vmatmul.bf16.gmra.mxu0 %v642
  %v1663 = vpop.f32.mrf.mxu0
  %v1664 = vadd.f32 %v1615, %v1663
  %v1665 = vpop.f32.mrf.mxu0
  %v1666 = vadd.f32 %v1617, %v1665
  %1667 = vmatmul.bf16.gmra.mxu0 %v652
  %v1668 = vpop.f32.mrf.mxu0
  %v1669 = vadd.f32 %v1620, %v1668
  %v1670 = vpop.f32.mrf.mxu0
  %v1671 = vadd.f32 %v1622, %v1670
  %1672 = vmatmul.bf16.gmra.mxu0 %v662
  %v1673 = vpop.f32.mrf.mxu0
  %v1674 = vadd.f32 %v1625, %v1673
  %v1675 = vpop.f32.mrf.mxu0
  %v1676 = vadd.f32 %v1627, %v1675
  %1677 = vmatmul.bf16.gmra.mxu0 %v672
  %v1678 = vpop.f32.mrf.mxu0
  %v1679 = vadd.f32 %v1630, %v1678
  %v1680 = vpop.f32.mrf.mxu0
  %v1681 = vadd.f32 %v1632, %v1680
  %1682 = vmatmul.bf16.gmra.mxu0 %v682
  %v1683 = vpop.f32.mrf.mxu0
  %v1684 = vadd.f32 %v1635, %v1683
  %v1685 = vpop.f32.mrf.mxu0
  %v1686 = vadd.f32 %v1637, %v1685
  %1687 = vmatmul.bf16.gmra.mxu0 %v692
  %v1688 = vpop.f32.mrf.mxu0
  %v1689 = vadd.f32 %v1640, %v1688
  %v1690 = vpop.f32.mrf.mxu0
  %v1691 = vadd.f32 %v1642, %v1690
  %1692 = vmatmul.bf16.gmra.mxu0 %v702
  %v1693 = vpop.f32.mrf.mxu0
  %v1694 = vadd.f32 %v1645, %v1693
  %v1695 = vpop.f32.mrf.mxu0
  %v1696 = vadd.f32 %v1647, %v1695
  %1697 = vmatmul.bf16.gmra.mxu0 %v712
  %v1698 = vpop.f32.mrf.mxu0
  %v1699 = vadd.f32 %v1650, %v1698
  %v1700 = vpop.f32.mrf.mxu0
  %v1701 = vadd.f32 %v1652, %v1700
  %1702 = vdwg.mxu0
  %1703 = vmatpush.bf16.msra.mxu0 %v1263
  %1704 = vmatpush.bf16.msra.mxu0 %v1262
  %1705 = vmatpush.bf16.msra.mxu0 %v1261
  %1706 = vmatpush.bf16.msra.mxu0 %v1260
  %1707 = vmatpush.bf16.msra.mxu0 %v1259
  %1708 = vmatpush.bf16.msra.mxu0 %v1258
  %1709 = vmatpush.bf16.msra.mxu0 %v1257
  %1710 = vmatpush.bf16.msra.mxu0 %v1256
  %1711 = vmatmul.bf16.gmra.mxu0 %v643
  %v1712 = vpop.f32.mrf.mxu0
  %v1713 = vadd.f32 %v1664, %v1712
  %v1714 = vpop.f32.mrf.mxu0
  %v1715 = vadd.f32 %v1666, %v1714
  %1716 = vmatmul.bf16.gmra.mxu0 %v653
  %v1717 = vpop.f32.mrf.mxu0
  %v1718 = vadd.f32 %v1669, %v1717
  %v1719 = vpop.f32.mrf.mxu0
  %v1720 = vadd.f32 %v1671, %v1719
  %1721 = vmatmul.bf16.gmra.mxu0 %v663
  %v1722 = vpop.f32.mrf.mxu0
  %v1723 = vadd.f32 %v1674, %v1722
  %v1724 = vpop.f32.mrf.mxu0
  %v1725 = vadd.f32 %v1676, %v1724
  %1726 = vmatmul.bf16.gmra.mxu0 %v673
  %v1727 = vpop.f32.mrf.mxu0
  %v1728 = vadd.f32 %v1679, %v1727
  %v1729 = vpop.f32.mrf.mxu0
  %v1730 = vadd.f32 %v1681, %v1729
  %1731 = vmatmul.bf16.gmra.mxu0 %v683
  %v1732 = vpop.f32.mrf.mxu0
  %v1733 = vadd.f32 %v1684, %v1732
  %v1734 = vpop.f32.mrf.mxu0
  %v1735 = vadd.f32 %v1686, %v1734
  %1736 = vmatmul.bf16.gmra.mxu0 %v693
  %v1737 = vpop.f32.mrf.mxu0
  %v1738 = vadd.f32 %v1689, %v1737
  %v1739 = vpop.f32.mrf.mxu0
  %v1740 = vadd.f32 %v1691, %v1739
  %1741 = vmatmul.bf16.gmra.mxu0 %v703
  %v1742 = vpop.f32.mrf.mxu0
  %v1743 = vadd.f32 %v1694, %v1742
  %v1744 = vpop.f32.mrf.mxu0
  %v1745 = vadd.f32 %v1696, %v1744
  %1746 = vmatmul.bf16.gmra.mxu0 %v713
  %v1747 = vpop.f32.mrf.mxu0
  %v1748 = vadd.f32 %v1699, %v1747
  %v1749 = vpop.f32.mrf.mxu0
  %v1750 = vadd.f32 %v1701, %v1749
  %1751 = vdwg.mxu0
  %1752 = vmatpush.bf16.msra.mxu0 %v1271
  %1753 = vmatpush.bf16.msra.mxu0 %v1270
  %1754 = vmatpush.bf16.msra.mxu0 %v1269
  %1755 = vmatpush.bf16.msra.mxu0 %v1268
  %1756 = vmatpush.bf16.msra.mxu0 %v1267
  %1757 = vmatpush.bf16.msra.mxu0 %v1266
  %1758 = vmatpush.bf16.msra.mxu0 %v1265
  %1759 = vmatpush.bf16.msra.mxu0 %v1264
  %1760 = vmatmul.bf16.gmra.mxu0 %v644
  %v1761 = vpop.f32.mrf.mxu0
  %v1762 = vadd.f32 %v1713, %v1761
  %v1763 = vpop.f32.mrf.mxu0
  %v1764 = vadd.f32 %v1715, %v1763
  %1765 = vmatmul.bf16.gmra.mxu0 %v654
  %v1766 = vpop.f32.mrf.mxu0
  %v1767 = vadd.f32 %v1718, %v1766
  %v1768 = vpop.f32.mrf.mxu0
  %v1769 = vadd.f32 %v1720, %v1768
  %1770 = vmatmul.bf16.gmra.mxu0 %v664
  %v1771 = vpop.f32.mrf.mxu0
  %v1772 = vadd.f32 %v1723, %v1771
  %v1773 = vpop.f32.mrf.mxu0
  %v1774 = vadd.f32 %v1725, %v1773
  %1775 = vmatmul.bf16.gmra.mxu0 %v674
  %v1776 = vpop.f32.mrf.mxu0
  %v1777 = vadd.f32 %v1728, %v1776
  %v1778 = vpop.f32.mrf.mxu0
  %v1779 = vadd.f32 %v1730, %v1778
  %1780 = vmatmul.bf16.gmra.mxu0 %v684
  %v1781 = vpop.f32.mrf.mxu0
  %v1782 = vadd.f32 %v1733, %v1781
  %v1783 = vpop.f32.mrf.mxu0
  %v1784 = vadd.f32 %v1735, %v1783
  %1785 = vmatmul.bf16.gmra.mxu0 %v694
  %v1786 = vpop.f32.mrf.mxu0
  %v1787 = vadd.f32 %v1738, %v1786
  %v1788 = vpop.f32.mrf.mxu0
  %v1789 = vadd.f32 %v1740, %v1788
  %1790 = vmatmul.bf16.gmra.mxu0 %v704
  %v1791 = vpop.f32.mrf.mxu0
  %v1792 = vadd.f32 %v1743, %v1791
  %v1793 = vpop.f32.mrf.mxu0
  %v1794 = vadd.f32 %v1745, %v1793
  %1795 = vmatmul.bf16.gmra.mxu0 %v714
  %v1796 = vpop.f32.mrf.mxu0
  %v1797 = vadd.f32 %v1748, %v1796
  %v1798 = vpop.f32.mrf.mxu0
  %v1799 = vadd.f32 %v1750, %v1798
  %1800 = vdwg.mxu0
  %1801 = vmatpush.bf16.msra.mxu0 %v1279
  %1802 = vmatpush.bf16.msra.mxu0 %v1278
  %1803 = vmatpush.bf16.msra.mxu0 %v1277
  %1804 = vmatpush.bf16.msra.mxu0 %v1276
  %1805 = vmatpush.bf16.msra.mxu0 %v1275
  %1806 = vmatpush.bf16.msra.mxu0 %v1274
  %1807 = vmatpush.bf16.msra.mxu0 %v1273
  %1808 = vmatpush.bf16.msra.mxu0 %v1272
  %1809 = vmatmul.bf16.gmra.mxu0 %v645
  %v1810 = vpop.f32.mrf.mxu0
  %v1811 = vadd.f32 %v1762, %v1810
  %v1812 = vpop.f32.mrf.mxu0
  %v1813 = vadd.f32 %v1764, %v1812
  %1814 = vmatmul.bf16.gmra.mxu0 %v655
  %v1815 = vpop.f32.mrf.mxu0
  %v1816 = vadd.f32 %v1767, %v1815
  %v1817 = vpop.f32.mrf.mxu0
  %v1818 = vadd.f32 %v1769, %v1817
  %1819 = vmatmul.bf16.gmra.mxu0 %v665
  %v1820 = vpop.f32.mrf.mxu0
  %v1821 = vadd.f32 %v1772, %v1820
  %v1822 = vpop.f32.mrf.mxu0
  %v1823 = vadd.f32 %v1774, %v1822
  %1824 = vmatmul.bf16.gmra.mxu0 %v675
  %v1825 = vpop.f32.mrf.mxu0
  %v1826 = vadd.f32 %v1777, %v1825
  %v1827 = vpop.f32.mrf.mxu0
  %v1828 = vadd.f32 %v1779, %v1827
  %1829 = vmatmul.bf16.gmra.mxu0 %v685
  %v1830 = vpop.f32.mrf.mxu0
  %v1831 = vadd.f32 %v1782, %v1830
  %v1832 = vpop.f32.mrf.mxu0
  %v1833 = vadd.f32 %v1784, %v1832
  %1834 = vmatmul.bf16.gmra.mxu0 %v695
  %v1835 = vpop.f32.mrf.mxu0
  %v1836 = vadd.f32 %v1787, %v1835
  %v1837 = vpop.f32.mrf.mxu0
  %v1838 = vadd.f32 %v1789, %v1837
  %1839 = vmatmul.bf16.gmra.mxu0 %v705
  %v1840 = vpop.f32.mrf.mxu0
  %v1841 = vadd.f32 %v1792, %v1840
  %v1842 = vpop.f32.mrf.mxu0
  %v1843 = vadd.f32 %v1794, %v1842
  %1844 = vmatmul.bf16.gmra.mxu0 %v715
  %v1845 = vpop.f32.mrf.mxu0
  %v1846 = vadd.f32 %v1797, %v1845
  %v1847 = vpop.f32.mrf.mxu0
  %v1848 = vadd.f32 %v1799, %v1847
  %1849 = vdwg.mxu0
  %v1850 = vadd.f32 %v1811, %v1813
  %v1851 = vadd.f32 %v1850, %v1816
  %v1852 = vadd.f32 %v1851, %v1818
  %v1853 = vadd.f32 %v1852, %v1821
  %v1854 = vadd.f32 %v1853, %v1823
  %v1855 = vadd.f32 %v1854, %v1826
  %v1856 = vadd.f32 %v1855, %v1828
  %v1857 = vadd.f32 %v1856, %v1831
  %v1858 = vadd.f32 %v1857, %v1833
  %v1859 = vadd.f32 %v1858, %v1836
  %v1860 = vadd.f32 %v1859, %v1838
  %v1861 = vadd.f32 %v1860, %v1841
  %v1862 = vadd.f32 %v1861, %v1843
  %v1863 = vadd.f32 %v1862, %v1846
  %v1864 = vadd.f32 %v1863, %v1848
  %v1865 = vrot.slane %v1864, 4
  %v1866 = vadd.f32 %v1864, %v1865
  %v1867 = vrot.slane %v1866, 2
  %v1868 = vadd.f32 %v1866, %v1867
  %v1869 = vrot.slane %v1868, 1
  %v1870 = vadd.f32 %v1868, %v1869
  %v1871 = vrcp.pop 128.0
  %v1872 = vmul.f32 128.0, %v1871
  %v1873 = vsub.f32 1.0, %v1872
  %v1874 = vmul.f32 %v1871, %v1873
  %v1875 = vadd.f32 %v1871, %v1874
  %vm1876 = vweird.f32 %v1871
  %v1877 = vsel %vm1876, %v1871, %v1875
  %v1878 = vmul.f32 %v1870, %v1877
  %v1879 = vsub.f32 %v1811, %v1878
  %v1880 = vsub.f32 %v1813, %v1878
  %v1881 = vsub.f32 %v1816, %v1878
  %v1882 = vsub.f32 %v1818, %v1878
  %v1883 = vsub.f32 %v1821, %v1878
  %v1884 = vsub.f32 %v1823, %v1878
  %v1885 = vsub.f32 %v1826, %v1878
  %v1886 = vsub.f32 %v1828, %v1878
  %v1887 = vsub.f32 %v1831, %v1878
  %v1888 = vsub.f32 %v1833, %v1878
  %v1889 = vsub.f32 %v1836, %v1878
  %v1890 = vsub.f32 %v1838, %v1878
  %v1891 = vsub.f32 %v1841, %v1878
  %v1892 = vsub.f32 %v1843, %v1878
  %v1893 = vsub.f32 %v1846, %v1878
  %v1894 = vsub.f32 %v1848, %v1878
  %v1895 = vmul.f32 %v1879, %v1879
  %v1896 = vmul.f32 %v1880, %v1880
  %v1897 = vmul.f32 %v1881, %v1881
  %v1898 = vmul.f32 %v1882, %v1882
  %v1899 = vmul.f32 %v1883, %v1883
  %v1900 = vmul.f32 %v1884, %v1884
  %v1901 = vmul.f32 %v1885, %v1885
  %v1902 = vmul.f32 %v1886, %v1886
  %v1903 = vmul.f32 %v1887, %v1887
  %v1904 = vmul.f32 %v1888, %v1888
  %v1905 = vmul.f32 %v1889, %v1889
  %v1906 = vmul.f32 %v1890, %v1890
  %v1907 = vmul.f32 %v1891, %v1891
  %v1908 = vmul.f32 %v1892, %v1892
  %v1909 = vmul.f32 %v1893, %v1893
  %v1910 = vmul.f32 %v1894, %v1894
  %v1911 = vadd.f32 %v1895, %v1896
  %v1912 = vadd.f32 %v1911, %v1897
  %v1913 = vadd.f32 %v1912, %v1898
  %v1914 = vadd.f32 %v1913, %v1899
  %v1915 = vadd.f32 %v1914, %v1900
  %v1916 = vadd.f32 %v1915, %v1901
  %v1917 = vadd.f32 %v1916, %v1902
  %v1918 = vadd.f32 %v1917, %v1903
  %v1919 = vadd.f32 %v1918, %v1904
  %v1920 = vadd.f32 %v1919, %v1905
  %v1921 = vadd.f32 %v1920, %v1906
  %v1922 = vadd.f32 %v1921, %v1907
  %v1923 = vadd.f32 %v1922, %v1908
  %v1924 = vadd.f32 %v1923, %v1909
  %v1925 = vadd.f32 %v1924, %v1910
  %v1926 = vrot.slane %v1925, 4
  %v1927 = vadd.f32 %v1925, %v1926
  %v1928 = vrot.slane %v1927, 2
  %v1929 = vadd.f32 %v1927, %v1928
  %v1930 = vrot.slane %v1929, 1
  %v1931 = vadd.f32 %v1929, %v1930
  %v1932 = vmul.f32 %v1931, %v1877
  %v1933 = vld [vmem:[%s4] sm:$0x1]
  %v1934 = vadd.f32 %v1932, 1e-05
  %v1935 = vrsqrt.pop %v1934
  %v1936 = vmul.f32 %v1935, %v1934
  %v1937 = vmul.f32 %v1936, %v1935
  %v1938 = vmul.f32 0.5, %v1937
  %v1939 = vsub.f32 1.5, %v1938
  %v1940 = vmul.f32 %v1935, %v1939
  %vm1941 = vweird.f32 %v1934
  %vm1942 = vweird.f32 %v1935
  %vm1943 = vmor %vm1941, %vm1942
  %v1944 = vsel %vm1943, %v1935, %v1940
  %v1945 = vmul.f32 %v1933, %v1944
  %v1946 = vld [vmem:[%s5] sm:$0x1]
  %v1947 = vmul.f32 %v1878, %v1945
  %v1948 = vsub.f32 %v1946, %v1947
  %v1950 = vperm.slane %v1945, 0
  %v1952 = vmul.f32 %v1811, %v1950
  %v1953 = vmul.f32 %v1813, %v1950
  %v1954 = vmul.f32 %v1816, %v1950
  %v1955 = vmul.f32 %v1818, %v1950
  %v1956 = vmul.f32 %v1821, %v1950
  %v1957 = vmul.f32 %v1823, %v1950
  %v1958 = vmul.f32 %v1826, %v1950
  %v1959 = vmul.f32 %v1828, %v1950
  %v1960 = vmul.f32 %v1831, %v1950
  %v1961 = vmul.f32 %v1833, %v1950
  %v1962 = vmul.f32 %v1836, %v1950
  %v1963 = vmul.f32 %v1838, %v1950
  %v1964 = vmul.f32 %v1841, %v1950
  %v1965 = vmul.f32 %v1843, %v1950
  %v1966 = vmul.f32 %v1846, %v1950
  %v1967 = vmul.f32 %v1848, %v1950
  %v1969 = vperm.slane %v1948, 0
  %v1971 = vadd.f32 %v1952, %v1969
  %v1972 = vadd.f32 %v1953, %v1969
  %v1973 = vadd.f32 %v1954, %v1969
  %v1974 = vadd.f32 %v1955, %v1969
  %v1975 = vadd.f32 %v1956, %v1969
  %v1976 = vadd.f32 %v1957, %v1969
  %v1977 = vadd.f32 %v1958, %v1969
  %v1978 = vadd.f32 %v1959, %v1969
  %v1979 = vadd.f32 %v1960, %v1969
  %v1980 = vadd.f32 %v1961, %v1969
  %v1981 = vadd.f32 %v1962, %v1969
  %v1982 = vadd.f32 %v1963, %v1969
  %v1983 = vadd.f32 %v1964, %v1969
  %v1984 = vadd.f32 %v1965, %v1969
  %v1985 = vadd.f32 %v1966, %v1969
  %v1986 = vadd.f32 %v1967, %v1969
  %v1987 = vmax.f32 %v1971, 0.0
  %v1988 = vmax.f32 %v1972, 0.0
  %v1989 = vmax.f32 %v1973, 0.0
  %v1990 = vmax.f32 %v1974, 0.0
  %v1991 = vmax.f32 %v1975, 0.0
  %v1992 = vmax.f32 %v1976, 0.0
  %v1993 = vmax.f32 %v1977, 0.0
  %v1994 = vmax.f32 %v1978, 0.0
  %v1995 = vmax.f32 %v1979, 0.0
  %v1996 = vmax.f32 %v1980, 0.0
  %v1997 = vmax.f32 %v1981, 0.0
  %v1998 = vmax.f32 %v1982, 0.0
  %v1999 = vmax.f32 %v1983, 0.0
  %v2000 = vmax.f32 %v1984, 0.0
  %v2001 = vmax.f32 %v1985, 0.0
  %v2002 = vmax.f32 %v1986, 0.0
  %v2003 = vpack.c.bf16 %v1987, %v1987
  %v2004 = vpack.c.bf16 %v1988, %v1988
  %v2005 = vpack.c.bf16 %v1989, %v1989
  %v2006 = vpack.c.bf16 %v1990, %v1990
  %v2007 = vpack.c.bf16 %v1991, %v1991
  %v2008 = vpack.c.bf16 %v1992, %v1992
  %v2009 = vpack.c.bf16 %v1993, %v1993
  %v2010 = vpack.c.bf16 %v1994, %v1994
  %v2011 = vpack.c.bf16 %v1995, %v1995
  %v2012 = vpack.c.bf16 %v1996, %v1996
  %v2013 = vpack.c.bf16 %v1997, %v1997
  %v2014 = vpack.c.bf16 %v1998, %v1998
  %v2015 = vpack.c.bf16 %v1999, %v1999
  %v2016 = vpack.c.bf16 %v2000, %v2000
  %v2017 = vpack.c.bf16 %v2001, %v2001
  %v2018 = vpack.c.bf16 %v2002, %v2002
  %2019 = vst [vmem:[%s6] sm:$0xf] %v2003
  %2020 = vst [vmem:[%s6 + $0x4] sm:$0xf] %v2004
  %2021 = vst [vmem:[%s6 + $0x8] sm:$0xf] %v2005
  %2022 = vst [vmem:[%s6 + $0xc] sm:$0xf] %v2006
  %2023 = vst [vmem:[%s6 + $0x10] sm:$0xf] %v2007
  %2024 = vst [vmem:[%s6 + $0x14] sm:$0xf] %v2008
  %2025 = vst [vmem:[%s6 + $0x18] sm:$0xf] %v2009
  %2026 = vst [vmem:[%s6 + $0x1c] sm:$0xf] %v2010
  %2027 = vst [vmem:[%s6 + $0x20] sm:$0xf] %v2011
  %2028 = vst [vmem:[%s6 + $0x24] sm:$0xf] %v2012
  %2029 = vst [vmem:[%s6 + $0x28] sm:$0xf] %v2013
  %2030 = vst [vmem:[%s6 + $0x2c] sm:$0xf] %v2014
  %2031 = vst [vmem:[%s6 + $0x30] sm:$0xf] %v2015
  %2032 = vst [vmem:[%s6 + $0x34] sm:$0xf] %v2016
  %2033 = vst [vmem:[%s6 + $0x38] sm:$0xf] %v2017
  %2034 = vst [vmem:[%s6 + $0x3c] sm:$0xf] %v2018
  // Predicated region
  $region26: #{_lambda_.12} parent=0 // pred_check
    _
  $region27: #{_lambda_.12} parent=0 // pred_check_branch
    %2036 = sbr.rel (0) target = $region29
  $region28: #{_lambda_.12} parent=0 // pred_region
    _
  $region29: #{_lambda_.12} parent=0 // pred_fallthru
    _
  // Predicated region
  $region30: #{_lambda_.12} parent=0 // pred_check
    _
  $region31: #{_lambda_.12} parent=0 // pred_check_branch
    %2038 = sbr.rel (0) target = $region33
  $region32: #{_lambda_.12} parent=0 // pred_region
    _
  $region33: #{_lambda_.12} parent=0 // pred_fallthru
    _

</llo_original>
